<compile_context>
chip_gen: v6e
topology: v6e:2x2x1
jax: 0.10.0
libtpu: 0.0.40
codegen_flags: <defaults>
</compile_context>

<pallas_src>
import jax
import jax.numpy as jnp
from jax.experimental import pallas as pl
from jax.experimental.pallas import tpu as pltpu

EPS = 1e-5
MIN_NORM = 1e-15
LN_EPS = 1e-5
MAXNORM = 1.0 - EPS


# ----------------------------- shared helpers --------------------------------
def _sqnorm(x):
    return jnp.sum(x * x, axis=-1, keepdims=True)


def _norm(x):
    return jnp.sqrt(jnp.maximum(_sqnorm(x), MIN_NORM))


def _artanh(x):
    x = jnp.clip(x, -1.0 + EPS, 1.0 - EPS)
    return 0.5 * (jnp.log1p(x) - jnp.log1p(-x))


# -------------------- kernel-only helpers (use EUP reciprocal) ----------------
def _fast_recip(x):
    # EUP approximate reciprocal + one Newton step (~f32 accuracy) -- moves the
    # divide off the VALU slots that carry the elementwise hyperbolic math.
    r = pl.reciprocal(x, approx=True)
    return r * (2.0 - x * r)


def _project(x):
    n = _norm(x)
    scale = jnp.where(n > MAXNORM, MAXNORM * _fast_recip(n), 1.0)
    return x * scale


def _exp_map_zero_k(v):
    v = v + MIN_NORM
    n = _norm(v)
    return _project(jnp.tanh(n) * _fast_recip(n) * v)


def _log_map_zero(y):
    y = _project(y)
    n = _norm(y)
    return _artanh(n) * _fast_recip(n) * y


def _mob_add(u, v):
    v = v + MIN_NORM
    uv = 2.0 * jnp.sum(u * v, axis=-1, keepdims=True)
    u2 = _sqnorm(u)
    v2 = _sqnorm(v)
    num = (1.0 + uv + v2) * u + (1.0 - u2) * v
    den = 1.0 + uv + u2 * v2
    return _project(num * _fast_recip(den))


def _mob_mat_mul(x, M):
    # Mobius matrix multiply: x (N, Din) @ M (Din, Dout)
    x = _project(x)
    Mx = jnp.dot(x, M, preferred_element_type=jnp.float32)
    Mx_norm = _norm(Mx)
    x_norm = _norm(x)
    res = (jnp.tanh(Mx_norm * _fast_recip(x_norm) * _artanh(x_norm))
           * Mx * _fast_recip(Mx_norm))
    return _project(res)


def _mob_scalar_mul(r, x):
    n = _norm(x)
    return jnp.tanh(r * _artanh(n)) * x * _fast_recip(n)


# ------------------------------ Pallas kernel ---------------------------------
def _attn_kernel(src_ref, mem_ref,
                 wq_ref, hbq_ref, wc_ref, hbc_ref,
                 wo1_ref, wo2_ref, hbo_ref,
                 ln_g_ref, ln_b_ref, point_ref,
                 attn_h_ref, align_ref):
    h_t = src_ref[...]                       # (Bblk, T, D)
    h_s = mem_ref[...]                       # (Bblk, S, D)
    Bblk, T, D = h_t.shape
    S = h_s.shape[1]
    point = point_ref[0]                     # scalar parameter from SMEM

    # --- MobiusLinear query / context on flattened rows (fills the MXU M dim) ---
    ht2 = h_t.reshape(Bblk * T, D)
    hs2 = h_s.reshape(Bblk * S, D)
    wq = _mob_add(_mob_mat_mul(ht2, wq_ref[...]), hbq_ref[...]).reshape(Bblk, T, D)
    uh = _mob_add(_mob_mat_mul(hs2, wc_ref[...]), hbc_ref[...]).reshape(Bblk, S, D)

    # --- score (attn_type='hype_symm'): s = -poinc_dist(wq, uh) * point -------
    # Closed form: ||mob_add(-u, v)||^2 = (a^2*|u|^2 + b^2*|v|^2 - 2*a*b*<u,v>)/den^2
    #   a = 1 - 2<u,v> + |v|^2, b = 1 - |u|^2, den = 1 - 2<u,v> + |u|^2|v|^2.
    # Only one (T,D)x(S,D)^T Gram matmul + (T,S) elementwise math -- no (T,S,D)
    # broadcast temporaries.  artanh clips at 1-EPS (same bound as _project).
    uu = _sqnorm(wq)                                        # (Bblk, T, 1)
    vv = jnp.sum(uh * uh, axis=-1)[:, None, :]              # (Bblk, 1, S)
    G = jnp.einsum('btd,bsd->bts', wq, uh,
                   preferred_element_type=jnp.float32)      # (Bblk, T, S)
    a = 1.0 - 2.0 * G + vv
    b = 1.0 - uu
    den_d = 1.0 - 2.0 * G + uu * vv
    num_sq = a * a * uu + b * b * vv - 2.0 * a * b * G
    mob_norm = jnp.sqrt(jnp.maximum(num_sq / (den_d * den_d), MIN_NORM))
    dist = 2.0 * _artanh(mob_norm)                          # (Bblk, T, S)
    align = -dist * point

    # --- softmax over source positions ---------------------------------------
    mx = jnp.max(align, axis=-1, keepdims=True)
    e = jnp.exp(align - mx)
    aw = e * _fast_recip(jnp.sum(e, axis=-1, keepdims=True))  # (Bblk, T, S)

    # --- weighted gyro-midpoint of memory_bank (k=-1), lincomb + posweight ----
    x2 = jnp.sum(h_s * h_s, axis=-1)                          # (Bblk, S)
    gamma = 2.0 * _fast_recip(jnp.maximum(1.0 - x2, MIN_NORM))  # (Bblk, S)
    wg = aw * gamma[:, None, :]                               # (Bblk, T, S)
    nom = jnp.einsum('bts,bsd->btd', wg, h_s,
                     preferred_element_type=jnp.float32)      # (Bblk, T, D)
    den = jnp.sum(aw * (gamma - 1.0)[:, None, :], axis=-1, keepdims=True)
    den = jnp.where(jnp.abs(den) < 1e-10,
                    jnp.where(den >= 0.0, 1e-10, -1e-10), den)
    two_mean = nom * _fast_recip(den)
    a_mean = _mob_scalar_mul(0.5, two_mean)
    alpha = jnp.sum(jnp.abs(aw), axis=-1, keepdims=True)      # == 1 for softmax
    cvec = _project(_mob_scalar_mul(alpha, a_mean))           # (Bblk, T, D)

    # --- concat_c = project(cat([c, source], -1)) without materializing cat ---
    cat_norm = jnp.sqrt(jnp.maximum(_sqnorm(cvec) + _sqnorm(h_t), MIN_NORM))
    scale = jnp.where(cat_norm > MAXNORM, MAXNORM * _fast_recip(cat_norm), 1.0)
    pc = (cvec * scale).reshape(Bblk * T, D)
    ph = (h_t * scale).reshape(Bblk * T, D)

    # --- linear_out = mob_add(mob_mat_mul(w_out, concat_c), exp0(b_out)) ------
    Mx = (jnp.dot(pc, wo1_ref[...], preferred_element_type=jnp.float32)
          + jnp.dot(ph, wo2_ref[...], preferred_element_type=jnp.float32))
    x_norm = jnp.sqrt(jnp.maximum(_sqnorm(pc) + _sqnorm(ph), MIN_NORM))
    Mx_norm = _norm(Mx)
    wx = _project(jnp.tanh(Mx_norm * _fast_recip(x_norm) * _artanh(x_norm))
                  * Mx * _fast_recip(Mx_norm))
    lin_out = _mob_add(wx, hbo_ref[...])                      # (Bblk*T, D)

    # --- attn_h = exp0(tanh(LayerNorm(log0(lin_out)))) ------------------------
    z = _log_map_zero(lin_out)
    mu = jnp.mean(z, axis=-1, keepdims=True)
    var = jnp.mean((z - mu) ** 2, axis=-1, keepdims=True)
    zn = (z - mu) * jax.lax.rsqrt(var + LN_EPS) * ln_g_ref[...] + ln_b_ref[...]
    attn_h = _exp_map_zero_k(jnp.tanh(zn))                    # (Bblk*T, D)

    attn_h_ref[...] = attn_h.reshape(Bblk, T, D)
    align_ref[...] = aw


# ------------------------------ JAX wrapper ------------------------------------
def _exp_map_zero_host(v):
    # pure-jnp version (no pl.* ops) for the grid-invariant bias hoist
    v = v + MIN_NORM
    n = jnp.sqrt(jnp.maximum(jnp.sum(v * v, axis=-1, keepdims=True), MIN_NORM))
    y = jnp.tanh(n) / n * v
    yn = jnp.sqrt(jnp.maximum(jnp.sum(y * y, axis=-1, keepdims=True), MIN_NORM))
    return jnp.where(yn > MAXNORM, y / yn * MAXNORM, y)


def _choose_bblk(B, T, S, D, budget_bytes=12 << 20):
    # pick the largest divisor of B whose per-step block footprint (with slack
    # for double-buffering + elementwise temporaries) stays within budget.
    per_b = 4 * (2 * T * D + S * D + 2 * T * S)
    cap = max(1, budget_bytes // max(4 * per_b, 1))
    bblk = 1
    for c in range(1, B + 1):
        if B % c == 0 and c <= cap:
            bblk = c
    return bblk


@jax.jit
def global_attention_hype(source, memory_bank, params):
    """source: (B, T, D) queries; memory_bank: (B, S, D).
    Returns attn_h (T, B, D) and align_vectors (T, B, S), matching PyTorch."""
    B, T, D = source.shape
    _, S, _ = memory_bank.shape
    bblk = _choose_bblk(B, T, S, D)

    # grid-invariant hyperbolic bias maps hoisted out of the kernel
    hyp_bq = _exp_map_zero_host(params["b_q"])
    hyp_bc = _exp_map_zero_host(params["b_c"])
    hyp_bo = _exp_map_zero_host(params["b_o"])
    point = params["point"].reshape(-1)[:1].astype(jnp.float32)   # (1,) -> SMEM

    batch3d = lambda i: (i, 0, 0)
    full2d = lambda i: (0, 0)

    # explicit VMEM budget (keeps tiling legal on v7x's 64 MiB VMEM)
    block_bytes = 4 * bblk * (T * D + S * D + T * D + T * S)
    weight_bytes = 4 * (3 * D * D + 5 * D)
    vmem_limit = int(min(max(6 * block_bytes + 2 * weight_bytes + (4 << 20),
                             32 << 20), 48 << 20))

    attn_h_bm, align_bm = pl.pallas_call(
        _attn_kernel,
        out_shape=(
            jax.ShapeDtypeStruct((B, T, D), jnp.float32),
            jax.ShapeDtypeStruct((B, T, S), jnp.float32),
        ),
        grid=(B // bblk,),
        in_specs=[
            pl.BlockSpec((bblk, T, D), batch3d),   # source
            pl.BlockSpec((bblk, S, D), batch3d),   # memory_bank
            pl.BlockSpec((D, D), full2d),          # w_query
            pl.BlockSpec((1, D), full2d),          # exp0(b_query)   (hoisted)
            pl.BlockSpec((D, D), full2d),          # w_context
            pl.BlockSpec((1, D), full2d),          # exp0(b_context) (hoisted)
            pl.BlockSpec((D, D), full2d),          # w_out rows 0:D   (for c)
            pl.BlockSpec((D, D), full2d),          # w_out rows D:2D  (for source)
            pl.BlockSpec((1, D), full2d),          # exp0(b_out)     (hoisted)
            pl.BlockSpec((1, D), full2d),          # layernorm gamma
            pl.BlockSpec((1, D), full2d),          # layernorm beta
            pl.BlockSpec(memory_space=pltpu.MemorySpace.SMEM),  # point scalar
        ],
        out_specs=[
            pl.BlockSpec((bblk, T, D), batch3d),
            pl.BlockSpec((bblk, T, S), batch3d),
        ],
        compiler_params=pltpu.CompilerParams(
            dimension_semantics=("parallel",),
            vmem_limit_bytes=vmem_limit,
        ),
    )(source, memory_bank,
      params["w_q"], hyp_bq, params["w_c"], hyp_bc,
      params["w_o1"], params["w_o2"], hyp_bo,
      params["ln_g"], params["ln_b"], point)

    # (B, T, *) -> (T, B, *) to match the PyTorch module's return convention.
    # TODO(synk): for production, write (T, B, *) blocks directly from the kernel
    #             (when Bblk == B or Bblk % 8 == 0) to save this HBM round trip.
    return jnp.transpose(attn_h_bm, (1, 0, 2)), jnp.transpose(align_bm, (1, 0, 2))


def init_params(key, dim):
    k1, k2, k3 = jax.random.split(key, 3)
    kq = (1.0 / dim) ** 0.5
    ko = (1.0 / (2 * dim)) ** 0.5
    w_out = jax.random.uniform(k3, (2 * dim, dim), jnp.float32, -ko, ko)
    return {
        "w_q": jax.random.uniform(k1, (dim, dim), jnp.float32, -kq, kq),
        "b_q": jnp.zeros((1, dim), jnp.float32),
        "w_c": jax.random.uniform(k2, (dim, dim), jnp.float32, -kq, kq),
        "b_c": jnp.zeros((1, dim), jnp.float32),
        # linear_out weight is (2*dim, dim); split into the rows multiplying c
        # (first dim rows) and the rows multiplying source (last dim rows).
        "w_o1": w_out[:dim],
        "w_o2": w_out[dim:],
        "b_o": jnp.zeros((1, dim), jnp.float32),
        "ln_g": jnp.ones((1, dim), jnp.float32),
        "ln_b": jnp.zeros((1, dim), jnp.float32),
        "point": jnp.full((1,), 100.0, jnp.float32),
    }


if __name__ == "__main__":
    B, T, S, D = 2, 8, 8, 32
    key = jax.random.PRNGKey(0)
    kp, ks, km = jax.random.split(key, 3)

    params = init_params(kp, D)
    # points well inside the unit Poincare ball (c = 1)
    source = 0.1 * jax.random.normal(ks, (B, T, D), jnp.float32)
    memory_bank = 0.1 * jax.random.normal(km, (B, S, D), jnp.float32)

    attn_h, align_vectors = global_attention_hype(source, memory_bank, params)
    jax.block_until_ready((attn_h, align_vectors))

    assert attn_h.shape == (T, B, D)
    assert align_vectors.shape == (T, B, S)
    assert bool(jnp.all(jnp.isfinite(attn_h)))
    assert bool(jnp.all(jnp.isfinite(align_vectors)))
    # attention rows must sum to ~1
    assert bool(jnp.allclose(jnp.sum(align_vectors, axis=-1), 1.0, atol=1e-4))

    print("KERNEL_OK")
</pallas_src>

<mosaic_0001>
module attributes {stable_mosaic.version = 11 : i64} {
  func.func @_attn_kernel(%arg0: i32, %arg1: memref<2x8x32xf32, #tpu.memory_space<vmem>>, %arg2: memref<2x8x32xf32, #tpu.memory_space<vmem>>, %arg3: memref<32x32xf32, #tpu.memory_space<vmem>>, %arg4: memref<1x32xf32, #tpu.memory_space<vmem>>, %arg5: memref<32x32xf32, #tpu.memory_space<vmem>>, %arg6: memref<1x32xf32, #tpu.memory_space<vmem>>, %arg7: memref<32x32xf32, #tpu.memory_space<vmem>>, %arg8: memref<32x32xf32, #tpu.memory_space<vmem>>, %arg9: memref<1x32xf32, #tpu.memory_space<vmem>>, %arg10: memref<1x32xf32, #tpu.memory_space<vmem>>, %arg11: memref<1x32xf32, #tpu.memory_space<vmem>>, %arg12: memref<1xf32, #tpu.memory_space<smem>>, %arg13: memref<2x8x32xf32, #tpu.memory_space<vmem>>, %arg14: memref<2x8x8xf32, #tpu.memory_space<vmem>>) attributes {dimension_semantics = [#tpu.dimension_semantics<parallel>], iteration_bounds = array<i64: 1>, scalar_prefetch = 0 : i64, scratch_operands = 0 : i64, tpu.core_type = #tpu.core_type<tc>, window_params = [{transform_indices = @transform_0, window_bounds = array<i64: 2, 8, 32>}, {transform_indices = @transform_1, window_bounds = array<i64: 2, 8, 32>}, {pipeline_mode = #tpu.pipeline_mode<synchronous>, transform_indices = @transform_2, window_bounds = array<i64: 32, 32>}, {pipeline_mode = #tpu.pipeline_mode<synchronous>, transform_indices = @transform_3, window_bounds = array<i64: 1, 32>}, {pipeline_mode = #tpu.pipeline_mode<synchronous>, transform_indices = @transform_4, window_bounds = array<i64: 32, 32>}, {pipeline_mode = #tpu.pipeline_mode<synchronous>, transform_indices = @transform_5, window_bounds = array<i64: 1, 32>}, {pipeline_mode = #tpu.pipeline_mode<synchronous>, transform_indices = @transform_6, window_bounds = array<i64: 32, 32>}, {pipeline_mode = #tpu.pipeline_mode<synchronous>, transform_indices = @transform_7, window_bounds = array<i64: 32, 32>}, {pipeline_mode = #tpu.pipeline_mode<synchronous>, transform_indices = @transform_8, window_bounds = array<i64: 1, 32>}, {pipeline_mode = #tpu.pipeline_mode<synchronous>, transform_indices = @transform_9, window_bounds = array<i64: 1, 32>}, {pipeline_mode = #tpu.pipeline_mode<synchronous>, transform_indices = @transform_10, window_bounds = array<i64: 1, 32>}, {transform_indices = @transform_11, window_bounds = array<i64: 1>}, {transform_indices = @transform_12, window_bounds = array<i64: 2, 8, 32>}, {transform_indices = @transform_13, window_bounds = array<i64: 2, 8, 8>}]} {
    %c0 = arith.constant 0 : index
    %c0_0 = arith.constant 0 : index
    %c0_1 = arith.constant 0 : index
    %0 = vector.load %arg1[%c0, %c0_0, %c0_1] : memref<2x8x32xf32, #tpu.memory_space<vmem>>, vector<2x8x32xf32>
    %c0_2 = arith.constant 0 : index
    %c0_3 = arith.constant 0 : index
    %c0_4 = arith.constant 0 : index
    %1 = vector.load %arg2[%c0_2, %c0_3, %c0_4] : memref<2x8x32xf32, #tpu.memory_space<vmem>>, vector<2x8x32xf32>
    %c0_5 = arith.constant 0 : index
    %2 = memref.load %arg12[%c0_5] : memref<1xf32, #tpu.memory_space<smem>>
    %3 = vector.shape_cast %0 : vector<2x8x32xf32> to vector<16x32xf32>
    %4 = vector.shape_cast %1 : vector<2x8x32xf32> to vector<16x32xf32>
    %c0_6 = arith.constant 0 : index
    %c0_7 = arith.constant 0 : index
    %5 = vector.load %arg3[%c0_6, %c0_7] : memref<32x32xf32, #tpu.memory_space<vmem>>, vector<32x32xf32>
    %6 = arith.mulf %3, %3 : vector<16x32xf32>
    %cst = arith.constant dense<0.000000e+00> : vector<16xf32>
    %7 = vector.multi_reduction <add>, %6, %cst [1] : vector<16x32xf32> to vector<16xf32>
    %8 = vector.shape_cast %7 : vector<16xf32> to vector<16x1xf32>
    %cst_8 = arith.constant 1.000000e-15 : f32
    %9 = vector.broadcast %cst_8 : f32 to vector<16x1xf32>
    %10 = arith.maximumf %8, %9 : vector<16x1xf32>
    %11 = math.sqrt %10 : vector<16x1xf32>
    %cst_9 = arith.constant 0.999989986 : f32
    %12 = vector.broadcast %cst_9 : f32 to vector<16x1xf32>
    %13 = arith.cmpf ogt, %11, %12 : vector<16x1xf32>
    %14 = tpu.reciprocal %11 {approx = true} : vector<16x1xf32> -> vector<16x1xf32>
    %15 = arith.mulf %11, %14 : vector<16x1xf32>
    %cst_10 = arith.constant 2.000000e+00 : f32
    %16 = vector.broadcast %cst_10 : f32 to vector<16x1xf32>
    %17 = arith.subf %16, %15 : vector<16x1xf32>
    %18 = arith.mulf %14, %17 : vector<16x1xf32>
    %cst_11 = arith.constant 0.999989986 : f32
    %19 = vector.broadcast %cst_11 : f32 to vector<16x1xf32>
    %20 = arith.mulf %19, %18 : vector<16x1xf32>
    %cst_12 = arith.constant 1.000000e+00 : f32
    %21 = vector.broadcast %cst_12 : f32 to vector<16x1xf32>
    %22 = arith.select %13, %20, %21 : vector<16x1xi1>, vector<16x1xf32>
    %23 = vector.broadcast %22 : vector<16x1xf32> to vector<16x32xf32>
    %24 = arith.mulf %3, %23 : vector<16x32xf32>
    %cst_13 = arith.constant dense<0.000000e+00> : vector<16x32xf32>
    %25 = tpu.matmul %24, %5, %cst_13 {dimension_numbers = #tpu.dot_dimension_numbers<[1], [0], [0], [1], [0, 0, 1, 1], [], []>} : vector<16x32xf32>, vector<32x32xf32>, vector<16x32xf32> -> vector<16x32xf32>
    %26 = arith.mulf %25, %25 : vector<16x32xf32>
    %cst_14 = arith.constant dense<0.000000e+00> : vector<16xf32>
    %27 = vector.multi_reduction <add>, %26, %cst_14 [1] : vector<16x32xf32> to vector<16xf32>
    %28 = vector.shape_cast %27 : vector<16xf32> to vector<16x1xf32>
    %cst_15 = arith.constant 1.000000e-15 : f32
    %29 = vector.broadcast %cst_15 : f32 to vector<16x1xf32>
    %30 = arith.maximumf %28, %29 : vector<16x1xf32>
    %31 = math.sqrt %30 : vector<16x1xf32>
    %32 = arith.mulf %24, %24 : vector<16x32xf32>
    %cst_16 = arith.constant dense<0.000000e+00> : vector<16xf32>
    %33 = vector.multi_reduction <add>, %32, %cst_16 [1] : vector<16x32xf32> to vector<16xf32>
    %34 = vector.shape_cast %33 : vector<16xf32> to vector<16x1xf32>
    %cst_17 = arith.constant 1.000000e-15 : f32
    %35 = vector.broadcast %cst_17 : f32 to vector<16x1xf32>
    %36 = arith.maximumf %34, %35 : vector<16x1xf32>
    %37 = math.sqrt %36 : vector<16x1xf32>
    %38 = tpu.reciprocal %37 {approx = true} : vector<16x1xf32> -> vector<16x1xf32>
    %39 = arith.mulf %37, %38 : vector<16x1xf32>
    %cst_18 = arith.constant 2.000000e+00 : f32
    %40 = vector.broadcast %cst_18 : f32 to vector<16x1xf32>
    %41 = arith.subf %40, %39 : vector<16x1xf32>
    %42 = arith.mulf %38, %41 : vector<16x1xf32>
    %43 = arith.mulf %31, %42 : vector<16x1xf32>
    %cst_19 = arith.constant -0.999989986 : f32
    %cst_20 = arith.constant 0.999989986 : f32
    %44 = vector.broadcast %cst_19 : f32 to vector<16x1xf32>
    %45 = arith.maximumf %44, %37 : vector<16x1xf32>
    %46 = vector.broadcast %cst_20 : f32 to vector<16x1xf32>
    %47 = arith.minimumf %46, %45 : vector<16x1xf32>
    %48 = math.log1p %47 : vector<16x1xf32>
    %cst_21 = arith.constant 0.000000e+00 : f32
    %49 = vector.broadcast %cst_21 : f32 to vector<16x1xf32>
    %50 = arith.subf %49, %47 : vector<16x1xf32>
    %51 = math.log1p %50 : vector<16x1xf32>
    %52 = arith.subf %48, %51 : vector<16x1xf32>
    %cst_22 = arith.constant 5.000000e-01 : f32
    %53 = vector.broadcast %cst_22 : f32 to vector<16x1xf32>
    %54 = arith.mulf %53, %52 : vector<16x1xf32>
    %55 = arith.mulf %43, %54 : vector<16x1xf32>
    %56 = math.tanh %55 : vector<16x1xf32>
    %57 = vector.broadcast %56 : vector<16x1xf32> to vector<16x32xf32>
    %58 = arith.mulf %57, %25 : vector<16x32xf32>
    %59 = tpu.reciprocal %31 {approx = true} : vector<16x1xf32> -> vector<16x1xf32>
    %60 = arith.mulf %31, %59 : vector<16x1xf32>
    %cst_23 = arith.constant 2.000000e+00 : f32
    %61 = vector.broadcast %cst_23 : f32 to vector<16x1xf32>
    %62 = arith.subf %61, %60 : vector<16x1xf32>
    %63 = arith.mulf %59, %62 : vector<16x1xf32>
    %64 = vector.broadcast %63 : vector<16x1xf32> to vector<16x32xf32>
    %65 = arith.mulf %58, %64 : vector<16x32xf32>
    %66 = arith.mulf %65, %65 : vector<16x32xf32>
    %cst_24 = arith.constant dense<0.000000e+00> : vector<16xf32>
    %67 = vector.multi_reduction <add>, %66, %cst_24 [1] : vector<16x32xf32> to vector<16xf32>
    %68 = vector.shape_cast %67 : vector<16xf32> to vector<16x1xf32>
    %cst_25 = arith.constant 1.000000e-15 : f32
    %69 = vector.broadcast %cst_25 : f32 to vector<16x1xf32>
    %70 = arith.maximumf %68, %69 : vector<16x1xf32>
    %71 = math.sqrt %70 : vector<16x1xf32>
    %cst_26 = arith.constant 0.999989986 : f32
    %72 = vector.broadcast %cst_26 : f32 to vector<16x1xf32>
    %73 = arith.cmpf ogt, %71, %72 : vector<16x1xf32>
    %74 = tpu.reciprocal %71 {approx = true} : vector<16x1xf32> -> vector<16x1xf32>
    %75 = arith.mulf %71, %74 : vector<16x1xf32>
    %cst_27 = arith.constant 2.000000e+00 : f32
    %76 = vector.broadcast %cst_27 : f32 to vector<16x1xf32>
    %77 = arith.subf %76, %75 : vector<16x1xf32>
    %78 = arith.mulf %74, %77 : vector<16x1xf32>
    %cst_28 = arith.constant 0.999989986 : f32
    %79 = vector.broadcast %cst_28 : f32 to vector<16x1xf32>
    %80 = arith.mulf %79, %78 : vector<16x1xf32>
    %cst_29 = arith.constant 1.000000e+00 : f32
    %81 = vector.broadcast %cst_29 : f32 to vector<16x1xf32>
    %82 = arith.select %73, %80, %81 : vector<16x1xi1>, vector<16x1xf32>
    %83 = vector.broadcast %82 : vector<16x1xf32> to vector<16x32xf32>
    %84 = arith.mulf %65, %83 : vector<16x32xf32>
    %c0_30 = arith.constant 0 : index
    %c0_31 = arith.constant 0 : index
    %85 = vector.load %arg4[%c0_30, %c0_31] : memref<1x32xf32, #tpu.memory_space<vmem>>, vector<1x32xf32>
    %cst_32 = arith.constant 1.000000e-15 : f32
    %86 = vector.broadcast %cst_32 : f32 to vector<1x32xf32>
    %87 = arith.addf %85, %86 : vector<1x32xf32>
    %88 = vector.broadcast %87 : vector<1x32xf32> to vector<16x32xf32>
    %89 = arith.mulf %84, %88 : vector<16x32xf32>
    %cst_33 = arith.constant dense<0.000000e+00> : vector<16xf32>
    %90 = vector.multi_reduction <add>, %89, %cst_33 [1] : vector<16x32xf32> to vector<16xf32>
    %91 = vector.shape_cast %90 : vector<16xf32> to vector<16x1xf32>
    %cst_34 = arith.constant 2.000000e+00 : f32
    %92 = vector.broadcast %cst_34 : f32 to vector<16x1xf32>
    %93 = arith.mulf %92, %91 : vector<16x1xf32>
    %94 = arith.mulf %84, %84 : vector<16x32xf32>
    %cst_35 = arith.constant dense<0.000000e+00> : vector<16xf32>
    %95 = vector.multi_reduction <add>, %94, %cst_35 [1] : vector<16x32xf32> to vector<16xf32>
    %96 = vector.shape_cast %95 : vector<16xf32> to vector<16x1xf32>
    %97 = arith.mulf %87, %87 : vector<1x32xf32>
    %cst_36 = arith.constant dense<0.000000e+00> : vector<1xf32>
    %98 = vector.multi_reduction <add>, %97, %cst_36 [1] : vector<1x32xf32> to vector<1xf32>
    %99 = vector.shape_cast %98 : vector<1xf32> to vector<1x1xf32>
    %cst_37 = arith.constant 1.000000e+00 : f32
    %100 = vector.broadcast %cst_37 : f32 to vector<16x1xf32>
    %101 = arith.addf %100, %93 : vector<16x1xf32>
    %102 = vector.broadcast %99 : vector<1x1xf32> to vector<16x1xf32>
    %103 = arith.addf %101, %102 : vector<16x1xf32>
    %104 = vector.broadcast %103 : vector<16x1xf32> to vector<16x32xf32>
    %105 = arith.mulf %104, %84 : vector<16x32xf32>
    %cst_38 = arith.constant 1.000000e+00 : f32
    %106 = vector.broadcast %cst_38 : f32 to vector<16x1xf32>
    %107 = arith.subf %106, %96 : vector<16x1xf32>
    %108 = vector.broadcast %107 : vector<16x1xf32> to vector<16x32xf32>
    %109 = vector.broadcast %87 : vector<1x32xf32> to vector<16x32xf32>
    %110 = arith.mulf %108, %109 : vector<16x32xf32>
    %111 = arith.addf %105, %110 : vector<16x32xf32>
    %cst_39 = arith.constant 1.000000e+00 : f32
    %112 = vector.broadcast %cst_39 : f32 to vector<16x1xf32>
    %113 = arith.addf %112, %93 : vector<16x1xf32>
    %114 = vector.broadcast %99 : vector<1x1xf32> to vector<16x1xf32>
    %115 = arith.mulf %96, %114 : vector<16x1xf32>
    %116 = arith.addf %113, %115 : vector<16x1xf32>
    %117 = tpu.reciprocal %116 {approx = true} : vector<16x1xf32> -> vector<16x1xf32>
    %118 = arith.mulf %116, %117 : vector<16x1xf32>
    %cst_40 = arith.constant 2.000000e+00 : f32
    %119 = vector.broadcast %cst_40 : f32 to vector<16x1xf32>
    %120 = arith.subf %119, %118 : vector<16x1xf32>
    %121 = arith.mulf %117, %120 : vector<16x1xf32>
    %122 = vector.broadcast %121 : vector<16x1xf32> to vector<16x32xf32>
    %123 = arith.mulf %111, %122 : vector<16x32xf32>
    %124 = arith.mulf %123, %123 : vector<16x32xf32>
    %cst_41 = arith.constant dense<0.000000e+00> : vector<16xf32>
    %125 = vector.multi_reduction <add>, %124, %cst_41 [1] : vector<16x32xf32> to vector<16xf32>
    %126 = vector.shape_cast %125 : vector<16xf32> to vector<16x1xf32>
    %cst_42 = arith.constant 1.000000e-15 : f32
    %127 = vector.broadcast %cst_42 : f32 to vector<16x1xf32>
    %128 = arith.maximumf %126, %127 : vector<16x1xf32>
    %129 = math.sqrt %128 : vector<16x1xf32>
    %cst_43 = arith.constant 0.999989986 : f32
    %130 = vector.broadcast %cst_43 : f32 to vector<16x1xf32>
    %131 = arith.cmpf ogt, %129, %130 : vector<16x1xf32>
    %132 = tpu.reciprocal %129 {approx = true} : vector<16x1xf32> -> vector<16x1xf32>
    %133 = arith.mulf %129, %132 : vector<16x1xf32>
    %cst_44 = arith.constant 2.000000e+00 : f32
    %134 = vector.broadcast %cst_44 : f32 to vector<16x1xf32>
    %135 = arith.subf %134, %133 : vector<16x1xf32>
    %136 = arith.mulf %132, %135 : vector<16x1xf32>
    %cst_45 = arith.constant 0.999989986 : f32
    %137 = vector.broadcast %cst_45 : f32 to vector<16x1xf32>
    %138 = arith.mulf %137, %136 : vector<16x1xf32>
    %cst_46 = arith.constant 1.000000e+00 : f32
    %139 = vector.broadcast %cst_46 : f32 to vector<16x1xf32>
    %140 = arith.select %131, %138, %139 : vector<16x1xi1>, vector<16x1xf32>
    %141 = vector.broadcast %140 : vector<16x1xf32> to vector<16x32xf32>
    %142 = arith.mulf %123, %141 : vector<16x32xf32>
    %143 = vector.shape_cast %142 : vector<16x32xf32> to vector<2x8x32xf32>
    %c0_47 = arith.constant 0 : index
    %c0_48 = arith.constant 0 : index
    %144 = vector.load %arg5[%c0_47, %c0_48] : memref<32x32xf32, #tpu.memory_space<vmem>>, vector<32x32xf32>
    %145 = arith.mulf %4, %4 : vector<16x32xf32>
    %cst_49 = arith.constant dense<0.000000e+00> : vector<16xf32>
    %146 = vector.multi_reduction <add>, %145, %cst_49 [1] : vector<16x32xf32> to vector<16xf32>
    %147 = vector.shape_cast %146 : vector<16xf32> to vector<16x1xf32>
    %cst_50 = arith.constant 1.000000e-15 : f32
    %148 = vector.broadcast %cst_50 : f32 to vector<16x1xf32>
    %149 = arith.maximumf %147, %148 : vector<16x1xf32>
    %150 = math.sqrt %149 : vector<16x1xf32>
    %cst_51 = arith.constant 0.999989986 : f32
    %151 = vector.broadcast %cst_51 : f32 to vector<16x1xf32>
    %152 = arith.cmpf ogt, %150, %151 : vector<16x1xf32>
    %153 = tpu.reciprocal %150 {approx = true} : vector<16x1xf32> -> vector<16x1xf32>
    %154 = arith.mulf %150, %153 : vector<16x1xf32>
    %cst_52 = arith.constant 2.000000e+00 : f32
    %155 = vector.broadcast %cst_52 : f32 to vector<16x1xf32>
    %156 = arith.subf %155, %154 : vector<16x1xf32>
    %157 = arith.mulf %153, %156 : vector<16x1xf32>
    %cst_53 = arith.constant 0.999989986 : f32
    %158 = vector.broadcast %cst_53 : f32 to vector<16x1xf32>
    %159 = arith.mulf %158, %157 : vector<16x1xf32>
    %cst_54 = arith.constant 1.000000e+00 : f32
    %160 = vector.broadcast %cst_54 : f32 to vector<16x1xf32>
    %161 = arith.select %152, %159, %160 : vector<16x1xi1>, vector<16x1xf32>
    %162 = vector.broadcast %161 : vector<16x1xf32> to vector<16x32xf32>
    %163 = arith.mulf %4, %162 : vector<16x32xf32>
    %cst_55 = arith.constant dense<0.000000e+00> : vector<16x32xf32>
    %164 = tpu.matmul %163, %144, %cst_55 {dimension_numbers = #tpu.dot_dimension_numbers<[1], [0], [0], [1], [0, 0, 1, 1], [], []>} : vector<16x32xf32>, vector<32x32xf32>, vector<16x32xf32> -> vector<16x32xf32>
    %165 = arith.mulf %164, %164 : vector<16x32xf32>
    %cst_56 = arith.constant dense<0.000000e+00> : vector<16xf32>
    %166 = vector.multi_reduction <add>, %165, %cst_56 [1] : vector<16x32xf32> to vector<16xf32>
    %167 = vector.shape_cast %166 : vector<16xf32> to vector<16x1xf32>
    %cst_57 = arith.constant 1.000000e-15 : f32
    %168 = vector.broadcast %cst_57 : f32 to vector<16x1xf32>
    %169 = arith.maximumf %167, %168 : vector<16x1xf32>
    %170 = math.sqrt %169 : vector<16x1xf32>
    %171 = arith.mulf %163, %163 : vector<16x32xf32>
    %cst_58 = arith.constant dense<0.000000e+00> : vector<16xf32>
    %172 = vector.multi_reduction <add>, %171, %cst_58 [1] : vector<16x32xf32> to vector<16xf32>
    %173 = vector.shape_cast %172 : vector<16xf32> to vector<16x1xf32>
    %cst_59 = arith.constant 1.000000e-15 : f32
    %174 = vector.broadcast %cst_59 : f32 to vector<16x1xf32>
    %175 = arith.maximumf %173, %174 : vector<16x1xf32>
    %176 = math.sqrt %175 : vector<16x1xf32>
    %177 = tpu.reciprocal %176 {approx = true} : vector<16x1xf32> -> vector<16x1xf32>
    %178 = arith.mulf %176, %177 : vector<16x1xf32>
    %cst_60 = arith.constant 2.000000e+00 : f32
    %179 = vector.broadcast %cst_60 : f32 to vector<16x1xf32>
    %180 = arith.subf %179, %178 : vector<16x1xf32>
    %181 = arith.mulf %177, %180 : vector<16x1xf32>
    %182 = arith.mulf %170, %181 : vector<16x1xf32>
    %cst_61 = arith.constant -0.999989986 : f32
    %cst_62 = arith.constant 0.999989986 : f32
    %183 = vector.broadcast %cst_61 : f32 to vector<16x1xf32>
    %184 = arith.maximumf %183, %176 : vector<16x1xf32>
    %185 = vector.broadcast %cst_62 : f32 to vector<16x1xf32>
    %186 = arith.minimumf %185, %184 : vector<16x1xf32>
    %187 = math.log1p %186 : vector<16x1xf32>
    %cst_63 = arith.constant 0.000000e+00 : f32
    %188 = vector.broadcast %cst_63 : f32 to vector<16x1xf32>
    %189 = arith.subf %188, %186 : vector<16x1xf32>
    %190 = math.log1p %189 : vector<16x1xf32>
    %191 = arith.subf %187, %190 : vector<16x1xf32>
    %cst_64 = arith.constant 5.000000e-01 : f32
    %192 = vector.broadcast %cst_64 : f32 to vector<16x1xf32>
    %193 = arith.mulf %192, %191 : vector<16x1xf32>
    %194 = arith.mulf %182, %193 : vector<16x1xf32>
    %195 = math.tanh %194 : vector<16x1xf32>
    %196 = vector.broadcast %195 : vector<16x1xf32> to vector<16x32xf32>
    %197 = arith.mulf %196, %164 : vector<16x32xf32>
    %198 = tpu.reciprocal %170 {approx = true} : vector<16x1xf32> -> vector<16x1xf32>
    %199 = arith.mulf %170, %198 : vector<16x1xf32>
    %cst_65 = arith.constant 2.000000e+00 : f32
    %200 = vector.broadcast %cst_65 : f32 to vector<16x1xf32>
    %201 = arith.subf %200, %199 : vector<16x1xf32>
    %202 = arith.mulf %198, %201 : vector<16x1xf32>
    %203 = vector.broadcast %202 : vector<16x1xf32> to vector<16x32xf32>
    %204 = arith.mulf %197, %203 : vector<16x32xf32>
    %205 = arith.mulf %204, %204 : vector<16x32xf32>
    %cst_66 = arith.constant dense<0.000000e+00> : vector<16xf32>
    %206 = vector.multi_reduction <add>, %205, %cst_66 [1] : vector<16x32xf32> to vector<16xf32>
    %207 = vector.shape_cast %206 : vector<16xf32> to vector<16x1xf32>
    %cst_67 = arith.constant 1.000000e-15 : f32
    %208 = vector.broadcast %cst_67 : f32 to vector<16x1xf32>
    %209 = arith.maximumf %207, %208 : vector<16x1xf32>
    %210 = math.sqrt %209 : vector<16x1xf32>
    %cst_68 = arith.constant 0.999989986 : f32
    %211 = vector.broadcast %cst_68 : f32 to vector<16x1xf32>
    %212 = arith.cmpf ogt, %210, %211 : vector<16x1xf32>
    %213 = tpu.reciprocal %210 {approx = true} : vector<16x1xf32> -> vector<16x1xf32>
    %214 = arith.mulf %210, %213 : vector<16x1xf32>
    %cst_69 = arith.constant 2.000000e+00 : f32
    %215 = vector.broadcast %cst_69 : f32 to vector<16x1xf32>
    %216 = arith.subf %215, %214 : vector<16x1xf32>
    %217 = arith.mulf %213, %216 : vector<16x1xf32>
    %cst_70 = arith.constant 0.999989986 : f32
    %218 = vector.broadcast %cst_70 : f32 to vector<16x1xf32>
    %219 = arith.mulf %218, %217 : vector<16x1xf32>
    %cst_71 = arith.constant 1.000000e+00 : f32
    %220 = vector.broadcast %cst_71 : f32 to vector<16x1xf32>
    %221 = arith.select %212, %219, %220 : vector<16x1xi1>, vector<16x1xf32>
    %222 = vector.broadcast %221 : vector<16x1xf32> to vector<16x32xf32>
    %223 = arith.mulf %204, %222 : vector<16x32xf32>
    %c0_72 = arith.constant 0 : index
    %c0_73 = arith.constant 0 : index
    %224 = vector.load %arg6[%c0_72, %c0_73] : memref<1x32xf32, #tpu.memory_space<vmem>>, vector<1x32xf32>
    %cst_74 = arith.constant 1.000000e-15 : f32
    %225 = vector.broadcast %cst_74 : f32 to vector<1x32xf32>
    %226 = arith.addf %224, %225 : vector<1x32xf32>
    %227 = vector.broadcast %226 : vector<1x32xf32> to vector<16x32xf32>
    %228 = arith.mulf %223, %227 : vector<16x32xf32>
    %cst_75 = arith.constant dense<0.000000e+00> : vector<16xf32>
    %229 = vector.multi_reduction <add>, %228, %cst_75 [1] : vector<16x32xf32> to vector<16xf32>
    %230 = vector.shape_cast %229 : vector<16xf32> to vector<16x1xf32>
    %cst_76 = arith.constant 2.000000e+00 : f32
    %231 = vector.broadcast %cst_76 : f32 to vector<16x1xf32>
    %232 = arith.mulf %231, %230 : vector<16x1xf32>
    %233 = arith.mulf %223, %223 : vector<16x32xf32>
    %cst_77 = arith.constant dense<0.000000e+00> : vector<16xf32>
    %234 = vector.multi_reduction <add>, %233, %cst_77 [1] : vector<16x32xf32> to vector<16xf32>
    %235 = vector.shape_cast %234 : vector<16xf32> to vector<16x1xf32>
    %236 = arith.mulf %226, %226 : vector<1x32xf32>
    %cst_78 = arith.constant dense<0.000000e+00> : vector<1xf32>
    %237 = vector.multi_reduction <add>, %236, %cst_78 [1] : vector<1x32xf32> to vector<1xf32>
    %238 = vector.shape_cast %237 : vector<1xf32> to vector<1x1xf32>
    %cst_79 = arith.constant 1.000000e+00 : f32
    %239 = vector.broadcast %cst_79 : f32 to vector<16x1xf32>
    %240 = arith.addf %239, %232 : vector<16x1xf32>
    %241 = vector.broadcast %238 : vector<1x1xf32> to vector<16x1xf32>
    %242 = arith.addf %240, %241 : vector<16x1xf32>
    %243 = vector.broadcast %242 : vector<16x1xf32> to vector<16x32xf32>
    %244 = arith.mulf %243, %223 : vector<16x32xf32>
    %cst_80 = arith.constant 1.000000e+00 : f32
    %245 = vector.broadcast %cst_80 : f32 to vector<16x1xf32>
    %246 = arith.subf %245, %235 : vector<16x1xf32>
    %247 = vector.broadcast %246 : vector<16x1xf32> to vector<16x32xf32>
    %248 = vector.broadcast %226 : vector<1x32xf32> to vector<16x32xf32>
    %249 = arith.mulf %247, %248 : vector<16x32xf32>
    %250 = arith.addf %244, %249 : vector<16x32xf32>
    %cst_81 = arith.constant 1.000000e+00 : f32
    %251 = vector.broadcast %cst_81 : f32 to vector<16x1xf32>
    %252 = arith.addf %251, %232 : vector<16x1xf32>
    %253 = vector.broadcast %238 : vector<1x1xf32> to vector<16x1xf32>
    %254 = arith.mulf %235, %253 : vector<16x1xf32>
    %255 = arith.addf %252, %254 : vector<16x1xf32>
    %256 = tpu.reciprocal %255 {approx = true} : vector<16x1xf32> -> vector<16x1xf32>
    %257 = arith.mulf %255, %256 : vector<16x1xf32>
    %cst_82 = arith.constant 2.000000e+00 : f32
    %258 = vector.broadcast %cst_82 : f32 to vector<16x1xf32>
    %259 = arith.subf %258, %257 : vector<16x1xf32>
    %260 = arith.mulf %256, %259 : vector<16x1xf32>
    %261 = vector.broadcast %260 : vector<16x1xf32> to vector<16x32xf32>
    %262 = arith.mulf %250, %261 : vector<16x32xf32>
    %263 = arith.mulf %262, %262 : vector<16x32xf32>
    %cst_83 = arith.constant dense<0.000000e+00> : vector<16xf32>
    %264 = vector.multi_reduction <add>, %263, %cst_83 [1] : vector<16x32xf32> to vector<16xf32>
    %265 = vector.shape_cast %264 : vector<16xf32> to vector<16x1xf32>
    %cst_84 = arith.constant 1.000000e-15 : f32
    %266 = vector.broadcast %cst_84 : f32 to vector<16x1xf32>
    %267 = arith.maximumf %265, %266 : vector<16x1xf32>
    %268 = math.sqrt %267 : vector<16x1xf32>
    %cst_85 = arith.constant 0.999989986 : f32
    %269 = vector.broadcast %cst_85 : f32 to vector<16x1xf32>
    %270 = arith.cmpf ogt, %268, %269 : vector<16x1xf32>
    %271 = tpu.reciprocal %268 {approx = true} : vector<16x1xf32> -> vector<16x1xf32>
    %272 = arith.mulf %268, %271 : vector<16x1xf32>
    %cst_86 = arith.constant 2.000000e+00 : f32
    %273 = vector.broadcast %cst_86 : f32 to vector<16x1xf32>
    %274 = arith.subf %273, %272 : vector<16x1xf32>
    %275 = arith.mulf %271, %274 : vector<16x1xf32>
    %cst_87 = arith.constant 0.999989986 : f32
    %276 = vector.broadcast %cst_87 : f32 to vector<16x1xf32>
    %277 = arith.mulf %276, %275 : vector<16x1xf32>
    %cst_88 = arith.constant 1.000000e+00 : f32
    %278 = vector.broadcast %cst_88 : f32 to vector<16x1xf32>
    %279 = arith.select %270, %277, %278 : vector<16x1xi1>, vector<16x1xf32>
    %280 = vector.broadcast %279 : vector<16x1xf32> to vector<16x32xf32>
    %281 = arith.mulf %262, %280 : vector<16x32xf32>
    %282 = vector.shape_cast %281 : vector<16x32xf32> to vector<2x8x32xf32>
    %283 = arith.mulf %143, %143 : vector<2x8x32xf32>
    %cst_89 = arith.constant dense<0.000000e+00> : vector<2x8xf32>
    %284 = vector.multi_reduction <add>, %283, %cst_89 [2] : vector<2x8x32xf32> to vector<2x8xf32>
    %285 = vector.shape_cast %284 : vector<2x8xf32> to vector<2x8x1xf32>
    %286 = arith.mulf %282, %282 : vector<2x8x32xf32>
    %cst_90 = arith.constant dense<0.000000e+00> : vector<2x8xf32>
    %287 = vector.multi_reduction <add>, %286, %cst_90 [2] : vector<2x8x32xf32> to vector<2x8xf32>
    %288 = vector.shape_cast %287 : vector<2x8xf32> to vector<2x1x8xf32>
    "tpu.trace_start"() <{level = 10 : i32, message = "btd,bsd->bts"}> : () -> ()
    %cst_91 = arith.constant dense<0.000000e+00> : vector<2x8x8xf32>
    %289 = tpu.matmul %143, %282, %cst_91 {dimension_numbers = #tpu.dot_dimension_numbers<[2], [2], [1], [1], [0, 0, 0, 1, 1, 1], [0], [0]>} : vector<2x8x32xf32>, vector<2x8x32xf32>, vector<2x8x8xf32> -> vector<2x8x8xf32>
    "tpu.trace_stop"() : () -> ()
    %cst_92 = arith.constant 2.000000e+00 : f32
    %290 = vector.broadcast %cst_92 : f32 to vector<2x8x8xf32>
    %291 = arith.mulf %290, %289 : vector<2x8x8xf32>
    %cst_93 = arith.constant 1.000000e+00 : f32
    %292 = vector.broadcast %cst_93 : f32 to vector<2x8x8xf32>
    %293 = arith.subf %292, %291 : vector<2x8x8xf32>
    %294 = vector.broadcast %288 : vector<2x1x8xf32> to vector<2x8x8xf32>
    %295 = arith.addf %293, %294 : vector<2x8x8xf32>
    %cst_94 = arith.constant 1.000000e+00 : f32
    %296 = vector.broadcast %cst_94 : f32 to vector<2x8x1xf32>
    %297 = arith.subf %296, %285 : vector<2x8x1xf32>
    %cst_95 = arith.constant 2.000000e+00 : f32
    %298 = vector.broadcast %cst_95 : f32 to vector<2x8x8xf32>
    %299 = arith.mulf %298, %289 : vector<2x8x8xf32>
    %cst_96 = arith.constant 1.000000e+00 : f32
    %300 = vector.broadcast %cst_96 : f32 to vector<2x8x8xf32>
    %301 = arith.subf %300, %299 : vector<2x8x8xf32>
    %302 = vector.broadcast %285 : vector<2x8x1xf32> to vector<2x8x8xf32>
    %303 = vector.broadcast %288 : vector<2x1x8xf32> to vector<2x8x8xf32>
    %304 = arith.mulf %302, %303 : vector<2x8x8xf32>
    %305 = arith.addf %301, %304 : vector<2x8x8xf32>
    %306 = arith.mulf %295, %295 : vector<2x8x8xf32>
    %307 = vector.broadcast %285 : vector<2x8x1xf32> to vector<2x8x8xf32>
    %308 = arith.mulf %306, %307 : vector<2x8x8xf32>
    %309 = arith.mulf %297, %297 : vector<2x8x1xf32>
    %310 = vector.broadcast %309 : vector<2x8x1xf32> to vector<2x8x8xf32>
    %311 = vector.broadcast %288 : vector<2x1x8xf32> to vector<2x8x8xf32>
    %312 = arith.mulf %310, %311 : vector<2x8x8xf32>
    %313 = arith.addf %308, %312 : vector<2x8x8xf32>
    %cst_97 = arith.constant 2.000000e+00 : f32
    %314 = vector.broadcast %cst_97 : f32 to vector<2x8x8xf32>
    %315 = arith.mulf %314, %295 : vector<2x8x8xf32>
    %316 = vector.broadcast %297 : vector<2x8x1xf32> to vector<2x8x8xf32>
    %317 = arith.mulf %315, %316 : vector<2x8x8xf32>
    %318 = arith.mulf %317, %289 : vector<2x8x8xf32>
    %319 = arith.subf %313, %318 : vector<2x8x8xf32>
    %320 = arith.mulf %305, %305 : vector<2x8x8xf32>
    %321 = arith.divf %319, %320 : vector<2x8x8xf32>
    %cst_98 = arith.constant 1.000000e-15 : f32
    %322 = vector.broadcast %cst_98 : f32 to vector<2x8x8xf32>
    %323 = arith.maximumf %321, %322 : vector<2x8x8xf32>
    %324 = math.sqrt %323 : vector<2x8x8xf32>
    %cst_99 = arith.constant -0.999989986 : f32
    %cst_100 = arith.constant 0.999989986 : f32
    %325 = vector.broadcast %cst_99 : f32 to vector<2x8x8xf32>
    %326 = arith.maximumf %325, %324 : vector<2x8x8xf32>
    %327 = vector.broadcast %cst_100 : f32 to vector<2x8x8xf32>
    %328 = arith.minimumf %327, %326 : vector<2x8x8xf32>
    %329 = math.log1p %328 : vector<2x8x8xf32>
    %cst_101 = arith.constant 0.000000e+00 : f32
    %330 = vector.broadcast %cst_101 : f32 to vector<2x8x8xf32>
    %331 = arith.subf %330, %328 : vector<2x8x8xf32>
    %332 = math.log1p %331 : vector<2x8x8xf32>
    %333 = arith.subf %329, %332 : vector<2x8x8xf32>
    %cst_102 = arith.constant 5.000000e-01 : f32
    %334 = vector.broadcast %cst_102 : f32 to vector<2x8x8xf32>
    %335 = arith.mulf %334, %333 : vector<2x8x8xf32>
    %cst_103 = arith.constant 2.000000e+00 : f32
    %336 = vector.broadcast %cst_103 : f32 to vector<2x8x8xf32>
    %337 = arith.mulf %336, %335 : vector<2x8x8xf32>
    %cst_104 = arith.constant 0.000000e+00 : f32
    %338 = vector.broadcast %cst_104 : f32 to vector<2x8x8xf32>
    %339 = arith.subf %338, %337 : vector<2x8x8xf32>
    %340 = vector.broadcast %2 : f32 to vector<2x8x8xf32>
    %341 = arith.mulf %339, %340 : vector<2x8x8xf32>
    %cst_105 = arith.constant dense<0xFF800000> : vector<2x8xf32>
    %342 = vector.multi_reduction <maximumf>, %341, %cst_105 [2] : vector<2x8x8xf32> to vector<2x8xf32>
    %343 = vector.shape_cast %342 : vector<2x8xf32> to vector<2x8x1xf32>
    %344 = vector.broadcast %343 : vector<2x8x1xf32> to vector<2x8x8xf32>
    %345 = arith.subf %341, %344 : vector<2x8x8xf32>
    %346 = math.exp %345 : vector<2x8x8xf32>
    %cst_106 = arith.constant dense<0.000000e+00> : vector<2x8xf32>
    %347 = vector.multi_reduction <add>, %346, %cst_106 [2] : vector<2x8x8xf32> to vector<2x8xf32>
    %348 = vector.shape_cast %347 : vector<2x8xf32> to vector<2x8x1xf32>
    %349 = tpu.reciprocal %348 {approx = true} : vector<2x8x1xf32> -> vector<2x8x1xf32>
    %350 = arith.mulf %348, %349 : vector<2x8x1xf32>
    %cst_107 = arith.constant 2.000000e+00 : f32
    %351 = vector.broadcast %cst_107 : f32 to vector<2x8x1xf32>
    %352 = arith.subf %351, %350 : vector<2x8x1xf32>
    %353 = arith.mulf %349, %352 : vector<2x8x1xf32>
    %354 = vector.broadcast %353 : vector<2x8x1xf32> to vector<2x8x8xf32>
    %355 = arith.mulf %346, %354 : vector<2x8x8xf32>
    %356 = arith.mulf %1, %1 : vector<2x8x32xf32>
    %cst_108 = arith.constant dense<0.000000e+00> : vector<2x8xf32>
    %357 = vector.multi_reduction <add>, %356, %cst_108 [2] : vector<2x8x32xf32> to vector<2x8xf32>
    %cst_109 = arith.constant 1.000000e+00 : f32
    %358 = vector.broadcast %cst_109 : f32 to vector<2x8xf32>
    %359 = arith.subf %358, %357 : vector<2x8xf32>
    %cst_110 = arith.constant 1.000000e-15 : f32
    %360 = vector.broadcast %cst_110 : f32 to vector<2x8xf32>
    %361 = arith.maximumf %359, %360 : vector<2x8xf32>
    %362 = tpu.reciprocal %361 {approx = true} : vector<2x8xf32> -> vector<2x8xf32>
    %363 = arith.mulf %361, %362 : vector<2x8xf32>
    %cst_111 = arith.constant 2.000000e+00 : f32
    %364 = vector.broadcast %cst_111 : f32 to vector<2x8xf32>
    %365 = arith.subf %364, %363 : vector<2x8xf32>
    %366 = arith.mulf %362, %365 : vector<2x8xf32>
    %cst_112 = arith.constant 2.000000e+00 : f32
    %367 = vector.broadcast %cst_112 : f32 to vector<2x8xf32>
    %368 = arith.mulf %367, %366 : vector<2x8xf32>
    %369 = vector.shape_cast %368 : vector<2x8xf32> to vector<2x1x8xf32>
    %370 = vector.broadcast %369 : vector<2x1x8xf32> to vector<2x8x8xf32>
    %371 = arith.mulf %355, %370 : vector<2x8x8xf32>
    "tpu.trace_start"() <{level = 10 : i32, message = "bts,bsd->btd"}> : () -> ()
    %cst_113 = arith.constant dense<0.000000e+00> : vector<2x8x32xf32>
    %372 = tpu.matmul %371, %1, %cst_113 {dimension_numbers = #tpu.dot_dimension_numbers<[2], [1], [1], [2], [0, 0, 0, 1, 1, 2], [0], [0]>} : vector<2x8x8xf32>, vector<2x8x32xf32>, vector<2x8x32xf32> -> vector<2x8x32xf32>
    "tpu.trace_stop"() : () -> ()
    %cst_114 = arith.constant 1.000000e+00 : f32
    %373 = vector.broadcast %cst_114 : f32 to vector<2x8xf32>
    %374 = arith.subf %368, %373 : vector<2x8xf32>
    %375 = vector.shape_cast %374 : vector<2x8xf32> to vector<2x1x8xf32>
    %376 = vector.broadcast %375 : vector<2x1x8xf32> to vector<2x8x8xf32>
    %377 = arith.mulf %355, %376 : vector<2x8x8xf32>
    %cst_115 = arith.constant dense<0.000000e+00> : vector<2x8xf32>
    %378 = vector.multi_reduction <add>, %377, %cst_115 [2] : vector<2x8x8xf32> to vector<2x8xf32>
    %379 = vector.shape_cast %378 : vector<2x8xf32> to vector<2x8x1xf32>
    %380 = math.absf %379 : vector<2x8x1xf32>
    %cst_116 = arith.constant 1.000000e-10 : f32
    %381 = vector.broadcast %cst_116 : f32 to vector<2x8x1xf32>
    %382 = arith.cmpf olt, %380, %381 : vector<2x8x1xf32>
    %cst_117 = arith.constant 0.000000e+00 : f32
    %383 = vector.broadcast %cst_117 : f32 to vector<2x8x1xf32>
    %384 = arith.cmpf oge, %379, %383 : vector<2x8x1xf32>
    %cst_118 = arith.constant 1.000000e-10 : f32
    %cst_119 = arith.constant -1.000000e-10 : f32
    %385 = vector.broadcast %cst_118 : f32 to vector<2x8x1xf32>
    %386 = vector.broadcast %cst_119 : f32 to vector<2x8x1xf32>
    %387 = arith.select %384, %385, %386 : vector<2x8x1xi1>, vector<2x8x1xf32>
    %388 = arith.select %382, %387, %379 : vector<2x8x1xi1>, vector<2x8x1xf32>
    %389 = tpu.reciprocal %388 {approx = true} : vector<2x8x1xf32> -> vector<2x8x1xf32>
    %390 = arith.mulf %388, %389 : vector<2x8x1xf32>
    %cst_120 = arith.constant 2.000000e+00 : f32
    %391 = vector.broadcast %cst_120 : f32 to vector<2x8x1xf32>
    %392 = arith.subf %391, %390 : vector<2x8x1xf32>
    %393 = arith.mulf %389, %392 : vector<2x8x1xf32>
    %394 = vector.broadcast %393 : vector<2x8x1xf32> to vector<2x8x32xf32>
    %395 = arith.mulf %372, %394 : vector<2x8x32xf32>
    %396 = arith.mulf %395, %395 : vector<2x8x32xf32>
    %cst_121 = arith.constant dense<0.000000e+00> : vector<2x8xf32>
    %397 = vector.multi_reduction <add>, %396, %cst_121 [2] : vector<2x8x32xf32> to vector<2x8xf32>
    %398 = vector.shape_cast %397 : vector<2x8xf32> to vector<2x8x1xf32>
    %cst_122 = arith.constant 1.000000e-15 : f32
    %399 = vector.broadcast %cst_122 : f32 to vector<2x8x1xf32>
    %400 = arith.maximumf %398, %399 : vector<2x8x1xf32>
    %401 = math.sqrt %400 : vector<2x8x1xf32>
    %cst_123 = arith.constant -0.999989986 : f32
    %cst_124 = arith.constant 0.999989986 : f32
    %402 = vector.broadcast %cst_123 : f32 to vector<2x8x1xf32>
    %403 = arith.maximumf %402, %401 : vector<2x8x1xf32>
    %404 = vector.broadcast %cst_124 : f32 to vector<2x8x1xf32>
    %405 = arith.minimumf %404, %403 : vector<2x8x1xf32>
    %406 = math.log1p %405 : vector<2x8x1xf32>
    %cst_125 = arith.constant 0.000000e+00 : f32
    %407 = vector.broadcast %cst_125 : f32 to vector<2x8x1xf32>
    %408 = arith.subf %407, %405 : vector<2x8x1xf32>
    %409 = math.log1p %408 : vector<2x8x1xf32>
    %410 = arith.subf %406, %409 : vector<2x8x1xf32>
    %cst_126 = arith.constant 5.000000e-01 : f32
    %411 = vector.broadcast %cst_126 : f32 to vector<2x8x1xf32>
    %412 = arith.mulf %411, %410 : vector<2x8x1xf32>
    %cst_127 = arith.constant 5.000000e-01 : f32
    %413 = vector.broadcast %cst_127 : f32 to vector<2x8x1xf32>
    %414 = arith.mulf %413, %412 : vector<2x8x1xf32>
    %415 = math.tanh %414 : vector<2x8x1xf32>
    %416 = vector.broadcast %415 : vector<2x8x1xf32> to vector<2x8x32xf32>
    %417 = arith.mulf %416, %395 : vector<2x8x32xf32>
    %418 = tpu.reciprocal %401 {approx = true} : vector<2x8x1xf32> -> vector<2x8x1xf32>
    %419 = arith.mulf %401, %418 : vector<2x8x1xf32>
    %cst_128 = arith.constant 2.000000e+00 : f32
    %420 = vector.broadcast %cst_128 : f32 to vector<2x8x1xf32>
    %421 = arith.subf %420, %419 : vector<2x8x1xf32>
    %422 = arith.mulf %418, %421 : vector<2x8x1xf32>
    %423 = vector.broadcast %422 : vector<2x8x1xf32> to vector<2x8x32xf32>
    %424 = arith.mulf %417, %423 : vector<2x8x32xf32>
    %425 = math.absf %355 : vector<2x8x8xf32>
    %cst_129 = arith.constant dense<0.000000e+00> : vector<2x8xf32>
    %426 = vector.multi_reduction <add>, %425, %cst_129 [2] : vector<2x8x8xf32> to vector<2x8xf32>
    %427 = vector.shape_cast %426 : vector<2x8xf32> to vector<2x8x1xf32>
    %428 = arith.mulf %424, %424 : vector<2x8x32xf32>
    %cst_130 = arith.constant dense<0.000000e+00> : vector<2x8xf32>
    %429 = vector.multi_reduction <add>, %428, %cst_130 [2] : vector<2x8x32xf32> to vector<2x8xf32>
    %430 = vector.shape_cast %429 : vector<2x8xf32> to vector<2x8x1xf32>
    %cst_131 = arith.constant 1.000000e-15 : f32
    %431 = vector.broadcast %cst_131 : f32 to vector<2x8x1xf32>
    %432 = arith.maximumf %430, %431 : vector<2x8x1xf32>
    %433 = math.sqrt %432 : vector<2x8x1xf32>
    %cst_132 = arith.constant -0.999989986 : f32
    %cst_133 = arith.constant 0.999989986 : f32
    %434 = vector.broadcast %cst_132 : f32 to vector<2x8x1xf32>
    %435 = arith.maximumf %434, %433 : vector<2x8x1xf32>
    %436 = vector.broadcast %cst_133 : f32 to vector<2x8x1xf32>
    %437 = arith.minimumf %436, %435 : vector<2x8x1xf32>
    %438 = math.log1p %437 : vector<2x8x1xf32>
    %cst_134 = arith.constant 0.000000e+00 : f32
    %439 = vector.broadcast %cst_134 : f32 to vector<2x8x1xf32>
    %440 = arith.subf %439, %437 : vector<2x8x1xf32>
    %441 = math.log1p %440 : vector<2x8x1xf32>
    %442 = arith.subf %438, %441 : vector<2x8x1xf32>
    %cst_135 = arith.constant 5.000000e-01 : f32
    %443 = vector.broadcast %cst_135 : f32 to vector<2x8x1xf32>
    %444 = arith.mulf %443, %442 : vector<2x8x1xf32>
    %445 = arith.mulf %427, %444 : vector<2x8x1xf32>
    %446 = math.tanh %445 : vector<2x8x1xf32>
    %447 = vector.broadcast %446 : vector<2x8x1xf32> to vector<2x8x32xf32>
    %448 = arith.mulf %447, %424 : vector<2x8x32xf32>
    %449 = tpu.reciprocal %433 {approx = true} : vector<2x8x1xf32> -> vector<2x8x1xf32>
    %450 = arith.mulf %433, %449 : vector<2x8x1xf32>
    %cst_136 = arith.constant 2.000000e+00 : f32
    %451 = vector.broadcast %cst_136 : f32 to vector<2x8x1xf32>
    %452 = arith.subf %451, %450 : vector<2x8x1xf32>
    %453 = arith.mulf %449, %452 : vector<2x8x1xf32>
    %454 = vector.broadcast %453 : vector<2x8x1xf32> to vector<2x8x32xf32>
    %455 = arith.mulf %448, %454 : vector<2x8x32xf32>
    %456 = arith.mulf %455, %455 : vector<2x8x32xf32>
    %cst_137 = arith.constant dense<0.000000e+00> : vector<2x8xf32>
    %457 = vector.multi_reduction <add>, %456, %cst_137 [2] : vector<2x8x32xf32> to vector<2x8xf32>
    %458 = vector.shape_cast %457 : vector<2x8xf32> to vector<2x8x1xf32>
    %cst_138 = arith.constant 1.000000e-15 : f32
    %459 = vector.broadcast %cst_138 : f32 to vector<2x8x1xf32>
    %460 = arith.maximumf %458, %459 : vector<2x8x1xf32>
    %461 = math.sqrt %460 : vector<2x8x1xf32>
    %cst_139 = arith.constant 0.999989986 : f32
    %462 = vector.broadcast %cst_139 : f32 to vector<2x8x1xf32>
    %463 = arith.cmpf ogt, %461, %462 : vector<2x8x1xf32>
    %464 = tpu.reciprocal %461 {approx = true} : vector<2x8x1xf32> -> vector<2x8x1xf32>
    %465 = arith.mulf %461, %464 : vector<2x8x1xf32>
    %cst_140 = arith.constant 2.000000e+00 : f32
    %466 = vector.broadcast %cst_140 : f32 to vector<2x8x1xf32>
    %467 = arith.subf %466, %465 : vector<2x8x1xf32>
    %468 = arith.mulf %464, %467 : vector<2x8x1xf32>
    %cst_141 = arith.constant 0.999989986 : f32
    %469 = vector.broadcast %cst_141 : f32 to vector<2x8x1xf32>
    %470 = arith.mulf %469, %468 : vector<2x8x1xf32>
    %cst_142 = arith.constant 1.000000e+00 : f32
    %471 = vector.broadcast %cst_142 : f32 to vector<2x8x1xf32>
    %472 = arith.select %463, %470, %471 : vector<2x8x1xi1>, vector<2x8x1xf32>
    %473 = vector.broadcast %472 : vector<2x8x1xf32> to vector<2x8x32xf32>
    %474 = arith.mulf %455, %473 : vector<2x8x32xf32>
    %475 = arith.mulf %474, %474 : vector<2x8x32xf32>
    %cst_143 = arith.constant dense<0.000000e+00> : vector<2x8xf32>
    %476 = vector.multi_reduction <add>, %475, %cst_143 [2] : vector<2x8x32xf32> to vector<2x8xf32>
    %477 = vector.shape_cast %476 : vector<2x8xf32> to vector<2x8x1xf32>
    %478 = arith.mulf %0, %0 : vector<2x8x32xf32>
    %cst_144 = arith.constant dense<0.000000e+00> : vector<2x8xf32>
    %479 = vector.multi_reduction <add>, %478, %cst_144 [2] : vector<2x8x32xf32> to vector<2x8xf32>
    %480 = vector.shape_cast %479 : vector<2x8xf32> to vector<2x8x1xf32>
    %481 = arith.addf %477, %480 : vector<2x8x1xf32>
    %cst_145 = arith.constant 1.000000e-15 : f32
    %482 = vector.broadcast %cst_145 : f32 to vector<2x8x1xf32>
    %483 = arith.maximumf %481, %482 : vector<2x8x1xf32>
    %484 = math.sqrt %483 : vector<2x8x1xf32>
    %cst_146 = arith.constant 0.999989986 : f32
    %485 = vector.broadcast %cst_146 : f32 to vector<2x8x1xf32>
    %486 = arith.cmpf ogt, %484, %485 : vector<2x8x1xf32>
    %487 = tpu.reciprocal %484 {approx = true} : vector<2x8x1xf32> -> vector<2x8x1xf32>
    %488 = arith.mulf %484, %487 : vector<2x8x1xf32>
    %cst_147 = arith.constant 2.000000e+00 : f32
    %489 = vector.broadcast %cst_147 : f32 to vector<2x8x1xf32>
    %490 = arith.subf %489, %488 : vector<2x8x1xf32>
    %491 = arith.mulf %487, %490 : vector<2x8x1xf32>
    %cst_148 = arith.constant 0.999989986 : f32
    %492 = vector.broadcast %cst_148 : f32 to vector<2x8x1xf32>
    %493 = arith.mulf %492, %491 : vector<2x8x1xf32>
    %cst_149 = arith.constant 1.000000e+00 : f32
    %494 = vector.broadcast %cst_149 : f32 to vector<2x8x1xf32>
    %495 = arith.select %486, %493, %494 : vector<2x8x1xi1>, vector<2x8x1xf32>
    %496 = vector.broadcast %495 : vector<2x8x1xf32> to vector<2x8x32xf32>
    %497 = arith.mulf %474, %496 : vector<2x8x32xf32>
    %498 = vector.shape_cast %497 : vector<2x8x32xf32> to vector<16x32xf32>
    %499 = vector.broadcast %495 : vector<2x8x1xf32> to vector<2x8x32xf32>
    %500 = arith.mulf %0, %499 : vector<2x8x32xf32>
    %501 = vector.shape_cast %500 : vector<2x8x32xf32> to vector<16x32xf32>
    %c0_150 = arith.constant 0 : index
    %c0_151 = arith.constant 0 : index
    %502 = vector.load %arg7[%c0_150, %c0_151] : memref<32x32xf32, #tpu.memory_space<vmem>>, vector<32x32xf32>
    %cst_152 = arith.constant dense<0.000000e+00> : vector<16x32xf32>
    %503 = tpu.matmul %498, %502, %cst_152 {dimension_numbers = #tpu.dot_dimension_numbers<[1], [0], [0], [1], [0, 0, 1, 1], [], []>} : vector<16x32xf32>, vector<32x32xf32>, vector<16x32xf32> -> vector<16x32xf32>
    %c0_153 = arith.constant 0 : index
    %c0_154 = arith.constant 0 : index
    %504 = vector.load %arg8[%c0_153, %c0_154] : memref<32x32xf32, #tpu.memory_space<vmem>>, vector<32x32xf32>
    %cst_155 = arith.constant dense<0.000000e+00> : vector<16x32xf32>
    %505 = tpu.matmul %501, %504, %cst_155 {dimension_numbers = #tpu.dot_dimension_numbers<[1], [0], [0], [1], [0, 0, 1, 1], [], []>} : vector<16x32xf32>, vector<32x32xf32>, vector<16x32xf32> -> vector<16x32xf32>
    %506 = arith.addf %503, %505 : vector<16x32xf32>
    %507 = arith.mulf %498, %498 : vector<16x32xf32>
    %cst_156 = arith.constant dense<0.000000e+00> : vector<16xf32>
    %508 = vector.multi_reduction <add>, %507, %cst_156 [1] : vector<16x32xf32> to vector<16xf32>
    %509 = vector.shape_cast %508 : vector<16xf32> to vector<16x1xf32>
    %510 = arith.mulf %501, %501 : vector<16x32xf32>
    %cst_157 = arith.constant dense<0.000000e+00> : vector<16xf32>
    %511 = vector.multi_reduction <add>, %510, %cst_157 [1] : vector<16x32xf32> to vector<16xf32>
    %512 = vector.shape_cast %511 : vector<16xf32> to vector<16x1xf32>
    %513 = arith.addf %509, %512 : vector<16x1xf32>
    %cst_158 = arith.constant 1.000000e-15 : f32
    %514 = vector.broadcast %cst_158 : f32 to vector<16x1xf32>
    %515 = arith.maximumf %513, %514 : vector<16x1xf32>
    %516 = math.sqrt %515 : vector<16x1xf32>
    %517 = arith.mulf %506, %506 : vector<16x32xf32>
    %cst_159 = arith.constant dense<0.000000e+00> : vector<16xf32>
    %518 = vector.multi_reduction <add>, %517, %cst_159 [1] : vector<16x32xf32> to vector<16xf32>
    %519 = vector.shape_cast %518 : vector<16xf32> to vector<16x1xf32>
    %cst_160 = arith.constant 1.000000e-15 : f32
    %520 = vector.broadcast %cst_160 : f32 to vector<16x1xf32>
    %521 = arith.maximumf %519, %520 : vector<16x1xf32>
    %522 = math.sqrt %521 : vector<16x1xf32>
    %523 = tpu.reciprocal %516 {approx = true} : vector<16x1xf32> -> vector<16x1xf32>
    %524 = arith.mulf %516, %523 : vector<16x1xf32>
    %cst_161 = arith.constant 2.000000e+00 : f32
    %525 = vector.broadcast %cst_161 : f32 to vector<16x1xf32>
    %526 = arith.subf %525, %524 : vector<16x1xf32>
    %527 = arith.mulf %523, %526 : vector<16x1xf32>
    %528 = arith.mulf %522, %527 : vector<16x1xf32>
    %cst_162 = arith.constant -0.999989986 : f32
    %cst_163 = arith.constant 0.999989986 : f32
    %529 = vector.broadcast %cst_162 : f32 to vector<16x1xf32>
    %530 = arith.maximumf %529, %516 : vector<16x1xf32>
    %531 = vector.broadcast %cst_163 : f32 to vector<16x1xf32>
    %532 = arith.minimumf %531, %530 : vector<16x1xf32>
    %533 = math.log1p %532 : vector<16x1xf32>
    %cst_164 = arith.constant 0.000000e+00 : f32
    %534 = vector.broadcast %cst_164 : f32 to vector<16x1xf32>
    %535 = arith.subf %534, %532 : vector<16x1xf32>
    %536 = math.log1p %535 : vector<16x1xf32>
    %537 = arith.subf %533, %536 : vector<16x1xf32>
    %cst_165 = arith.constant 5.000000e-01 : f32
    %538 = vector.broadcast %cst_165 : f32 to vector<16x1xf32>
    %539 = arith.mulf %538, %537 : vector<16x1xf32>
    %540 = arith.mulf %528, %539 : vector<16x1xf32>
    %541 = math.tanh %540 : vector<16x1xf32>
    %542 = vector.broadcast %541 : vector<16x1xf32> to vector<16x32xf32>
    %543 = arith.mulf %542, %506 : vector<16x32xf32>
    %544 = tpu.reciprocal %522 {approx = true} : vector<16x1xf32> -> vector<16x1xf32>
    %545 = arith.mulf %522, %544 : vector<16x1xf32>
    %cst_166 = arith.constant 2.000000e+00 : f32
    %546 = vector.broadcast %cst_166 : f32 to vector<16x1xf32>
    %547 = arith.subf %546, %545 : vector<16x1xf32>
    %548 = arith.mulf %544, %547 : vector<16x1xf32>
    %549 = vector.broadcast %548 : vector<16x1xf32> to vector<16x32xf32>
    %550 = arith.mulf %543, %549 : vector<16x32xf32>
    %551 = arith.mulf %550, %550 : vector<16x32xf32>
    %cst_167 = arith.constant dense<0.000000e+00> : vector<16xf32>
    %552 = vector.multi_reduction <add>, %551, %cst_167 [1] : vector<16x32xf32> to vector<16xf32>
    %553 = vector.shape_cast %552 : vector<16xf32> to vector<16x1xf32>
    %cst_168 = arith.constant 1.000000e-15 : f32
    %554 = vector.broadcast %cst_168 : f32 to vector<16x1xf32>
    %555 = arith.maximumf %553, %554 : vector<16x1xf32>
    %556 = math.sqrt %555 : vector<16x1xf32>
    %cst_169 = arith.constant 0.999989986 : f32
    %557 = vector.broadcast %cst_169 : f32 to vector<16x1xf32>
    %558 = arith.cmpf ogt, %556, %557 : vector<16x1xf32>
    %559 = tpu.reciprocal %556 {approx = true} : vector<16x1xf32> -> vector<16x1xf32>
    %560 = arith.mulf %556, %559 : vector<16x1xf32>
    %cst_170 = arith.constant 2.000000e+00 : f32
    %561 = vector.broadcast %cst_170 : f32 to vector<16x1xf32>
    %562 = arith.subf %561, %560 : vector<16x1xf32>
    %563 = arith.mulf %559, %562 : vector<16x1xf32>
    %cst_171 = arith.constant 0.999989986 : f32
    %564 = vector.broadcast %cst_171 : f32 to vector<16x1xf32>
    %565 = arith.mulf %564, %563 : vector<16x1xf32>
    %cst_172 = arith.constant 1.000000e+00 : f32
    %566 = vector.broadcast %cst_172 : f32 to vector<16x1xf32>
    %567 = arith.select %558, %565, %566 : vector<16x1xi1>, vector<16x1xf32>
    %568 = vector.broadcast %567 : vector<16x1xf32> to vector<16x32xf32>
    %569 = arith.mulf %550, %568 : vector<16x32xf32>
    %c0_173 = arith.constant 0 : index
    %c0_174 = arith.constant 0 : index
    %570 = vector.load %arg9[%c0_173, %c0_174] : memref<1x32xf32, #tpu.memory_space<vmem>>, vector<1x32xf32>
    %cst_175 = arith.constant 1.000000e-15 : f32
    %571 = vector.broadcast %cst_175 : f32 to vector<1x32xf32>
    %572 = arith.addf %570, %571 : vector<1x32xf32>
    %573 = vector.broadcast %572 : vector<1x32xf32> to vector<16x32xf32>
    %574 = arith.mulf %569, %573 : vector<16x32xf32>
    %cst_176 = arith.constant dense<0.000000e+00> : vector<16xf32>
    %575 = vector.multi_reduction <add>, %574, %cst_176 [1] : vector<16x32xf32> to vector<16xf32>
    %576 = vector.shape_cast %575 : vector<16xf32> to vector<16x1xf32>
    %cst_177 = arith.constant 2.000000e+00 : f32
    %577 = vector.broadcast %cst_177 : f32 to vector<16x1xf32>
    %578 = arith.mulf %577, %576 : vector<16x1xf32>
    %579 = arith.mulf %569, %569 : vector<16x32xf32>
    %cst_178 = arith.constant dense<0.000000e+00> : vector<16xf32>
    %580 = vector.multi_reduction <add>, %579, %cst_178 [1] : vector<16x32xf32> to vector<16xf32>
    %581 = vector.shape_cast %580 : vector<16xf32> to vector<16x1xf32>
    %582 = arith.mulf %572, %572 : vector<1x32xf32>
    %cst_179 = arith.constant dense<0.000000e+00> : vector<1xf32>
    %583 = vector.multi_reduction <add>, %582, %cst_179 [1] : vector<1x32xf32> to vector<1xf32>
    %584 = vector.shape_cast %583 : vector<1xf32> to vector<1x1xf32>
    %cst_180 = arith.constant 1.000000e+00 : f32
    %585 = vector.broadcast %cst_180 : f32 to vector<16x1xf32>
    %586 = arith.addf %585, %578 : vector<16x1xf32>
    %587 = vector.broadcast %584 : vector<1x1xf32> to vector<16x1xf32>
    %588 = arith.addf %586, %587 : vector<16x1xf32>
    %589 = vector.broadcast %588 : vector<16x1xf32> to vector<16x32xf32>
    %590 = arith.mulf %589, %569 : vector<16x32xf32>
    %cst_181 = arith.constant 1.000000e+00 : f32
    %591 = vector.broadcast %cst_181 : f32 to vector<16x1xf32>
    %592 = arith.subf %591, %581 : vector<16x1xf32>
    %593 = vector.broadcast %592 : vector<16x1xf32> to vector<16x32xf32>
    %594 = vector.broadcast %572 : vector<1x32xf32> to vector<16x32xf32>
    %595 = arith.mulf %593, %594 : vector<16x32xf32>
    %596 = arith.addf %590, %595 : vector<16x32xf32>
    %cst_182 = arith.constant 1.000000e+00 : f32
    %597 = vector.broadcast %cst_182 : f32 to vector<16x1xf32>
    %598 = arith.addf %597, %578 : vector<16x1xf32>
    %599 = vector.broadcast %584 : vector<1x1xf32> to vector<16x1xf32>
    %600 = arith.mulf %581, %599 : vector<16x1xf32>
    %601 = arith.addf %598, %600 : vector<16x1xf32>
    %602 = tpu.reciprocal %601 {approx = true} : vector<16x1xf32> -> vector<16x1xf32>
    %603 = arith.mulf %601, %602 : vector<16x1xf32>
    %cst_183 = arith.constant 2.000000e+00 : f32
    %604 = vector.broadcast %cst_183 : f32 to vector<16x1xf32>
    %605 = arith.subf %604, %603 : vector<16x1xf32>
    %606 = arith.mulf %602, %605 : vector<16x1xf32>
    %607 = vector.broadcast %606 : vector<16x1xf32> to vector<16x32xf32>
    %608 = arith.mulf %596, %607 : vector<16x32xf32>
    %609 = arith.mulf %608, %608 : vector<16x32xf32>
    %cst_184 = arith.constant dense<0.000000e+00> : vector<16xf32>
    %610 = vector.multi_reduction <add>, %609, %cst_184 [1] : vector<16x32xf32> to vector<16xf32>
    %611 = vector.shape_cast %610 : vector<16xf32> to vector<16x1xf32>
    %cst_185 = arith.constant 1.000000e-15 : f32
    %612 = vector.broadcast %cst_185 : f32 to vector<16x1xf32>
    %613 = arith.maximumf %611, %612 : vector<16x1xf32>
    %614 = math.sqrt %613 : vector<16x1xf32>
    %cst_186 = arith.constant 0.999989986 : f32
    %615 = vector.broadcast %cst_186 : f32 to vector<16x1xf32>
    %616 = arith.cmpf ogt, %614, %615 : vector<16x1xf32>
    %617 = tpu.reciprocal %614 {approx = true} : vector<16x1xf32> -> vector<16x1xf32>
    %618 = arith.mulf %614, %617 : vector<16x1xf32>
    %cst_187 = arith.constant 2.000000e+00 : f32
    %619 = vector.broadcast %cst_187 : f32 to vector<16x1xf32>
    %620 = arith.subf %619, %618 : vector<16x1xf32>
    %621 = arith.mulf %617, %620 : vector<16x1xf32>
    %cst_188 = arith.constant 0.999989986 : f32
    %622 = vector.broadcast %cst_188 : f32 to vector<16x1xf32>
    %623 = arith.mulf %622, %621 : vector<16x1xf32>
    %cst_189 = arith.constant 1.000000e+00 : f32
    %624 = vector.broadcast %cst_189 : f32 to vector<16x1xf32>
    %625 = arith.select %616, %623, %624 : vector<16x1xi1>, vector<16x1xf32>
    %626 = vector.broadcast %625 : vector<16x1xf32> to vector<16x32xf32>
    %627 = arith.mulf %608, %626 : vector<16x32xf32>
    %628 = arith.mulf %627, %627 : vector<16x32xf32>
    %cst_190 = arith.constant dense<0.000000e+00> : vector<16xf32>
    %629 = vector.multi_reduction <add>, %628, %cst_190 [1] : vector<16x32xf32> to vector<16xf32>
    %630 = vector.shape_cast %629 : vector<16xf32> to vector<16x1xf32>
    %cst_191 = arith.constant 1.000000e-15 : f32
    %631 = vector.broadcast %cst_191 : f32 to vector<16x1xf32>
    %632 = arith.maximumf %630, %631 : vector<16x1xf32>
    %633 = math.sqrt %632 : vector<16x1xf32>
    %cst_192 = arith.constant 0.999989986 : f32
    %634 = vector.broadcast %cst_192 : f32 to vector<16x1xf32>
    %635 = arith.cmpf ogt, %633, %634 : vector<16x1xf32>
    %636 = tpu.reciprocal %633 {approx = true} : vector<16x1xf32> -> vector<16x1xf32>
    %637 = arith.mulf %633, %636 : vector<16x1xf32>
    %cst_193 = arith.constant 2.000000e+00 : f32
    %638 = vector.broadcast %cst_193 : f32 to vector<16x1xf32>
    %639 = arith.subf %638, %637 : vector<16x1xf32>
    %640 = arith.mulf %636, %639 : vector<16x1xf32>
    %cst_194 = arith.constant 0.999989986 : f32
    %641 = vector.broadcast %cst_194 : f32 to vector<16x1xf32>
    %642 = arith.mulf %641, %640 : vector<16x1xf32>
    %cst_195 = arith.constant 1.000000e+00 : f32
    %643 = vector.broadcast %cst_195 : f32 to vector<16x1xf32>
    %644 = arith.select %635, %642, %643 : vector<16x1xi1>, vector<16x1xf32>
    %645 = vector.broadcast %644 : vector<16x1xf32> to vector<16x32xf32>
    %646 = arith.mulf %627, %645 : vector<16x32xf32>
    %647 = arith.mulf %646, %646 : vector<16x32xf32>
    %cst_196 = arith.constant dense<0.000000e+00> : vector<16xf32>
    %648 = vector.multi_reduction <add>, %647, %cst_196 [1] : vector<16x32xf32> to vector<16xf32>
    %649 = vector.shape_cast %648 : vector<16xf32> to vector<16x1xf32>
    %cst_197 = arith.constant 1.000000e-15 : f32
    %650 = vector.broadcast %cst_197 : f32 to vector<16x1xf32>
    %651 = arith.maximumf %649, %650 : vector<16x1xf32>
    %652 = math.sqrt %651 : vector<16x1xf32>
    %cst_198 = arith.constant -0.999989986 : f32
    %cst_199 = arith.constant 0.999989986 : f32
    %653 = vector.broadcast %cst_198 : f32 to vector<16x1xf32>
    %654 = arith.maximumf %653, %652 : vector<16x1xf32>
    %655 = vector.broadcast %cst_199 : f32 to vector<16x1xf32>
    %656 = arith.minimumf %655, %654 : vector<16x1xf32>
    %657 = math.log1p %656 : vector<16x1xf32>
    %cst_200 = arith.constant 0.000000e+00 : f32
    %658 = vector.broadcast %cst_200 : f32 to vector<16x1xf32>
    %659 = arith.subf %658, %656 : vector<16x1xf32>
    %660 = math.log1p %659 : vector<16x1xf32>
    %661 = arith.subf %657, %660 : vector<16x1xf32>
    %cst_201 = arith.constant 5.000000e-01 : f32
    %662 = vector.broadcast %cst_201 : f32 to vector<16x1xf32>
    %663 = arith.mulf %662, %661 : vector<16x1xf32>
    %664 = tpu.reciprocal %652 {approx = true} : vector<16x1xf32> -> vector<16x1xf32>
    %665 = arith.mulf %652, %664 : vector<16x1xf32>
    %cst_202 = arith.constant 2.000000e+00 : f32
    %666 = vector.broadcast %cst_202 : f32 to vector<16x1xf32>
    %667 = arith.subf %666, %665 : vector<16x1xf32>
    %668 = arith.mulf %664, %667 : vector<16x1xf32>
    %669 = arith.mulf %663, %668 : vector<16x1xf32>
    %670 = vector.broadcast %669 : vector<16x1xf32> to vector<16x32xf32>
    %671 = arith.mulf %670, %646 : vector<16x32xf32>
    %cst_203 = arith.constant dense<0.000000e+00> : vector<16xf32>
    %672 = vector.multi_reduction <add>, %671, %cst_203 [1] : vector<16x32xf32> to vector<16xf32>
    %673 = vector.shape_cast %672 : vector<16xf32> to vector<16x1xf32>
    %cst_204 = arith.constant 3.200000e+01 : f32
    %674 = vector.broadcast %cst_204 : f32 to vector<16x1xf32>
    %675 = arith.divf %673, %674 : vector<16x1xf32>
    %676 = vector.broadcast %675 : vector<16x1xf32> to vector<16x32xf32>
    %677 = arith.subf %671, %676 : vector<16x32xf32>
    %678 = arith.mulf %677, %677 : vector<16x32xf32>
    %cst_205 = arith.constant dense<0.000000e+00> : vector<16xf32>
    %679 = vector.multi_reduction <add>, %678, %cst_205 [1] : vector<16x32xf32> to vector<16xf32>
    %680 = vector.shape_cast %679 : vector<16xf32> to vector<16x1xf32>
    %cst_206 = arith.constant 3.200000e+01 : f32
    %681 = vector.broadcast %cst_206 : f32 to vector<16x1xf32>
    %682 = arith.divf %680, %681 : vector<16x1xf32>
    %683 = vector.broadcast %675 : vector<16x1xf32> to vector<16x32xf32>
    %684 = arith.subf %671, %683 : vector<16x32xf32>
    %cst_207 = arith.constant 9.99999974E-6 : f32
    %685 = vector.broadcast %cst_207 : f32 to vector<16x1xf32>
    %686 = arith.addf %682, %685 : vector<16x1xf32>
    %687 = math.rsqrt %686 : vector<16x1xf32>
    %688 = vector.broadcast %687 : vector<16x1xf32> to vector<16x32xf32>
    %689 = arith.mulf %684, %688 : vector<16x32xf32>
    %c0_208 = arith.constant 0 : index
    %c0_209 = arith.constant 0 : index
    %690 = vector.load %arg10[%c0_208, %c0_209] : memref<1x32xf32, #tpu.memory_space<vmem>>, vector<1x32xf32>
    %691 = vector.broadcast %690 : vector<1x32xf32> to vector<16x32xf32>
    %692 = arith.mulf %689, %691 : vector<16x32xf32>
    %c0_210 = arith.constant 0 : index
    %c0_211 = arith.constant 0 : index
    %693 = vector.load %arg11[%c0_210, %c0_211] : memref<1x32xf32, #tpu.memory_space<vmem>>, vector<1x32xf32>
    %694 = vector.broadcast %693 : vector<1x32xf32> to vector<16x32xf32>
    %695 = arith.addf %692, %694 : vector<16x32xf32>
    %696 = math.tanh %695 : vector<16x32xf32>
    %cst_212 = arith.constant 1.000000e-15 : f32
    %697 = vector.broadcast %cst_212 : f32 to vector<16x32xf32>
    %698 = arith.addf %696, %697 : vector<16x32xf32>
    %699 = arith.mulf %698, %698 : vector<16x32xf32>
    %cst_213 = arith.constant dense<0.000000e+00> : vector<16xf32>
    %700 = vector.multi_reduction <add>, %699, %cst_213 [1] : vector<16x32xf32> to vector<16xf32>
    %701 = vector.shape_cast %700 : vector<16xf32> to vector<16x1xf32>
    %cst_214 = arith.constant 1.000000e-15 : f32
    %702 = vector.broadcast %cst_214 : f32 to vector<16x1xf32>
    %703 = arith.maximumf %701, %702 : vector<16x1xf32>
    %704 = math.sqrt %703 : vector<16x1xf32>
    %705 = math.tanh %704 : vector<16x1xf32>
    %706 = tpu.reciprocal %704 {approx = true} : vector<16x1xf32> -> vector<16x1xf32>
    %707 = arith.mulf %704, %706 : vector<16x1xf32>
    %cst_215 = arith.constant 2.000000e+00 : f32
    %708 = vector.broadcast %cst_215 : f32 to vector<16x1xf32>
    %709 = arith.subf %708, %707 : vector<16x1xf32>
    %710 = arith.mulf %706, %709 : vector<16x1xf32>
    %711 = arith.mulf %705, %710 : vector<16x1xf32>
    %712 = vector.broadcast %711 : vector<16x1xf32> to vector<16x32xf32>
    %713 = arith.mulf %712, %698 : vector<16x32xf32>
    %714 = arith.mulf %713, %713 : vector<16x32xf32>
    %cst_216 = arith.constant dense<0.000000e+00> : vector<16xf32>
    %715 = vector.multi_reduction <add>, %714, %cst_216 [1] : vector<16x32xf32> to vector<16xf32>
    %716 = vector.shape_cast %715 : vector<16xf32> to vector<16x1xf32>
    %cst_217 = arith.constant 1.000000e-15 : f32
    %717 = vector.broadcast %cst_217 : f32 to vector<16x1xf32>
    %718 = arith.maximumf %716, %717 : vector<16x1xf32>
    %719 = math.sqrt %718 : vector<16x1xf32>
    %cst_218 = arith.constant 0.999989986 : f32
    %720 = vector.broadcast %cst_218 : f32 to vector<16x1xf32>
    %721 = arith.cmpf ogt, %719, %720 : vector<16x1xf32>
    %722 = tpu.reciprocal %719 {approx = true} : vector<16x1xf32> -> vector<16x1xf32>
    %723 = arith.mulf %719, %722 : vector<16x1xf32>
    %cst_219 = arith.constant 2.000000e+00 : f32
    %724 = vector.broadcast %cst_219 : f32 to vector<16x1xf32>
    %725 = arith.subf %724, %723 : vector<16x1xf32>
    %726 = arith.mulf %722, %725 : vector<16x1xf32>
    %cst_220 = arith.constant 0.999989986 : f32
    %727 = vector.broadcast %cst_220 : f32 to vector<16x1xf32>
    %728 = arith.mulf %727, %726 : vector<16x1xf32>
    %cst_221 = arith.constant 1.000000e+00 : f32
    %729 = vector.broadcast %cst_221 : f32 to vector<16x1xf32>
    %730 = arith.select %721, %728, %729 : vector<16x1xi1>, vector<16x1xf32>
    %731 = vector.broadcast %730 : vector<16x1xf32> to vector<16x32xf32>
    %732 = arith.mulf %713, %731 : vector<16x32xf32>
    %733 = vector.shape_cast %732 : vector<16x32xf32> to vector<2x8x32xf32>
    %c0_222 = arith.constant 0 : index
    %c0_223 = arith.constant 0 : index
    %c0_224 = arith.constant 0 : index
    %734 = vector.load %arg13[%c0_222, %c0_223, %c0_224] : memref<2x8x32xf32, #tpu.memory_space<vmem>>, vector<2x8x32xf32>
    tpu.vector_store %arg13[%c0_222, %c0_223, %c0_224], %733 {strides = array<i32>} : memref<2x8x32xf32, #tpu.memory_space<vmem>>, vector<2x8x32xf32>,
    %c0_225 = arith.constant 0 : index
    %c0_226 = arith.constant 0 : index
    %c0_227 = arith.constant 0 : index
    %735 = vector.load %arg14[%c0_225, %c0_226, %c0_227] : memref<2x8x8xf32, #tpu.memory_space<vmem>>, vector<2x8x8xf32>
    tpu.vector_store %arg14[%c0_225, %c0_226, %c0_227], %355 {strides = array<i32>} : memref<2x8x8xf32, #tpu.memory_space<vmem>>, vector<2x8x8xf32>,
    return
  }
  func.func @transform_0(%arg0: i32) -> (i32, i32, i32) {
    %c0_i32 = arith.constant 0 : i32
    %c0_i32_0 = arith.constant 0 : i32
    %c0_i32_1 = arith.constant 0 : i32
    return %arg0, %c0_i32, %c0_i32_0 : i32, i32, i32
  }
  func.func @transform_1(%arg0: i32) -> (i32, i32, i32) {
    %c0_i32 = arith.constant 0 : i32
    %c0_i32_0 = arith.constant 0 : i32
    %c0_i32_1 = arith.constant 0 : i32
    return %arg0, %c0_i32, %c0_i32_0 : i32, i32, i32
  }
  func.func @transform_2(%arg0: i32) -> (i32, i32) {
    %c0_i32 = arith.constant 0 : i32
    %c0_i32_0 = arith.constant 0 : i32
    %c0_i32_1 = arith.constant 0 : i32
    return %c0_i32, %c0_i32_0 : i32, i32
  }
  func.func @transform_3(%arg0: i32) -> (i32, i32) {
    %c0_i32 = arith.constant 0 : i32
    %c0_i32_0 = arith.constant 0 : i32
    %c0_i32_1 = arith.constant 0 : i32
    return %c0_i32, %c0_i32_0 : i32, i32
  }
  func.func @transform_4(%arg0: i32) -> (i32, i32) {
    %c0_i32 = arith.constant 0 : i32
    %c0_i32_0 = arith.constant 0 : i32
    %c0_i32_1 = arith.constant 0 : i32
    return %c0_i32, %c0_i32_0 : i32, i32
  }
  func.func @transform_5(%arg0: i32) -> (i32, i32) {
    %c0_i32 = arith.constant 0 : i32
    %c0_i32_0 = arith.constant 0 : i32
    %c0_i32_1 = arith.constant 0 : i32
    return %c0_i32, %c0_i32_0 : i32, i32
  }
  func.func @transform_6(%arg0: i32) -> (i32, i32) {
    %c0_i32 = arith.constant 0 : i32
    %c0_i32_0 = arith.constant 0 : i32
    %c0_i32_1 = arith.constant 0 : i32
    return %c0_i32, %c0_i32_0 : i32, i32
  }
  func.func @transform_7(%arg0: i32) -> (i32, i32) {
    %c0_i32 = arith.constant 0 : i32
    %c0_i32_0 = arith.constant 0 : i32
    %c0_i32_1 = arith.constant 0 : i32
    return %c0_i32, %c0_i32_0 : i32, i32
  }
  func.func @transform_8(%arg0: i32) -> (i32, i32) {
    %c0_i32 = arith.constant 0 : i32
    %c0_i32_0 = arith.constant 0 : i32
    %c0_i32_1 = arith.constant 0 : i32
    return %c0_i32, %c0_i32_0 : i32, i32
  }
  func.func @transform_9(%arg0: i32) -> (i32, i32) {
    %c0_i32 = arith.constant 0 : i32
    %c0_i32_0 = arith.constant 0 : i32
    %c0_i32_1 = arith.constant 0 : i32
    return %c0_i32, %c0_i32_0 : i32, i32
  }
  func.func @transform_10(%arg0: i32) -> (i32, i32) {
    %c0_i32 = arith.constant 0 : i32
    %c0_i32_0 = arith.constant 0 : i32
    %c0_i32_1 = arith.constant 0 : i32
    return %c0_i32, %c0_i32_0 : i32, i32
  }
  func.func @transform_11(%arg0: i32) -> i32 {
    %c0_i32 = arith.constant 0 : i32
    %c0_i32_0 = arith.constant 0 : i32
    return %c0_i32 : i32
  }
  func.func @transform_12(%arg0: i32) -> (i32, i32, i32) {
    %c0_i32 = arith.constant 0 : i32
    %c0_i32_0 = arith.constant 0 : i32
    %c0_i32_1 = arith.constant 0 : i32
    return %arg0, %c0_i32, %c0_i32_0 : i32, i32, i32
  }
  func.func @transform_13(%arg0: i32) -> (i32, i32, i32) {
    %c0_i32 = arith.constant 0 : i32
    %c0_i32_0 = arith.constant 0 : i32
    %c0_i32_1 = arith.constant 0 : i32
    return %arg0, %c0_i32, %c0_i32_0 : i32, i32, i32
  }
}

</mosaic_0001>

<llo_original>
// kernel: global_attention_hype.1
$region0: #{global_attention_hype.1}
  #allocation0 [shape = 'u32[]', space=smem, size = 0x4, offset = 0x4, fixed_abs, tag = 'smem constant byte address 0x4 - core index']
  #allocation1 [shape = 'u32[144,128]{1,0:T(1,128)}', space=vmem, size = 0x12000, scoped, tag = 'internal scratch']
  #allocation2 [shape = 'f32[1]{0:T(128)S(6)}', space=smem, size = 0x200, scoped, tag = 'scoped memory for global_attention_hype.1']
  %s0 = inlined_call_operand.hbm [shape: f32[2,8,32], index: 0, kind: input, shape index: {}]
  %s1 = inlined_call_operand.hbm [shape: f32[2,8,32], index: 1, kind: input, shape index: {}]
  %s2 = inlined_call_operand.vmem [shape: f32[32,32], index: 2, kind: input, shape index: {}]
  %s3 = inlined_call_operand.vmem [shape: f32[1,32], index: 3, kind: input, shape index: {}]
  %s4 = inlined_call_operand.vmem [shape: f32[32,32], index: 4, kind: input, shape index: {}]
  %s5 = inlined_call_operand.vmem [shape: f32[1,32], index: 5, kind: input, shape index: {}]
  %s6 = inlined_call_operand.vmem [shape: f32[32,32], index: 6, kind: input, shape index: {}]
  %s7 = inlined_call_operand.hbm [shape: f32[32,32], index: 7, kind: input, shape index: {}]
  %s8 = inlined_call_operand.vmem [shape: f32[1,32], index: 8, kind: input, shape index: {}]
  %s9 = inlined_call_operand.vmem [shape: f32[1,32], index: 9, kind: input, shape index: {}]
  %s10 = inlined_call_operand.vmem [shape: f32[1,32], index: 10, kind: input, shape index: {}]
  %s11 = inlined_call_operand.<no memory space> [shape: f32[1], index: 11, kind: input, shape index: {}]
  %s12 = inlined_call_operand.vmem [shape: f32[2,8,32], index: 12, kind: output, shape index: {0}]
  %s13 = inlined_call_operand.vmem [shape: f32[2,8,8], index: 13, kind: output, shape index: {1}]
  %14 = xla_tuple %s12, %s13
  %s15 = sld [smem:[#allocation0]]
  $region78: #{global_attention_hype.1} parent=0
    _
  %s17 = ssub.s32 1, %s15
  %s18 = scalar_select 0, %s17, %s15
  %19 = sst [smem:[#allocation2]] %s11
  $region1: #{global_attention_hype.1} parent=0
    #allocation3 [shape = 'u8[8192]{0}', space=vmem, size = 0x2000, scoped, tag = 'input window, operand 0, single buffered']
    #allocation4 [shape = 's32[1]{0}', space=sflag, size = 0x4, scoped, tag = 'scoped memory for global_attention_hype.1']
    #allocation5 [shape = 'u8[8192]{0}', space=vmem, size = 0x2000, scoped, tag = 'input window, operand 1, single buffered']
    #allocation6 [shape = 's32[1]{0}', space=sflag, size = 0x4, scoped, tag = 'scoped memory for global_attention_hype.1']
    #allocation7 [shape = 'u8[16384]{0}', space=vmem, size = 0x4000, scoped, tag = 'input window, operand 7, single buffered']
    %20 = vsyncpa [#allocation4], 0
    %21 = vsyncpa [#allocation6], 0
    // Predicated region
    $region2: #{global_attention_hype.1} parent=1 // pred_check
      _
    $region3: #{global_attention_hype.1} parent=1 // pred_check_branch
      %23 = sbr.rel (0) target = $region5
    $region4: #{global_attention_hype.1} parent=1 // pred_region
      %s25 = ssub.s32 256, 256
      %26 = vsyncadd [#allocation4], %s25
      %s27 = sshll.u32 [#allocation3], 4
      %s28 = int_to_ptr.vmem [resolvable:$true] %s27
      %33 = dma.hbm_to_vmem [thread:$0]  %s0, 256, %s28, [#allocation4], 128, 128, 8
    $region5: #{global_attention_hype.1} parent=1 // pred_fallthru
      _
    // Predicated region
    $region6: #{global_attention_hype.1} parent=1 // pred_check
      _
    $region7: #{global_attention_hype.1} parent=1 // pred_check_branch
      %35 = sbr.rel (0) target = $region9
    $region8: #{global_attention_hype.1} parent=1 // pred_region
      %s37 = ssub.s32 256, 256
      %38 = vsyncadd [#allocation6], %s37
      %s39 = sshll.u32 [#allocation5], 4
      %s40 = int_to_ptr.vmem [resolvable:$true] %s39
      %45 = dma.hbm_to_vmem [thread:$0]  %s1, 256, %s40, [#allocation6], 128, 128, 8
    $region9: #{global_attention_hype.1} parent=1 // pred_fallthru
      _
    // Predicated region
    $region10: #{global_attention_hype.1} parent=1 // pred_check
      _
    $region11: #{global_attention_hype.1} parent=1 // pred_check_branch
      %47 = sbr.rel (0) target = $region13
    $region12: #{global_attention_hype.1} parent=1 // pred_region
      _
    $region13: #{global_attention_hype.1} parent=1 // pred_fallthru
      _
    // Predicated region
    $region14: #{global_attention_hype.1} parent=1 // pred_check
      _
    $region15: #{global_attention_hype.1} parent=1 // pred_check_branch
      %49 = sbr.rel (0) target = $region17
    $region16: #{global_attention_hype.1} parent=1 // pred_region
      _
    $region17: #{global_attention_hype.1} parent=1 // pred_fallthru
      _
    // Predicated region
    $region18: #{global_attention_hype.1} parent=1 // pred_check
      _
    $region19: #{global_attention_hype.1} parent=1 // pred_check_branch
      %51 = sbr.rel (0) target = $region21
    $region20: #{global_attention_hype.1} parent=1 // pred_region
      _
    $region21: #{global_attention_hype.1} parent=1 // pred_fallthru
      _
    // Predicated region
    $region22: #{global_attention_hype.1} parent=1 // pred_check
      _
    $region23: #{global_attention_hype.1} parent=1 // pred_check_branch
      %53 = sbr.rel (0) target = $region25
    $region24: #{global_attention_hype.1} parent=1 // pred_region
      _
    $region25: #{global_attention_hype.1} parent=1 // pred_fallthru
      _
    // Predicated region
    $region26: #{global_attention_hype.1} parent=1 // pred_check
      _
    $region27: #{global_attention_hype.1} parent=1 // pred_check_branch
      %55 = sbr.rel (0) target = $region29
    $region28: #{global_attention_hype.1} parent=1 // pred_region
      _
    $region29: #{global_attention_hype.1} parent=1 // pred_fallthru
      _
    // Predicated region
    $region30: #{global_attention_hype.1} parent=1 // pred_check
      _
    $region31: #{global_attention_hype.1} parent=1 // pred_check_branch
      %57 = sbr.rel (0) target = $region33
    $region32: #{global_attention_hype.1} parent=1 // pred_region
      %s59 = ssub.s32 512, 512
      %60 = vsyncadd [#allocation6], %s59
      %s61 = sshll.u32 [#allocation7], 4
      %s62 = int_to_ptr.vmem [resolvable:$true] %s61
      %67 = dma.hbm_to_vmem [thread:$0]  %s7, 512, %s62, [#allocation6], 128, 128, 8
    $region33: #{global_attention_hype.1} parent=1 // pred_fallthru
      _
    // Predicated region
    $region34: #{global_attention_hype.1} parent=1 // pred_check
      _
    $region35: #{global_attention_hype.1} parent=1 // pred_check_branch
      %69 = sbr.rel (0) target = $region37
    $region36: #{global_attention_hype.1} parent=1 // pred_region
      _
    $region37: #{global_attention_hype.1} parent=1 // pred_fallthru
      _
    // Predicated region
    $region38: #{global_attention_hype.1} parent=1 // pred_check
      _
    $region39: #{global_attention_hype.1} parent=1 // pred_check_branch
      %71 = sbr.rel (0) target = $region41
    $region40: #{global_attention_hype.1} parent=1 // pred_region
      _
    $region41: #{global_attention_hype.1} parent=1 // pred_fallthru
      _
    // Predicated region
    $region42: #{global_attention_hype.1} parent=1 // pred_check
      _
    $region43: #{global_attention_hype.1} parent=1 // pred_check_branch
      %73 = sbr.rel (0) target = $region45
    $region44: #{global_attention_hype.1} parent=1 // pred_region
      _
    $region45: #{global_attention_hype.1} parent=1 // pred_fallthru
      _
    // Predicated region
    $region46: #{global_attention_hype.1} parent=1 // pred_check
      _
    $region47: #{global_attention_hype.1} parent=1 // pred_check_branch
      %75 = sbr.rel (0) target = $region49
    $region48: #{global_attention_hype.1} parent=1 // pred_region
      _
    $region49: #{global_attention_hype.1} parent=1 // pred_fallthru
      _
    // Predicated region
    $region50: #{global_attention_hype.1} parent=1 // pred_check
      _
    $region51: #{global_attention_hype.1} parent=1 // pred_check_branch
      %77 = sbr.rel (0) target = $region53
    $region52: #{global_attention_hype.1} parent=1 // pred_region
      %78 = dma.done [#allocation4], 256
    $region53: #{global_attention_hype.1} parent=1 // pred_fallthru
      _
    // Predicated region
    $region54: #{global_attention_hype.1} parent=1 // pred_check
      _
    $region55: #{global_attention_hype.1} parent=1 // pred_check_branch
      %80 = sbr.rel (0) target = $region57
    $region56: #{global_attention_hype.1} parent=1 // pred_region
      %81 = dma.done [#allocation6], 256
    $region57: #{global_attention_hype.1} parent=1 // pred_fallthru
      _
    // Predicated region
    $region58: #{global_attention_hype.1} parent=1 // pred_check
      _
    $region59: #{global_attention_hype.1} parent=1 // pred_check_branch
      %83 = sbr.rel (0) target = $region61
    $region60: #{global_attention_hype.1} parent=1 // pred_region
      %84 = dma.done [#allocation6], 512
    $region61: #{global_attention_hype.1} parent=1 // pred_fallthru
      _
    %v85 = vld [vmem:[#allocation3] sm:$0xff]
    %v86 = vld [vmem:[#allocation3 + $0x8] sm:$0xff]
    %v87 = vld [vmem:[#allocation5] sm:$0xff]
    %v88 = vld [vmem:[#allocation5 + $0x8] sm:$0xff]
    %s89 = sld [smem:[#allocation2]]
    %v90 = vld [vmem:[%s2] sm:$0xff]
    %v91 = vld [vmem:[%s2 + $0x8] sm:$0xff]
    %v92 = vld [vmem:[%s2 + $0x10] sm:$0xff]
    %v93 = vld [vmem:[%s2 + $0x18] sm:$0xff]
    %v94 = vmul.f32 %v85, %v85
    %v95 = vmul.f32 %v86, %v86
    %vm96 = vcmask 261120
    %v97 = vsel %vm96, %v94, 0.0
    %98 = vadd.xlane.f32.xlu0 %v97
    %v99 = vpop.xlane.xlu0 %98
    %v100 = vsel %vm96, %v95, 0.0
    %101 = vadd.xlane.f32.xlu0 %v100
    %v102 = vpop.xlane.xlu0 %101
    %v103 = vmax.f32 %v99, 1e-15
    %v104 = vmax.f32 %v102, 1e-15
    %v105 = vrsqrt.pop %v103
    %v106 = vmul.f32 %v103, %v105
    %vm107 = vcmp.eq.f32.partialorder %v103, inf
    %v108 = vsel %vm107, %v103, %v106
    %vm109 = vcmp.eq.f32.partialorder %v103, 0.0
    %v110 = vand.u32 %v103, 2147483648
    %v111 = vsel %vm109, %v110, %v108
    %v112 = vrsqrt.pop %v104
    %v113 = vmul.f32 %v104, %v112
    %vm114 = vcmp.eq.f32.partialorder %v104, inf
    %v115 = vsel %vm114, %v104, %v113
    %vm116 = vcmp.eq.f32.partialorder %v104, 0.0
    %v117 = vand.u32 %v104, 2147483648
    %v118 = vsel %vm116, %v117, %v115
    %vm119 = vcmp.gt.f32.partialorder %v111, 0.99999
    %vm120 = vcmp.gt.f32.partialorder %v118, 0.99999
    %v121 = vrcp.pop %v111
    %v122 = vrcp.pop %v118
    %v123 = vmul.f32 %v111, %v121
    %v124 = vmul.f32 %v118, %v122
    %v125 = vsub.f32 2.0, %v123
    %v126 = vsub.f32 2.0, %v124
    %v127 = vmul.f32 %v121, %v125
    %v128 = vmul.f32 %v122, %v126
    %v129 = vmul.f32 %v127, 0.99999
    %v130 = vmul.f32 %v128, 0.99999
    %v131 = vsel %vm119, %v129, 1.0
    %v132 = vsel %vm120, %v130, 1.0
    %v133 = vmul.f32 %v85, %v131
    %v134 = vmul.f32 %v86, %v132
    %v136 = vsel %vm96, %v133, 0
    %v139 = vsel %vm96, %v134, 0
    %141 = vmatprep.subr.mxu0 0.0
    %142 = vmatpush1.msra.mxu0 0.0
    %143 = vmatprep.subr.mxu0 0.0
    %144 = vmatpush1.msra.mxu0 0.0
    %145 = vmatprep.subr.mxu0 0.0
    %146 = vmatpush1.msra.mxu0 0.0
    %147 = vmatprep.subr.mxu0 0.0
    %148 = vmatpush1.msra.mxu0 0.0
    %149 = vmatprep.subr.mxu0 0.0
    %150 = vmatpush1.msra.mxu0 0.0
    %151 = vmatprep.subr.mxu0 0.0
    %152 = vmatpush1.msra.mxu0 0.0
    %153 = vmatprep.subr.mxu0 0.0
    %154 = vmatpush1.msra.mxu0 0.0
    %155 = vmatprep.subr.mxu0 0.0
    %156 = vmatpush1.msra.mxu0 0.0
    %157 = vmatprep.subr.mxu0 0.0
    %158 = vmatpush1.msra.mxu0 0.0
    %159 = vmatprep.subr.mxu0 0.0
    %160 = vmatpush1.msra.mxu0 0.0
    %161 = vmatprep.subr.mxu0 0.0
    %162 = vmatpush1.msra.mxu0 0.0
    %163 = vmatprep.subr.mxu0 0.0
    %164 = vmatpush1.msra.mxu0 0.0
    %165 = vmatprep.subr.mxu0 0.0
    %166 = vmatpush1.msra.mxu0 %v93
    %167 = vmatprep.subr.mxu0 0.0
    %168 = vmatpush1.msra.mxu0 %v92
    %169 = vmatprep.subr.mxu0 0.0
    %170 = vmatpush1.msra.mxu0 %v91
    %171 = vmatprep.subr.mxu0 0.0
    %172 = vmatpush1.msra.mxu0 %v90
    %173 = vmatprep.subr.mxu0 0.0
    %174 = vmatpush2.msra.mxu0 0.0
    %175 = vmatprep.subr.mxu0 0.0
    %176 = vmatpush2.msra.mxu0 0.0
    %177 = vmatprep.subr.mxu0 0.0
    %178 = vmatpush2.msra.mxu0 0.0
    %179 = vmatprep.subr.mxu0 0.0
    %180 = vmatpush2.msra.mxu0 0.0
    %181 = vmatprep.subr.mxu0 0.0
    %182 = vmatpush2.msra.mxu0 0.0
    %183 = vmatprep.subr.mxu0 0.0
    %184 = vmatpush2.msra.mxu0 0.0
    %185 = vmatprep.subr.mxu0 0.0
    %186 = vmatpush2.msra.mxu0 0.0
    %187 = vmatprep.subr.mxu0 0.0
    %188 = vmatpush2.msra.mxu0 0.0
    %189 = vmatprep.subr.mxu0 0.0
    %190 = vmatpush2.msra.mxu0 0.0
    %191 = vmatprep.subr.mxu0 0.0
    %192 = vmatpush2.msra.mxu0 0.0
    %193 = vmatprep.subr.mxu0 0.0
    %194 = vmatpush2.msra.mxu0 0.0
    %195 = vmatprep.subr.mxu0 0.0
    %196 = vmatpush2.msra.mxu0 0.0
    %197 = vmatprep.subr.mxu0 0.0
    %198 = vmatpush2.msra.mxu0 0.0
    %199 = vmatprep.subr.mxu0 0.0
    %200 = vmatpush2.msra.mxu0 0.0
    %201 = vmatprep.subr.mxu0 0.0
    %202 = vmatpush2.msra.mxu0 0.0
    %203 = vmatprep.subr.mxu0 0.0
    %204 = vmatpush2.msra.mxu0 0.0
    %205 = vmatprep.mubr.f32.mxu0 0.0
    %206 = vmatmul.mubr.f32.gmra.mxu0 %v136
    %v207 = vpop.f32.mrf.mxu0
    %v208 = vadd.f32 0.0, %v207
    %v209 = vpop.f32.mrf.mxu0
    %210 = vmatprep.mubr.f32.mxu0 0.0
    %211 = vmatmul.mubr.f32.gmra.mxu0 %v139
    %v212 = vpop.f32.mrf.mxu0
    %v213 = vadd.f32 0.0, %v212
    %v214 = vpop.f32.mrf.mxu0
    %215 = vdwg.mxu0
    %v216 = vmul.f32 %v208, %v208
    %v217 = vmul.f32 %v213, %v213
    %v218 = vsel %vm96, %v216, 0.0
    %219 = vadd.xlane.f32.xlu0 %v218
    %v220 = vpop.xlane.xlu0 %219
    %v221 = vsel %vm96, %v217, 0.0
    %222 = vadd.xlane.f32.xlu0 %v221
    %v223 = vpop.xlane.xlu0 %222
    %v224 = vmax.f32 %v220, 1e-15
    %v225 = vmax.f32 %v223, 1e-15
    %v226 = vrsqrt.pop %v224
    %v227 = vmul.f32 %v224, %v226
    %vm228 = vcmp.eq.f32.partialorder %v224, inf
    %v229 = vsel %vm228, %v224, %v227
    %vm230 = vcmp.eq.f32.partialorder %v224, 0.0
    %v231 = vand.u32 %v224, 2147483648
    %v232 = vsel %vm230, %v231, %v229
    %v233 = vrsqrt.pop %v225
    %v234 = vmul.f32 %v225, %v233
    %vm235 = vcmp.eq.f32.partialorder %v225, inf
    %v236 = vsel %vm235, %v225, %v234
    %vm237 = vcmp.eq.f32.partialorder %v225, 0.0
    %v238 = vand.u32 %v225, 2147483648
    %v239 = vsel %vm237, %v238, %v236
    %v240 = vmul.f32 %v133, %v133
    %v241 = vmul.f32 %v134, %v134
    %v242 = vsel %vm96, %v240, 0.0
    %243 = vadd.xlane.f32.xlu0 %v242
    %v244 = vpop.xlane.xlu0 %243
    %v245 = vsel %vm96, %v241, 0.0
    %246 = vadd.xlane.f32.xlu0 %v245
    %v247 = vpop.xlane.xlu0 %246
    %v248 = vmax.f32 %v244, 1e-15
    %v249 = vmax.f32 %v247, 1e-15
    %v250 = vrsqrt.pop %v248
    %v251 = vmul.f32 %v248, %v250
    %vm252 = vcmp.eq.f32.partialorder %v248, inf
    %v253 = vsel %vm252, %v248, %v251
    %vm254 = vcmp.eq.f32.partialorder %v248, 0.0
    %v255 = vand.u32 %v248, 2147483648
    %v256 = vsel %vm254, %v255, %v253
    %v257 = vrsqrt.pop %v249
    %v258 = vmul.f32 %v249, %v257
    %vm259 = vcmp.eq.f32.partialorder %v249, inf
    %v260 = vsel %vm259, %v249, %v258
    %vm261 = vcmp.eq.f32.partialorder %v249, 0.0
    %v262 = vand.u32 %v249, 2147483648
    %v263 = vsel %vm261, %v262, %v260
    %v264 = vrcp.pop %v256
    %v265 = vrcp.pop %v263
    %v266 = vmul.f32 %v256, %v264
    %v267 = vmul.f32 %v263, %v265
    %v268 = vsub.f32 2.0, %v266
    %v269 = vsub.f32 2.0, %v267
    %v270 = vmul.f32 %v264, %v268
    %v271 = vmul.f32 %v265, %v269
    %v272 = vmul.f32 %v232, %v270
    %v273 = vmul.f32 %v239, %v271
    %v274 = vmax.f32 %v256, -0.99999
    %v275 = vmax.f32 %v263, -0.99999
    %v276 = vmin.f32 %v274, 0.99999
    %v277 = vmin.f32 %v275, 0.99999
    %v278 = vadd.f32 %v276, 1.0
    %v279 = vlog2.pop %v278
    %v280 = vmul.f32 %v279, 0.6931472
    %v281 = vmul.f32 -0.5, %v276
    %v282 = vadd.f32 %v281, 1.0
    %v283 = vmul.f32 %v282, %v276
    %v284 = vand.u32 2147483647, %v276
    %vm285 = vcmp.lt.f32.partialorder %v284, 0.0004427343
    %v286 = vsel %vm285, %v283, %v280
    %v287 = vadd.f32 %v277, 1.0
    %v288 = vlog2.pop %v287
    %v289 = vmul.f32 %v288, 0.6931472
    %v290 = vmul.f32 -0.5, %v277
    %v291 = vadd.f32 %v290, 1.0
    %v292 = vmul.f32 %v291, %v277
    %v293 = vand.u32 2147483647, %v277
    %vm294 = vcmp.lt.f32.partialorder %v293, 0.0004427343
    %v295 = vsel %vm294, %v292, %v289
    %v296 = vsub.f32 0.0, %v276
    %v297 = vsub.f32 0.0, %v277
    %v298 = vadd.f32 %v296, 1.0
    %v299 = vlog2.pop %v298
    %v300 = vmul.f32 %v299, 0.6931472
    %v301 = vmul.f32 -0.5, %v296
    %v302 = vadd.f32 %v301, 1.0
    %v303 = vmul.f32 %v302, %v296
    %v304 = vand.u32 2147483647, %v296
    %vm305 = vcmp.lt.f32.partialorder %v304, 0.0004427343
    %v306 = vsel %vm305, %v303, %v300
    %v307 = vadd.f32 %v297, 1.0
    %v308 = vlog2.pop %v307
    %v309 = vmul.f32 %v308, 0.6931472
    %v310 = vmul.f32 -0.5, %v297
    %v311 = vadd.f32 %v310, 1.0
    %v312 = vmul.f32 %v311, %v297
    %v313 = vand.u32 2147483647, %v297
    %vm314 = vcmp.lt.f32.partialorder %v313, 0.0004427343
    %v315 = vsel %vm314, %v312, %v309
    %v316 = vsub.f32 %v286, %v306
    %v317 = vsub.f32 %v295, %v315
    %v318 = vmul.f32 %v316, 0.5
    %v319 = vmul.f32 %v317, 0.5
    %v320 = vmul.f32 %v272, %v318
    %v321 = vmul.f32 %v273, %v319
    %v322 = vtanh.pop %v320
    %v323 = vtanh.pop %v321
    %v324 = vmul.f32 %v322, %v208
    %v325 = vmul.f32 %v323, %v213
    %v326 = vrcp.pop %v232
    %v327 = vrcp.pop %v239
    %v328 = vmul.f32 %v232, %v326
    %v329 = vmul.f32 %v239, %v327
    %v330 = vsub.f32 2.0, %v328
    %v331 = vsub.f32 2.0, %v329
    %v332 = vmul.f32 %v326, %v330
    %v333 = vmul.f32 %v327, %v331
    %v334 = vmul.f32 %v324, %v332
    %v335 = vmul.f32 %v325, %v333
    %v336 = vmul.f32 %v334, %v334
    %v337 = vmul.f32 %v335, %v335
    %v338 = vsel %vm96, %v336, 0.0
    %339 = vadd.xlane.f32.xlu0 %v338
    %v340 = vpop.xlane.xlu0 %339
    %v341 = vsel %vm96, %v337, 0.0
    %342 = vadd.xlane.f32.xlu0 %v341
    %v343 = vpop.xlane.xlu0 %342
    %v344 = vmax.f32 %v340, 1e-15
    %v345 = vmax.f32 %v343, 1e-15
    %v346 = vrsqrt.pop %v344
    %v347 = vmul.f32 %v344, %v346
    %vm348 = vcmp.eq.f32.partialorder %v344, inf
    %v349 = vsel %vm348, %v344, %v347
    %vm350 = vcmp.eq.f32.partialorder %v344, 0.0
    %v351 = vand.u32 %v344, 2147483648
    %v352 = vsel %vm350, %v351, %v349
    %v353 = vrsqrt.pop %v345
    %v354 = vmul.f32 %v345, %v353
    %vm355 = vcmp.eq.f32.partialorder %v345, inf
    %v356 = vsel %vm355, %v345, %v354
    %vm357 = vcmp.eq.f32.partialorder %v345, 0.0
    %v358 = vand.u32 %v345, 2147483648
    %v359 = vsel %vm357, %v358, %v356
    %vm360 = vcmp.gt.f32.partialorder %v352, 0.99999
    %vm361 = vcmp.gt.f32.partialorder %v359, 0.99999
    %v362 = vrcp.pop %v352
    %v363 = vrcp.pop %v359
    %v364 = vmul.f32 %v352, %v362
    %v365 = vmul.f32 %v359, %v363
    %v366 = vsub.f32 2.0, %v364
    %v367 = vsub.f32 2.0, %v365
    %v368 = vmul.f32 %v362, %v366
    %v369 = vmul.f32 %v363, %v367
    %v370 = vmul.f32 %v368, 0.99999
    %v371 = vmul.f32 %v369, 0.99999
    %v372 = vsel %vm360, %v370, 1.0
    %v373 = vsel %vm361, %v371, 1.0
    %v374 = vmul.f32 %v334, %v372
    %v375 = vmul.f32 %v335, %v373
    %v376 = vld [vmem:[%s3] sm:$0x1]
    %v377 = vadd.f32 %v376, 1e-15
    %v379 = vlaneseq
    %v380 = vshrl.u32 %v379, 7
    %v381 = vsub.s32 0, %v380
    %v382 = vrot.slane %v377, %v381
    %v384 = vmul.f32 %v374, %v382
    %v385 = vmul.f32 %v375, %v382
    %v386 = vsel %vm96, %v384, 0.0
    %387 = vadd.xlane.f32.xlu0 %v386
    %v388 = vpop.xlane.xlu0 %387
    %v389 = vsel %vm96, %v385, 0.0
    %390 = vadd.xlane.f32.xlu0 %v389
    %v391 = vpop.xlane.xlu0 %390
    %v392 = vmul.f32 %v388, 2.0
    %v393 = vmul.f32 %v391, 2.0
    %v394 = vmul.f32 %v374, %v374
    %v395 = vmul.f32 %v375, %v375
    %v396 = vsel %vm96, %v394, 0.0
    %397 = vadd.xlane.f32.xlu0 %v396
    %v398 = vpop.xlane.xlu0 %397
    %v399 = vsel %vm96, %v395, 0.0
    %400 = vadd.xlane.f32.xlu0 %v399
    %v401 = vpop.xlane.xlu0 %400
    %v402 = vmul.f32 %v377, %v377
    %vm403 = vcmask 253952
    %v404 = vsel %vm403, %v402, 0.0
    %405 = vadd.xlane.f32.xlu0 %v404
    %v406 = vpop.xlane.xlu0 %405
    %v407 = vadd.f32 %v392, 1.0
    %v408 = vadd.f32 %v393, 1.0
    %v409 = vlaneseq
    %v410 = vshrl.u32 %v409, 7
    %v411 = vsub.s32 0, %v410
    %v412 = vrot.slane %v406, %v411
    %v413 = vadd.f32 %v407, %v412
    %v414 = vadd.f32 %v408, %v412
    %v415 = vmul.f32 %v413, %v374
    %v416 = vmul.f32 %v414, %v375
    %v417 = vsub.f32 1.0, %v398
    %v418 = vsub.f32 1.0, %v401
    %v419 = vmul.f32 %v417, %v382
    %v420 = vmul.f32 %v418, %v382
    %v421 = vadd.f32 %v415, %v419
    %v422 = vadd.f32 %v416, %v420
    %v423 = vmul.f32 %v398, %v412
    %v424 = vmul.f32 %v401, %v412
    %v425 = vadd.f32 %v407, %v423
    %v426 = vadd.f32 %v408, %v424
    %v427 = vrcp.pop %v425
    %v428 = vrcp.pop %v426
    %v429 = vmul.f32 %v425, %v427
    %v430 = vmul.f32 %v426, %v428
    %v431 = vsub.f32 2.0, %v429
    %v432 = vsub.f32 2.0, %v430
    %v433 = vmul.f32 %v427, %v431
    %v434 = vmul.f32 %v428, %v432
    %v435 = vmul.f32 %v421, %v433
    %v436 = vmul.f32 %v422, %v434
    %v437 = vmul.f32 %v435, %v435
    %v438 = vmul.f32 %v436, %v436
    %v439 = vsel %vm96, %v437, 0.0
    %440 = vadd.xlane.f32.xlu0 %v439
    %v441 = vpop.xlane.xlu0 %440
    %v442 = vsel %vm96, %v438, 0.0
    %443 = vadd.xlane.f32.xlu0 %v442
    %v444 = vpop.xlane.xlu0 %443
    %v445 = vmax.f32 %v441, 1e-15
    %v446 = vmax.f32 %v444, 1e-15
    %v447 = vrsqrt.pop %v445
    %v448 = vmul.f32 %v445, %v447
    %vm449 = vcmp.eq.f32.partialorder %v445, inf
    %v450 = vsel %vm449, %v445, %v448
    %vm451 = vcmp.eq.f32.partialorder %v445, 0.0
    %v452 = vand.u32 %v445, 2147483648
    %v453 = vsel %vm451, %v452, %v450
    %v454 = vrsqrt.pop %v446
    %v455 = vmul.f32 %v446, %v454
    %vm456 = vcmp.eq.f32.partialorder %v446, inf
    %v457 = vsel %vm456, %v446, %v455
    %vm458 = vcmp.eq.f32.partialorder %v446, 0.0
    %v459 = vand.u32 %v446, 2147483648
    %v460 = vsel %vm458, %v459, %v457
    %vm461 = vcmp.gt.f32.partialorder %v453, 0.99999
    %vm462 = vcmp.gt.f32.partialorder %v460, 0.99999
    %v463 = vrcp.pop %v453
    %v464 = vrcp.pop %v460
    %v465 = vmul.f32 %v453, %v463
    %v466 = vmul.f32 %v460, %v464
    %v467 = vsub.f32 2.0, %v465
    %v468 = vsub.f32 2.0, %v466
    %v469 = vmul.f32 %v463, %v467
    %v470 = vmul.f32 %v464, %v468
    %v471 = vmul.f32 %v469, 0.99999
    %v472 = vmul.f32 %v470, 0.99999
    %v473 = vsel %vm461, %v471, 1.0
    %v474 = vsel %vm462, %v472, 1.0
    %v475 = vmul.f32 %v435, %v473
    %v476 = vmul.f32 %v436, %v474
    %v477 = vld [vmem:[%s4] sm:$0xff]
    %v478 = vld [vmem:[%s4 + $0x8] sm:$0xff]
    %v479 = vld [vmem:[%s4 + $0x10] sm:$0xff]
    %v480 = vld [vmem:[%s4 + $0x18] sm:$0xff]
    %v481 = vmul.f32 %v87, %v87
    %v482 = vmul.f32 %v88, %v88
    %v483 = vsel %vm96, %v481, 0.0
    %484 = vadd.xlane.f32.xlu0 %v483
    %v485 = vpop.xlane.xlu0 %484
    %v486 = vsel %vm96, %v482, 0.0
    %487 = vadd.xlane.f32.xlu0 %v486
    %v488 = vpop.xlane.xlu0 %487
    %v489 = vmax.f32 %v485, 1e-15
    %v490 = vmax.f32 %v488, 1e-15
    %v491 = vrsqrt.pop %v489
    %v492 = vmul.f32 %v489, %v491
    %vm493 = vcmp.eq.f32.partialorder %v489, inf
    %v494 = vsel %vm493, %v489, %v492
    %vm495 = vcmp.eq.f32.partialorder %v489, 0.0
    %v496 = vand.u32 %v489, 2147483648
    %v497 = vsel %vm495, %v496, %v494
    %v498 = vrsqrt.pop %v490
    %v499 = vmul.f32 %v490, %v498
    %vm500 = vcmp.eq.f32.partialorder %v490, inf
    %v501 = vsel %vm500, %v490, %v499
    %vm502 = vcmp.eq.f32.partialorder %v490, 0.0
    %v503 = vand.u32 %v490, 2147483648
    %v504 = vsel %vm502, %v503, %v501
    %vm505 = vcmp.gt.f32.partialorder %v497, 0.99999
    %vm506 = vcmp.gt.f32.partialorder %v504, 0.99999
    %v507 = vrcp.pop %v497
    %v508 = vrcp.pop %v504
    %v509 = vmul.f32 %v497, %v507
    %v510 = vmul.f32 %v504, %v508
    %v511 = vsub.f32 2.0, %v509
    %v512 = vsub.f32 2.0, %v510
    %v513 = vmul.f32 %v507, %v511
    %v514 = vmul.f32 %v508, %v512
    %v515 = vmul.f32 %v513, 0.99999
    %v516 = vmul.f32 %v514, 0.99999
    %v517 = vsel %vm505, %v515, 1.0
    %v518 = vsel %vm506, %v516, 1.0
    %v519 = vmul.f32 %v87, %v517
    %v520 = vmul.f32 %v88, %v518
    %v522 = vsel %vm96, %v519, 0
    %v525 = vsel %vm96, %v520, 0
    %527 = vmatprep.subr.mxu0 0.0
    %528 = vmatpush1.msra.mxu0 0.0
    %529 = vmatprep.subr.mxu0 0.0
    %530 = vmatpush1.msra.mxu0 0.0
    %531 = vmatprep.subr.mxu0 0.0
    %532 = vmatpush1.msra.mxu0 0.0
    %533 = vmatprep.subr.mxu0 0.0
    %534 = vmatpush1.msra.mxu0 0.0
    %535 = vmatprep.subr.mxu0 0.0
    %536 = vmatpush1.msra.mxu0 0.0
    %537 = vmatprep.subr.mxu0 0.0
    %538 = vmatpush1.msra.mxu0 0.0
    %539 = vmatprep.subr.mxu0 0.0
    %540 = vmatpush1.msra.mxu0 0.0
    %541 = vmatprep.subr.mxu0 0.0
    %542 = vmatpush1.msra.mxu0 0.0
    %543 = vmatprep.subr.mxu0 0.0
    %544 = vmatpush1.msra.mxu0 0.0
    %545 = vmatprep.subr.mxu0 0.0
    %546 = vmatpush1.msra.mxu0 0.0
    %547 = vmatprep.subr.mxu0 0.0
    %548 = vmatpush1.msra.mxu0 0.0
    %549 = vmatprep.subr.mxu0 0.0
    %550 = vmatpush1.msra.mxu0 0.0
    %551 = vmatprep.subr.mxu0 0.0
    %552 = vmatpush1.msra.mxu0 %v480
    %553 = vmatprep.subr.mxu0 0.0
    %554 = vmatpush1.msra.mxu0 %v479
    %555 = vmatprep.subr.mxu0 0.0
    %556 = vmatpush1.msra.mxu0 %v478
    %557 = vmatprep.subr.mxu0 0.0
    %558 = vmatpush1.msra.mxu0 %v477
    %559 = vmatprep.subr.mxu0 0.0
    %560 = vmatpush2.msra.mxu0 0.0
    %561 = vmatprep.subr.mxu0 0.0
    %562 = vmatpush2.msra.mxu0 0.0
    %563 = vmatprep.subr.mxu0 0.0
    %564 = vmatpush2.msra.mxu0 0.0
    %565 = vmatprep.subr.mxu0 0.0
    %566 = vmatpush2.msra.mxu0 0.0
    %567 = vmatprep.subr.mxu0 0.0
    %568 = vmatpush2.msra.mxu0 0.0
    %569 = vmatprep.subr.mxu0 0.0
    %570 = vmatpush2.msra.mxu0 0.0
    %571 = vmatprep.subr.mxu0 0.0
    %572 = vmatpush2.msra.mxu0 0.0
    %573 = vmatprep.subr.mxu0 0.0
    %574 = vmatpush2.msra.mxu0 0.0
    %575 = vmatprep.subr.mxu0 0.0
    %576 = vmatpush2.msra.mxu0 0.0
    %577 = vmatprep.subr.mxu0 0.0
    %578 = vmatpush2.msra.mxu0 0.0
    %579 = vmatprep.subr.mxu0 0.0
    %580 = vmatpush2.msra.mxu0 0.0
    %581 = vmatprep.subr.mxu0 0.0
    %582 = vmatpush2.msra.mxu0 0.0
    %583 = vmatprep.subr.mxu0 0.0
    %584 = vmatpush2.msra.mxu0 0.0
    %585 = vmatprep.subr.mxu0 0.0
    %586 = vmatpush2.msra.mxu0 0.0
    %587 = vmatprep.subr.mxu0 0.0
    %588 = vmatpush2.msra.mxu0 0.0
    %589 = vmatprep.subr.mxu0 0.0
    %590 = vmatpush2.msra.mxu0 0.0
    %591 = vmatprep.mubr.f32.mxu0 0.0
    %592 = vmatmul.mubr.f32.gmra.mxu0 %v522
    %v593 = vpop.f32.mrf.mxu0
    %v594 = vadd.f32 0.0, %v593
    %v595 = vpop.f32.mrf.mxu0
    %596 = vmatprep.mubr.f32.mxu0 0.0
    %597 = vmatmul.mubr.f32.gmra.mxu0 %v525
    %v598 = vpop.f32.mrf.mxu0
    %v599 = vadd.f32 0.0, %v598
    %v600 = vpop.f32.mrf.mxu0
    %601 = vdwg.mxu0
    %v602 = vmul.f32 %v594, %v594
    %v603 = vmul.f32 %v599, %v599
    %v604 = vsel %vm96, %v602, 0.0
    %605 = vadd.xlane.f32.xlu0 %v604
    %v606 = vpop.xlane.xlu0 %605
    %v607 = vsel %vm96, %v603, 0.0
    %608 = vadd.xlane.f32.xlu0 %v607
    %v609 = vpop.xlane.xlu0 %608
    %v610 = vmax.f32 %v606, 1e-15
    %v611 = vmax.f32 %v609, 1e-15
    %v612 = vrsqrt.pop %v610
    %v613 = vmul.f32 %v610, %v612
    %vm614 = vcmp.eq.f32.partialorder %v610, inf
    %v615 = vsel %vm614, %v610, %v613
    %vm616 = vcmp.eq.f32.partialorder %v610, 0.0
    %v617 = vand.u32 %v610, 2147483648
    %v618 = vsel %vm616, %v617, %v615
    %v619 = vrsqrt.pop %v611
    %v620 = vmul.f32 %v611, %v619
    %vm621 = vcmp.eq.f32.partialorder %v611, inf
    %v622 = vsel %vm621, %v611, %v620
    %vm623 = vcmp.eq.f32.partialorder %v611, 0.0
    %v624 = vand.u32 %v611, 2147483648
    %v625 = vsel %vm623, %v624, %v622
    %v626 = vmul.f32 %v519, %v519
    %v627 = vmul.f32 %v520, %v520
    %v628 = vsel %vm96, %v626, 0.0
    %629 = vadd.xlane.f32.xlu0 %v628
    %v630 = vpop.xlane.xlu0 %629
    %v631 = vsel %vm96, %v627, 0.0
    %632 = vadd.xlane.f32.xlu0 %v631
    %v633 = vpop.xlane.xlu0 %632
    %v634 = vmax.f32 %v630, 1e-15
    %v635 = vmax.f32 %v633, 1e-15
    %v636 = vrsqrt.pop %v634
    %v637 = vmul.f32 %v634, %v636
    %vm638 = vcmp.eq.f32.partialorder %v634, inf
    %v639 = vsel %vm638, %v634, %v637
    %vm640 = vcmp.eq.f32.partialorder %v634, 0.0
    %v641 = vand.u32 %v634, 2147483648
    %v642 = vsel %vm640, %v641, %v639
    %v643 = vrsqrt.pop %v635
    %v644 = vmul.f32 %v635, %v643
    %vm645 = vcmp.eq.f32.partialorder %v635, inf
    %v646 = vsel %vm645, %v635, %v644
    %vm647 = vcmp.eq.f32.partialorder %v635, 0.0
    %v648 = vand.u32 %v635, 2147483648
    %v649 = vsel %vm647, %v648, %v646
    %v650 = vrcp.pop %v642
    %v651 = vrcp.pop %v649
    %v652 = vmul.f32 %v642, %v650
    %v653 = vmul.f32 %v649, %v651
    %v654 = vsub.f32 2.0, %v652
    %v655 = vsub.f32 2.0, %v653
    %v656 = vmul.f32 %v650, %v654
    %v657 = vmul.f32 %v651, %v655
    %v658 = vmul.f32 %v618, %v656
    %v659 = vmul.f32 %v625, %v657
    %v660 = vmax.f32 %v642, -0.99999
    %v661 = vmax.f32 %v649, -0.99999
    %v662 = vmin.f32 %v660, 0.99999
    %v663 = vmin.f32 %v661, 0.99999
    %v664 = vadd.f32 %v662, 1.0
    %v665 = vlog2.pop %v664
    %v666 = vmul.f32 %v665, 0.6931472
    %v667 = vmul.f32 -0.5, %v662
    %v668 = vadd.f32 %v667, 1.0
    %v669 = vmul.f32 %v668, %v662
    %v670 = vand.u32 2147483647, %v662
    %vm671 = vcmp.lt.f32.partialorder %v670, 0.0004427343
    %v672 = vsel %vm671, %v669, %v666
    %v673 = vadd.f32 %v663, 1.0
    %v674 = vlog2.pop %v673
    %v675 = vmul.f32 %v674, 0.6931472
    %v676 = vmul.f32 -0.5, %v663
    %v677 = vadd.f32 %v676, 1.0
    %v678 = vmul.f32 %v677, %v663
    %v679 = vand.u32 2147483647, %v663
    %vm680 = vcmp.lt.f32.partialorder %v679, 0.0004427343
    %v681 = vsel %vm680, %v678, %v675
    %v682 = vsub.f32 0.0, %v662
    %v683 = vsub.f32 0.0, %v663
    %v684 = vadd.f32 %v682, 1.0
    %v685 = vlog2.pop %v684
    %v686 = vmul.f32 %v685, 0.6931472
    %v687 = vmul.f32 -0.5, %v682
    %v688 = vadd.f32 %v687, 1.0
    %v689 = vmul.f32 %v688, %v682
    %v690 = vand.u32 2147483647, %v682
    %vm691 = vcmp.lt.f32.partialorder %v690, 0.0004427343
    %v692 = vsel %vm691, %v689, %v686
    %v693 = vadd.f32 %v683, 1.0
    %v694 = vlog2.pop %v693
    %v695 = vmul.f32 %v694, 0.6931472
    %v696 = vmul.f32 -0.5, %v683
    %v697 = vadd.f32 %v696, 1.0
    %v698 = vmul.f32 %v697, %v683
    %v699 = vand.u32 2147483647, %v683
    %vm700 = vcmp.lt.f32.partialorder %v699, 0.0004427343
    %v701 = vsel %vm700, %v698, %v695
    %v702 = vsub.f32 %v672, %v692
    %v703 = vsub.f32 %v681, %v701
    %v704 = vmul.f32 %v702, 0.5
    %v705 = vmul.f32 %v703, 0.5
    %v706 = vmul.f32 %v658, %v704
    %v707 = vmul.f32 %v659, %v705
    %v708 = vtanh.pop %v706
    %v709 = vtanh.pop %v707
    %v710 = vmul.f32 %v708, %v594
    %v711 = vmul.f32 %v709, %v599
    %v712 = vrcp.pop %v618
    %v713 = vrcp.pop %v625
    %v714 = vmul.f32 %v618, %v712
    %v715 = vmul.f32 %v625, %v713
    %v716 = vsub.f32 2.0, %v714
    %v717 = vsub.f32 2.0, %v715
    %v718 = vmul.f32 %v712, %v716
    %v719 = vmul.f32 %v713, %v717
    %v720 = vmul.f32 %v710, %v718
    %v721 = vmul.f32 %v711, %v719
    %v722 = vmul.f32 %v720, %v720
    %v723 = vmul.f32 %v721, %v721
    %v724 = vsel %vm96, %v722, 0.0
    %725 = vadd.xlane.f32.xlu0 %v724
    %v726 = vpop.xlane.xlu0 %725
    %v727 = vsel %vm96, %v723, 0.0
    %728 = vadd.xlane.f32.xlu0 %v727
    %v729 = vpop.xlane.xlu0 %728
    %v730 = vmax.f32 %v726, 1e-15
    %v731 = vmax.f32 %v729, 1e-15
    %v732 = vrsqrt.pop %v730
    %v733 = vmul.f32 %v730, %v732
    %vm734 = vcmp.eq.f32.partialorder %v730, inf
    %v735 = vsel %vm734, %v730, %v733
    %vm736 = vcmp.eq.f32.partialorder %v730, 0.0
    %v737 = vand.u32 %v730, 2147483648
    %v738 = vsel %vm736, %v737, %v735
    %v739 = vrsqrt.pop %v731
    %v740 = vmul.f32 %v731, %v739
    %vm741 = vcmp.eq.f32.partialorder %v731, inf
    %v742 = vsel %vm741, %v731, %v740
    %vm743 = vcmp.eq.f32.partialorder %v731, 0.0
    %v744 = vand.u32 %v731, 2147483648
    %v745 = vsel %vm743, %v744, %v742
    %vm746 = vcmp.gt.f32.partialorder %v738, 0.99999
    %vm747 = vcmp.gt.f32.partialorder %v745, 0.99999
    %v748 = vrcp.pop %v738
    %v749 = vrcp.pop %v745
    %v750 = vmul.f32 %v738, %v748
    %v751 = vmul.f32 %v745, %v749
    %v752 = vsub.f32 2.0, %v750
    %v753 = vsub.f32 2.0, %v751
    %v754 = vmul.f32 %v748, %v752
    %v755 = vmul.f32 %v749, %v753
    %v756 = vmul.f32 %v754, 0.99999
    %v757 = vmul.f32 %v755, 0.99999
    %v758 = vsel %vm746, %v756, 1.0
    %v759 = vsel %vm747, %v757, 1.0
    %v760 = vmul.f32 %v720, %v758
    %v761 = vmul.f32 %v721, %v759
    %v762 = vld [vmem:[%s5] sm:$0x1]
    %v763 = vadd.f32 %v762, 1e-15
    %v765 = vlaneseq
    %v766 = vshrl.u32 %v765, 7
    %v767 = vsub.s32 0, %v766
    %v768 = vrot.slane %v763, %v767
    %v770 = vmul.f32 %v760, %v768
    %v771 = vmul.f32 %v761, %v768
    %v772 = vsel %vm96, %v770, 0.0
    %773 = vadd.xlane.f32.xlu0 %v772
    %v774 = vpop.xlane.xlu0 %773
    %v775 = vsel %vm96, %v771, 0.0
    %776 = vadd.xlane.f32.xlu0 %v775
    %v777 = vpop.xlane.xlu0 %776
    %v778 = vmul.f32 %v774, 2.0
    %v779 = vmul.f32 %v777, 2.0
    %v780 = vmul.f32 %v760, %v760
    %v781 = vmul.f32 %v761, %v761
    %v782 = vsel %vm96, %v780, 0.0
    %783 = vadd.xlane.f32.xlu0 %v782
    %v784 = vpop.xlane.xlu0 %783
    %v785 = vsel %vm96, %v781, 0.0
    %786 = vadd.xlane.f32.xlu0 %v785
    %v787 = vpop.xlane.xlu0 %786
    %v788 = vmul.f32 %v763, %v763
    %v789 = vsel %vm403, %v788, 0.0
    %790 = vadd.xlane.f32.xlu0 %v789
    %v791 = vpop.xlane.xlu0 %790
    %v792 = vadd.f32 %v778, 1.0
    %v793 = vadd.f32 %v779, 1.0
    %v794 = vlaneseq
    %v795 = vshrl.u32 %v794, 7
    %v796 = vsub.s32 0, %v795
    %v797 = vrot.slane %v791, %v796
    %v798 = vadd.f32 %v792, %v797
    %v799 = vadd.f32 %v793, %v797
    %v800 = vmul.f32 %v798, %v760
    %v801 = vmul.f32 %v799, %v761
    %v802 = vsub.f32 1.0, %v784
    %v803 = vsub.f32 1.0, %v787
    %v804 = vmul.f32 %v802, %v768
    %v805 = vmul.f32 %v803, %v768
    %v806 = vadd.f32 %v800, %v804
    %v807 = vadd.f32 %v801, %v805
    %v808 = vmul.f32 %v784, %v797
    %v809 = vmul.f32 %v787, %v797
    %v810 = vadd.f32 %v792, %v808
    %v811 = vadd.f32 %v793, %v809
    %v812 = vrcp.pop %v810
    %v813 = vrcp.pop %v811
    %v814 = vmul.f32 %v810, %v812
    %v815 = vmul.f32 %v811, %v813
    %v816 = vsub.f32 2.0, %v814
    %v817 = vsub.f32 2.0, %v815
    %v818 = vmul.f32 %v812, %v816
    %v819 = vmul.f32 %v813, %v817
    %v820 = vmul.f32 %v806, %v818
    %v821 = vmul.f32 %v807, %v819
    %v822 = vmul.f32 %v820, %v820
    %v823 = vmul.f32 %v821, %v821
    %v824 = vsel %vm96, %v822, 0.0
    %825 = vadd.xlane.f32.xlu0 %v824
    %v826 = vpop.xlane.xlu0 %825
    %v827 = vsel %vm96, %v823, 0.0
    %828 = vadd.xlane.f32.xlu0 %v827
    %v829 = vpop.xlane.xlu0 %828
    %v830 = vmax.f32 %v826, 1e-15
    %v831 = vmax.f32 %v829, 1e-15
    %v832 = vrsqrt.pop %v830
    %v833 = vmul.f32 %v830, %v832
    %vm834 = vcmp.eq.f32.partialorder %v830, inf
    %v835 = vsel %vm834, %v830, %v833
    %vm836 = vcmp.eq.f32.partialorder %v830, 0.0
    %v837 = vand.u32 %v830, 2147483648
    %v838 = vsel %vm836, %v837, %v835
    %v839 = vrsqrt.pop %v831
    %v840 = vmul.f32 %v831, %v839
    %vm841 = vcmp.eq.f32.partialorder %v831, inf
    %v842 = vsel %vm841, %v831, %v840
    %vm843 = vcmp.eq.f32.partialorder %v831, 0.0
    %v844 = vand.u32 %v831, 2147483648
    %v845 = vsel %vm843, %v844, %v842
    %vm846 = vcmp.gt.f32.partialorder %v838, 0.99999
    %vm847 = vcmp.gt.f32.partialorder %v845, 0.99999
    %v848 = vrcp.pop %v838
    %v849 = vrcp.pop %v845
    %v850 = vmul.f32 %v838, %v848
    %v851 = vmul.f32 %v845, %v849
    %v852 = vsub.f32 2.0, %v850
    %v853 = vsub.f32 2.0, %v851
    %v854 = vmul.f32 %v848, %v852
    %v855 = vmul.f32 %v849, %v853
    %v856 = vmul.f32 %v854, 0.99999
    %v857 = vmul.f32 %v855, 0.99999
    %v858 = vsel %vm846, %v856, 1.0
    %v859 = vsel %vm847, %v857, 1.0
    %v860 = vmul.f32 %v820, %v858
    %v861 = vmul.f32 %v821, %v859
    %v862 = vmul.f32 %v475, %v475
    %v863 = vmul.f32 %v476, %v476
    %v864 = vsel %vm96, %v862, 0.0
    %865 = vadd.xlane.f32.xlu0 %v864
    %v866 = vpop.xlane.xlu0 %865
    %v867 = vsel %vm96, %v863, 0.0
    %868 = vadd.xlane.f32.xlu0 %v867
    %v869 = vpop.xlane.xlu0 %868
    %v870 = vmul.f32 %v860, %v860
    %v871 = vmul.f32 %v861, %v861
    %v872 = vsel %vm96, %v870, 0.0
    %873 = vadd.xlane.f32.xlu0 %v872
    %v874 = vpop.xlane.xlu0 %873
    %v875 = vsel %vm96, %v871, 0.0
    %876 = vadd.xlane.f32.xlu0 %v875
    %v877 = vpop.xlane.xlu0 %876
    %v879 = vsel %vm96, %v475, 0
    %v882 = vsel %vm96, %v860, 0
    %884 = vmatprep.subr.mxu0 0.0
    %885 = vmatpush1.xpose.msra.mxu0 0.0
    %886 = vmatprep.subr.mxu0 0.0
    %887 = vmatpush1.xpose.msra.mxu0 0.0
    %888 = vmatprep.subr.mxu0 0.0
    %889 = vmatpush1.xpose.msra.mxu0 0.0
    %890 = vmatprep.subr.mxu0 0.0
    %891 = vmatpush1.xpose.msra.mxu0 0.0
    %892 = vmatprep.subr.mxu0 0.0
    %893 = vmatpush1.xpose.msra.mxu0 0.0
    %894 = vmatprep.subr.mxu0 0.0
    %895 = vmatpush1.xpose.msra.mxu0 0.0
    %896 = vmatprep.subr.mxu0 0.0
    %897 = vmatpush1.xpose.msra.mxu0 0.0
    %898 = vmatprep.subr.mxu0 0.0
    %899 = vmatpush1.xpose.msra.mxu0 0.0
    %900 = vmatprep.subr.mxu0 0.0
    %901 = vmatpush1.xpose.msra.mxu0 0.0
    %902 = vmatprep.subr.mxu0 0.0
    %903 = vmatpush1.xpose.msra.mxu0 0.0
    %904 = vmatprep.subr.mxu0 0.0
    %905 = vmatpush1.xpose.msra.mxu0 0.0
    %906 = vmatprep.subr.mxu0 0.0
    %907 = vmatpush1.xpose.msra.mxu0 0.0
    %908 = vmatprep.subr.mxu0 0.0
    %909 = vmatpush1.xpose.msra.mxu0 0.0
    %910 = vmatprep.subr.mxu0 0.0
    %911 = vmatpush1.xpose.msra.mxu0 0.0
    %912 = vmatprep.subr.mxu0 0.0
    %913 = vmatpush1.xpose.msra.mxu0 0.0
    %914 = vmatprep.subr.mxu0 0.0
    %915 = vmatpush1.xpose.msra.mxu0 %v882
    %916 = vmatprep.subr.mxu0 0.0
    %917 = vmatpush2.xpose.msra.mxu0 0.0
    %918 = vmatprep.subr.mxu0 0.0
    %919 = vmatpush2.xpose.msra.mxu0 0.0
    %920 = vmatprep.subr.mxu0 0.0
    %921 = vmatpush2.xpose.msra.mxu0 0.0
    %922 = vmatprep.subr.mxu0 0.0
    %923 = vmatpush2.xpose.msra.mxu0 0.0
    %924 = vmatprep.subr.mxu0 0.0
    %925 = vmatpush2.xpose.msra.mxu0 0.0
    %926 = vmatprep.subr.mxu0 0.0
    %927 = vmatpush2.xpose.msra.mxu0 0.0
    %928 = vmatprep.subr.mxu0 0.0
    %929 = vmatpush2.xpose.msra.mxu0 0.0
    %930 = vmatprep.subr.mxu0 0.0
    %931 = vmatpush2.xpose.msra.mxu0 0.0
    %932 = vmatprep.subr.mxu0 0.0
    %933 = vmatpush2.xpose.msra.mxu0 0.0
    %934 = vmatprep.subr.mxu0 0.0
    %935 = vmatpush2.xpose.msra.mxu0 0.0
    %936 = vmatprep.subr.mxu0 0.0
    %937 = vmatpush2.xpose.msra.mxu0 0.0
    %938 = vmatprep.subr.mxu0 0.0
    %939 = vmatpush2.xpose.msra.mxu0 0.0
    %940 = vmatprep.subr.mxu0 0.0
    %941 = vmatpush2.xpose.msra.mxu0 0.0
    %942 = vmatprep.subr.mxu0 0.0
    %943 = vmatpush2.xpose.msra.mxu0 0.0
    %944 = vmatprep.subr.mxu0 0.0
    %945 = vmatpush2.xpose.msra.mxu0 0.0
    %946 = vmatprep.subr.mxu0 0.0
    %947 = vmatpush2.xpose.msra.mxu0 0.0
    %948 = vmatprep.mubr.f32.mxu0 0.0
    %949 = vmatmul.mubr.f32.gmra.mxu0 %v879
    %v950 = vpop.f32.mrf.mxu0
    %v951 = vadd.f32 0.0, %v950
    %v952 = vpop.f32.mrf.mxu0
    %953 = vdwg.mxu0
    %v955 = vsel %vm96, %v476, 0
    %v958 = vsel %vm96, %v861, 0
    %960 = vmatprep.subr.mxu0 0.0
    %961 = vmatpush1.xpose.msra.mxu0 0.0
    %962 = vmatprep.subr.mxu0 0.0
    %963 = vmatpush1.xpose.msra.mxu0 0.0
    %964 = vmatprep.subr.mxu0 0.0
    %965 = vmatpush1.xpose.msra.mxu0 0.0
    %966 = vmatprep.subr.mxu0 0.0
    %967 = vmatpush1.xpose.msra.mxu0 0.0
    %968 = vmatprep.subr.mxu0 0.0
    %969 = vmatpush1.xpose.msra.mxu0 0.0
    %970 = vmatprep.subr.mxu0 0.0
    %971 = vmatpush1.xpose.msra.mxu0 0.0
    %972 = vmatprep.subr.mxu0 0.0
    %973 = vmatpush1.xpose.msra.mxu0 0.0
    %974 = vmatprep.subr.mxu0 0.0
    %975 = vmatpush1.xpose.msra.mxu0 0.0
    %976 = vmatprep.subr.mxu0 0.0
    %977 = vmatpush1.xpose.msra.mxu0 0.0
    %978 = vmatprep.subr.mxu0 0.0
    %979 = vmatpush1.xpose.msra.mxu0 0.0
    %980 = vmatprep.subr.mxu0 0.0
    %981 = vmatpush1.xpose.msra.mxu0 0.0
    %982 = vmatprep.subr.mxu0 0.0
    %983 = vmatpush1.xpose.msra.mxu0 0.0
    %984 = vmatprep.subr.mxu0 0.0
    %985 = vmatpush1.xpose.msra.mxu0 0.0
    %986 = vmatprep.subr.mxu0 0.0
    %987 = vmatpush1.xpose.msra.mxu0 0.0
    %988 = vmatprep.subr.mxu0 0.0
    %989 = vmatpush1.xpose.msra.mxu0 0.0
    %990 = vmatprep.subr.mxu0 0.0
    %991 = vmatpush1.xpose.msra.mxu0 %v958
    %992 = vmatprep.subr.mxu0 0.0
    %993 = vmatpush2.xpose.msra.mxu0 0.0
    %994 = vmatprep.subr.mxu0 0.0
    %995 = vmatpush2.xpose.msra.mxu0 0.0
    %996 = vmatprep.subr.mxu0 0.0
    %997 = vmatpush2.xpose.msra.mxu0 0.0
    %998 = vmatprep.subr.mxu0 0.0
    %999 = vmatpush2.xpose.msra.mxu0 0.0
    %1000 = vmatprep.subr.mxu0 0.0
    %1001 = vmatpush2.xpose.msra.mxu0 0.0
    %1002 = vmatprep.subr.mxu0 0.0
    %1003 = vmatpush2.xpose.msra.mxu0 0.0
    %1004 = vmatprep.subr.mxu0 0.0
    %1005 = vmatpush2.xpose.msra.mxu0 0.0
    %1006 = vmatprep.subr.mxu0 0.0
    %1007 = vmatpush2.xpose.msra.mxu0 0.0
    %1008 = vmatprep.subr.mxu0 0.0
    %1009 = vmatpush2.xpose.msra.mxu0 0.0
    %1010 = vmatprep.subr.mxu0 0.0
    %1011 = vmatpush2.xpose.msra.mxu0 0.0
    %1012 = vmatprep.subr.mxu0 0.0
    %1013 = vmatpush2.xpose.msra.mxu0 0.0
    %1014 = vmatprep.subr.mxu0 0.0
    %1015 = vmatpush2.xpose.msra.mxu0 0.0
    %1016 = vmatprep.subr.mxu0 0.0
    %1017 = vmatpush2.xpose.msra.mxu0 0.0
    %1018 = vmatprep.subr.mxu0 0.0
    %1019 = vmatpush2.xpose.msra.mxu0 0.0
    %1020 = vmatprep.subr.mxu0 0.0
    %1021 = vmatpush2.xpose.msra.mxu0 0.0
    %1022 = vmatprep.subr.mxu0 0.0
    %1023 = vmatpush2.xpose.msra.mxu0 0.0
    %1024 = vmatprep.mubr.f32.mxu0 0.0
    %1025 = vmatmul.mubr.f32.gmra.mxu0 %v955
    %v1026 = vpop.f32.mrf.mxu0
    %v1027 = vadd.f32 0.0, %v1026
    %v1028 = vpop.f32.mrf.mxu0
    %1029 = vdwg.mxu0
    %v1030 = vmul.f32 %v951, 2.0
    %v1031 = vmul.f32 %v1027, 2.0
    %v1032 = vsub.f32 1.0, %v1030
    %v1033 = vsub.f32 1.0, %v1031
    %v1036 = vlaneseq
    %v1037 = vand.u32 %v1036, 127
    %v1038 = vlaneseq
    %v1039 = vshrl.u32 %v1038, 7
    %v1040 = vsub.s32 %v1037, %v1039
    %v1041 = vrot.slane %v874, %v1040
    %v1042 = vlaneseq
    %v1043 = vshrl.u32 %v1042, 7
    %v1044 = vsub.s32 %v1037, %v1043
    %v1045 = vrot.slane %v877, %v1044
    %vm1046 = vcmask 1042434
    %v1047 = vsel %vm1046, %v1041, %v1041
    %vm1048 = vcmask 1043459
    %v1049 = vsel %vm1048, %v1041, %v1047
    %vm1050 = vcmask 1044484
    %v1051 = vsel %vm1050, %v1041, %v1049
    %vm1052 = vcmask 1045509
    %v1053 = vsel %vm1052, %v1041, %v1051
    %vm1054 = vcmask 1046534
    %v1055 = vsel %vm1054, %v1041, %v1053
    %vm1056 = vcmask 1047559
    %v1057 = vsel %vm1056, %v1041, %v1055
    %v1058 = vsel %vm1046, %v1045, %v1045
    %v1059 = vsel %vm1048, %v1045, %v1058
    %v1060 = vsel %vm1050, %v1045, %v1059
    %v1061 = vsel %vm1052, %v1045, %v1060
    %v1062 = vsel %vm1054, %v1045, %v1061
    %v1063 = vsel %vm1056, %v1045, %v1062
    %v1066 = vadd.f32 %v1032, %v1057
    %v1067 = vadd.f32 %v1033, %v1063
    %v1068 = vsub.f32 1.0, %v866
    %v1069 = vsub.f32 1.0, %v869
    %v1070 = vmul.f32 %v866, %v1057
    %v1071 = vmul.f32 %v869, %v1063
    %v1072 = vadd.f32 %v1032, %v1070
    %v1073 = vadd.f32 %v1033, %v1071
    %v1074 = vmul.f32 %v1066, %v1066
    %v1075 = vmul.f32 %v1067, %v1067
    %v1076 = vmul.f32 %v1074, %v866
    %v1077 = vmul.f32 %v1075, %v869
    %v1078 = vmul.f32 %v1068, %v1068
    %v1079 = vmul.f32 %v1069, %v1069
    %v1080 = vmul.f32 %v1078, %v1057
    %v1081 = vmul.f32 %v1079, %v1063
    %v1082 = vadd.f32 %v1076, %v1080
    %v1083 = vadd.f32 %v1077, %v1081
    %v1084 = vmul.f32 %v1066, 2.0
    %v1085 = vmul.f32 %v1067, 2.0
    %v1086 = vmul.f32 %v1084, %v1068
    %v1087 = vmul.f32 %v1085, %v1069
    %v1088 = vmul.f32 %v1086, %v951
    %v1089 = vmul.f32 %v1087, %v1027
    %v1090 = vsub.f32 %v1082, %v1088
    %v1091 = vsub.f32 %v1083, %v1089
    %v1092 = vmul.f32 %v1072, %v1072
    %v1093 = vmul.f32 %v1073, %v1073
    %v1094 = vrcp.pop %v1092
    %v1095 = vmul.f32 %v1090, %v1094
    %v1096 = vrcp.pop %v1093
    %v1097 = vmul.f32 %v1091, %v1096
    %v1098 = vmax.f32 %v1095, 1e-15
    %v1099 = vmax.f32 %v1097, 1e-15
    %v1100 = vrsqrt.pop %v1098
    %v1101 = vmul.f32 %v1098, %v1100
    %vm1102 = vcmp.eq.f32.partialorder %v1098, inf
    %v1103 = vsel %vm1102, %v1098, %v1101
    %vm1104 = vcmp.eq.f32.partialorder %v1098, 0.0
    %v1105 = vand.u32 %v1098, 2147483648
    %v1106 = vsel %vm1104, %v1105, %v1103
    %v1107 = vrsqrt.pop %v1099
    %v1108 = vmul.f32 %v1099, %v1107
    %vm1109 = vcmp.eq.f32.partialorder %v1099, inf
    %v1110 = vsel %vm1109, %v1099, %v1108
    %vm1111 = vcmp.eq.f32.partialorder %v1099, 0.0
    %v1112 = vand.u32 %v1099, 2147483648
    %v1113 = vsel %vm1111, %v1112, %v1110
    %v1114 = vmax.f32 %v1106, -0.99999
    %v1115 = vmax.f32 %v1113, -0.99999
    %v1116 = vmin.f32 %v1114, 0.99999
    %v1117 = vmin.f32 %v1115, 0.99999
    %v1118 = vadd.f32 %v1116, 1.0
    %v1119 = vlog2.pop %v1118
    %v1120 = vmul.f32 %v1119, 0.6931472
    %v1121 = vmul.f32 -0.5, %v1116
    %v1122 = vadd.f32 %v1121, 1.0
    %v1123 = vmul.f32 %v1122, %v1116
    %v1124 = vand.u32 2147483647, %v1116
    %vm1125 = vcmp.lt.f32.partialorder %v1124, 0.0004427343
    %v1126 = vsel %vm1125, %v1123, %v1120
    %v1127 = vadd.f32 %v1117, 1.0
    %v1128 = vlog2.pop %v1127
    %v1129 = vmul.f32 %v1128, 0.6931472
    %v1130 = vmul.f32 -0.5, %v1117
    %v1131 = vadd.f32 %v1130, 1.0
    %v1132 = vmul.f32 %v1131, %v1117
    %v1133 = vand.u32 2147483647, %v1117
    %vm1134 = vcmp.lt.f32.partialorder %v1133, 0.0004427343
    %v1135 = vsel %vm1134, %v1132, %v1129
    %v1136 = vsub.f32 0.0, %v1116
    %v1137 = vsub.f32 0.0, %v1117
    %v1138 = vadd.f32 %v1136, 1.0
    %v1139 = vlog2.pop %v1138
    %v1140 = vmul.f32 %v1139, 0.6931472
    %v1141 = vmul.f32 -0.5, %v1136
    %v1142 = vadd.f32 %v1141, 1.0
    %v1143 = vmul.f32 %v1142, %v1136
    %v1144 = vand.u32 2147483647, %v1136
    %vm1145 = vcmp.lt.f32.partialorder %v1144, 0.0004427343
    %v1146 = vsel %vm1145, %v1143, %v1140
    %v1147 = vadd.f32 %v1137, 1.0
    %v1148 = vlog2.pop %v1147
    %v1149 = vmul.f32 %v1148, 0.6931472
    %v1150 = vmul.f32 -0.5, %v1137
    %v1151 = vadd.f32 %v1150, 1.0
    %v1152 = vmul.f32 %v1151, %v1137
    %v1153 = vand.u32 2147483647, %v1137
    %vm1154 = vcmp.lt.f32.partialorder %v1153, 0.0004427343
    %v1155 = vsel %vm1154, %v1152, %v1149
    %v1156 = vsub.f32 %v1126, %v1146
    %v1157 = vsub.f32 %v1135, %v1155
    %v1158 = vmul.f32 %v1156, 0.5
    %v1159 = vmul.f32 %v1157, 0.5
    %v1160 = vmul.f32 %v1158, 2.0
    %v1161 = vmul.f32 %v1159, 2.0
    %v1162 = vsub.f32 0.0, %v1160
    %v1163 = vsub.f32 0.0, %v1161
    %v1164 = vstv %s89
    %v1165 = vmul.f32 %v1162, %v1164
    %v1166 = vmul.f32 %v1163, %v1164
    %vm1167 = vcmask 64512
    %v1168 = vsel %vm1167, %v1165, -inf
    %1169 = vmax.xlane.f32.xlu0 %v1168
    %v1170 = vpop.xlane.xlu0 %1169
    %v1171 = vsel %vm1167, %v1166, -inf
    %1172 = vmax.xlane.f32.xlu0 %v1171
    %v1173 = vpop.xlane.xlu0 %1172
    %v1174 = vsub.f32 %v1165, %v1170
    %v1175 = vsub.f32 %v1166, %v1173
    %v1176 = vmul.f32 %v1174, 1.442695
    %v1177 = vpow.pop %v1176
    %v1178 = vmul.f32 %v1175, 1.442695
    %v1179 = vpow.pop %v1178
    %v1180 = vsel %vm1167, %v1177, 0.0
    %1181 = vadd.xlane.f32.xlu0 %v1180
    %v1182 = vpop.xlane.xlu0 %1181
    %v1183 = vsel %vm1167, %v1179, 0.0
    %1184 = vadd.xlane.f32.xlu0 %v1183
    %v1185 = vpop.xlane.xlu0 %1184
    %v1186 = vrcp.pop %v1182
    %v1187 = vrcp.pop %v1185
    %v1188 = vmul.f32 %v1182, %v1186
    %v1189 = vmul.f32 %v1185, %v1187
    %v1190 = vsub.f32 2.0, %v1188
    %v1191 = vsub.f32 2.0, %v1189
    %v1192 = vmul.f32 %v1186, %v1190
    %v1193 = vmul.f32 %v1187, %v1191
    %v1194 = vmul.f32 %v1177, %v1192
    %v1195 = vmul.f32 %v1179, %v1193
    %v1196 = vsub.f32 1.0, %v485
    %v1197 = vsub.f32 1.0, %v488
    %v1198 = vmax.f32 %v1196, 1e-15
    %v1199 = vmax.f32 %v1197, 1e-15
    %v1200 = vrcp.pop %v1198
    %v1201 = vrcp.pop %v1199
    %v1202 = vmul.f32 %v1198, %v1200
    %v1203 = vmul.f32 %v1199, %v1201
    %v1204 = vsub.f32 2.0, %v1202
    %v1205 = vsub.f32 2.0, %v1203
    %v1206 = vmul.f32 %v1200, %v1204
    %v1207 = vmul.f32 %v1201, %v1205
    %v1208 = vmul.f32 %v1206, 2.0
    %v1209 = vmul.f32 %v1207, 2.0
    %v1212 = vlaneseq
    %v1213 = vshrl.u32 %v1212, 7
    %v1214 = vsub.s32 %v1037, %v1213
    %v1215 = vrot.slane %v1208, %v1214
    %v1216 = vlaneseq
    %v1217 = vshrl.u32 %v1216, 7
    %v1218 = vsub.s32 %v1037, %v1217
    %v1219 = vrot.slane %v1209, %v1218
    %v1220 = vsel %vm1046, %v1215, %v1215
    %v1221 = vsel %vm1048, %v1215, %v1220
    %v1222 = vsel %vm1050, %v1215, %v1221
    %v1223 = vsel %vm1052, %v1215, %v1222
    %v1224 = vsel %vm1054, %v1215, %v1223
    %v1225 = vsel %vm1056, %v1215, %v1224
    %v1226 = vsel %vm1046, %v1219, %v1219
    %v1227 = vsel %vm1048, %v1219, %v1226
    %v1228 = vsel %vm1050, %v1219, %v1227
    %v1229 = vsel %vm1052, %v1219, %v1228
    %v1230 = vsel %vm1054, %v1219, %v1229
    %v1231 = vsel %vm1056, %v1219, %v1230
    %v1234 = vmul.f32 %v1194, %v1225
    %v1235 = vmul.f32 %v1195, %v1231
    %v1237 = vsel %vm1167, %v1234, 0
    %1239 = vmatprep.subr.mxu0 0.0
    %1240 = vmatpush1.msra.mxu0 0.0
    %1241 = vmatprep.subr.mxu0 0.0
    %1242 = vmatpush1.msra.mxu0 0.0
    %1243 = vmatprep.subr.mxu0 0.0
    %1244 = vmatpush1.msra.mxu0 0.0
    %1245 = vmatprep.subr.mxu0 0.0
    %1246 = vmatpush1.msra.mxu0 0.0
    %1247 = vmatprep.subr.mxu0 0.0
    %1248 = vmatpush1.msra.mxu0 0.0
    %1249 = vmatprep.subr.mxu0 0.0
    %1250 = vmatpush1.msra.mxu0 0.0
    %1251 = vmatprep.subr.mxu0 0.0
    %1252 = vmatpush1.msra.mxu0 0.0
    %1253 = vmatprep.subr.mxu0 0.0
    %1254 = vmatpush1.msra.mxu0 0.0
    %1255 = vmatprep.subr.mxu0 0.0
    %1256 = vmatpush1.msra.mxu0 0.0
    %1257 = vmatprep.subr.mxu0 0.0
    %1258 = vmatpush1.msra.mxu0 0.0
    %1259 = vmatprep.subr.mxu0 0.0
    %1260 = vmatpush1.msra.mxu0 0.0
    %1261 = vmatprep.subr.mxu0 0.0
    %1262 = vmatpush1.msra.mxu0 0.0
    %1263 = vmatprep.subr.mxu0 0.0
    %1264 = vmatpush1.msra.mxu0 0.0
    %1265 = vmatprep.subr.mxu0 0.0
    %1266 = vmatpush1.msra.mxu0 0.0
    %1267 = vmatprep.subr.mxu0 0.0
    %1268 = vmatpush1.msra.mxu0 0.0
    %1269 = vmatprep.subr.mxu0 0.0
    %1270 = vmatpush1.msra.mxu0 %v87
    %1271 = vmatprep.subr.mxu0 0.0
    %1272 = vmatpush2.msra.mxu0 0.0
    %1273 = vmatprep.subr.mxu0 0.0
    %1274 = vmatpush2.msra.mxu0 0.0
    %1275 = vmatprep.subr.mxu0 0.0
    %1276 = vmatpush2.msra.mxu0 0.0
    %1277 = vmatprep.subr.mxu0 0.0
    %1278 = vmatpush2.msra.mxu0 0.0
    %1279 = vmatprep.subr.mxu0 0.0
    %1280 = vmatpush2.msra.mxu0 0.0
    %1281 = vmatprep.subr.mxu0 0.0
    %1282 = vmatpush2.msra.mxu0 0.0
    %1283 = vmatprep.subr.mxu0 0.0
    %1284 = vmatpush2.msra.mxu0 0.0
    %1285 = vmatprep.subr.mxu0 0.0
    %1286 = vmatpush2.msra.mxu0 0.0
    %1287 = vmatprep.subr.mxu0 0.0
    %1288 = vmatpush2.msra.mxu0 0.0
    %1289 = vmatprep.subr.mxu0 0.0
    %1290 = vmatpush2.msra.mxu0 0.0
    %1291 = vmatprep.subr.mxu0 0.0
    %1292 = vmatpush2.msra.mxu0 0.0
    %1293 = vmatprep.subr.mxu0 0.0
    %1294 = vmatpush2.msra.mxu0 0.0
    %1295 = vmatprep.subr.mxu0 0.0
    %1296 = vmatpush2.msra.mxu0 0.0
    %1297 = vmatprep.subr.mxu0 0.0
    %1298 = vmatpush2.msra.mxu0 0.0
    %1299 = vmatprep.subr.mxu0 0.0
    %1300 = vmatpush2.msra.mxu0 0.0
    %1301 = vmatprep.subr.mxu0 0.0
    %1302 = vmatpush2.msra.mxu0 0.0
    %1303 = vmatprep.mubr.f32.mxu0 0.0
    %1304 = vmatmul.mubr.f32.gmra.mxu0 %v1237
    %v1305 = vpop.f32.mrf.mxu0
    %v1306 = vadd.f32 0.0, %v1305
    %v1307 = vpop.f32.mrf.mxu0
    %1308 = vdwg.mxu0
    %v1310 = vsel %vm1167, %v1235, 0
    %1312 = vmatprep.subr.mxu0 0.0
    %1313 = vmatpush1.msra.mxu0 0.0
    %1314 = vmatprep.subr.mxu0 0.0
    %1315 = vmatpush1.msra.mxu0 0.0
    %1316 = vmatprep.subr.mxu0 0.0
    %1317 = vmatpush1.msra.mxu0 0.0
    %1318 = vmatprep.subr.mxu0 0.0
    %1319 = vmatpush1.msra.mxu0 0.0
    %1320 = vmatprep.subr.mxu0 0.0
    %1321 = vmatpush1.msra.mxu0 0.0
    %1322 = vmatprep.subr.mxu0 0.0
    %1323 = vmatpush1.msra.mxu0 0.0
    %1324 = vmatprep.subr.mxu0 0.0
    %1325 = vmatpush1.msra.mxu0 0.0
    %1326 = vmatprep.subr.mxu0 0.0
    %1327 = vmatpush1.msra.mxu0 0.0
    %1328 = vmatprep.subr.mxu0 0.0
    %1329 = vmatpush1.msra.mxu0 0.0
    %1330 = vmatprep.subr.mxu0 0.0
    %1331 = vmatpush1.msra.mxu0 0.0
    %1332 = vmatprep.subr.mxu0 0.0
    %1333 = vmatpush1.msra.mxu0 0.0
    %1334 = vmatprep.subr.mxu0 0.0
    %1335 = vmatpush1.msra.mxu0 0.0
    %1336 = vmatprep.subr.mxu0 0.0
    %1337 = vmatpush1.msra.mxu0 0.0
    %1338 = vmatprep.subr.mxu0 0.0
    %1339 = vmatpush1.msra.mxu0 0.0
    %1340 = vmatprep.subr.mxu0 0.0
    %1341 = vmatpush1.msra.mxu0 0.0
    %1342 = vmatprep.subr.mxu0 0.0
    %1343 = vmatpush1.msra.mxu0 %v88
    %1344 = vmatprep.subr.mxu0 0.0
    %1345 = vmatpush2.msra.mxu0 0.0
    %1346 = vmatprep.subr.mxu0 0.0
    %1347 = vmatpush2.msra.mxu0 0.0
    %1348 = vmatprep.subr.mxu0 0.0
    %1349 = vmatpush2.msra.mxu0 0.0
    %1350 = vmatprep.subr.mxu0 0.0
    %1351 = vmatpush2.msra.mxu0 0.0
    %1352 = vmatprep.subr.mxu0 0.0
    %1353 = vmatpush2.msra.mxu0 0.0
    %1354 = vmatprep.subr.mxu0 0.0
    %1355 = vmatpush2.msra.mxu0 0.0
    %1356 = vmatprep.subr.mxu0 0.0
    %1357 = vmatpush2.msra.mxu0 0.0
    %1358 = vmatprep.subr.mxu0 0.0
    %1359 = vmatpush2.msra.mxu0 0.0
    %1360 = vmatprep.subr.mxu0 0.0
    %1361 = vmatpush2.msra.mxu0 0.0
    %1362 = vmatprep.subr.mxu0 0.0
    %1363 = vmatpush2.msra.mxu0 0.0
    %1364 = vmatprep.subr.mxu0 0.0
    %1365 = vmatpush2.msra.mxu0 0.0
    %1366 = vmatprep.subr.mxu0 0.0
    %1367 = vmatpush2.msra.mxu0 0.0
    %1368 = vmatprep.subr.mxu0 0.0
    %1369 = vmatpush2.msra.mxu0 0.0
    %1370 = vmatprep.subr.mxu0 0.0
    %1371 = vmatpush2.msra.mxu0 0.0
    %1372 = vmatprep.subr.mxu0 0.0
    %1373 = vmatpush2.msra.mxu0 0.0
    %1374 = vmatprep.subr.mxu0 0.0
    %1375 = vmatpush2.msra.mxu0 0.0
    %1376 = vmatprep.mubr.f32.mxu0 0.0
    %1377 = vmatmul.mubr.f32.gmra.mxu0 %v1310
    %v1378 = vpop.f32.mrf.mxu0
    %v1379 = vadd.f32 0.0, %v1378
    %v1380 = vpop.f32.mrf.mxu0
    %1381 = vdwg.mxu0
    %v1382 = vsub.f32 %v1208, 1.0
    %v1383 = vsub.f32 %v1209, 1.0
    %v1386 = vlaneseq
    %v1387 = vshrl.u32 %v1386, 7
    %v1388 = vsub.s32 %v1037, %v1387
    %v1389 = vrot.slane %v1382, %v1388
    %v1390 = vlaneseq
    %v1391 = vshrl.u32 %v1390, 7
    %v1392 = vsub.s32 %v1037, %v1391
    %v1393 = vrot.slane %v1383, %v1392
    %v1394 = vsel %vm1046, %v1389, %v1389
    %v1395 = vsel %vm1048, %v1389, %v1394
    %v1396 = vsel %vm1050, %v1389, %v1395
    %v1397 = vsel %vm1052, %v1389, %v1396
    %v1398 = vsel %vm1054, %v1389, %v1397
    %v1399 = vsel %vm1056, %v1389, %v1398
    %v1400 = vsel %vm1046, %v1393, %v1393
    %v1401 = vsel %vm1048, %v1393, %v1400
    %v1402 = vsel %vm1050, %v1393, %v1401
    %v1403 = vsel %vm1052, %v1393, %v1402
    %v1404 = vsel %vm1054, %v1393, %v1403
    %v1405 = vsel %vm1056, %v1393, %v1404
    %v1408 = vmul.f32 %v1194, %v1399
    %v1409 = vmul.f32 %v1195, %v1405
    %v1410 = vsel %vm1167, %v1408, 0.0
    %1411 = vadd.xlane.f32.xlu0 %v1410
    %v1412 = vpop.xlane.xlu0 %1411
    %v1413 = vsel %vm1167, %v1409, 0.0
    %1414 = vadd.xlane.f32.xlu0 %v1413
    %v1415 = vpop.xlane.xlu0 %1414
    %v1416 = vand.u32 2147483647, %v1412
    %v1417 = vand.u32 2147483647, %v1415
    %vm1418 = vcmp.lt.f32.partialorder %v1416, 1e-10
    %vm1419 = vcmp.lt.f32.partialorder %v1417, 1e-10
    %vm1420 = vcmp.ge.f32.partialorder %v1412, 0.0
    %vm1421 = vcmp.ge.f32.partialorder %v1415, 0.0
    %v1422 = vsel %vm1420, 1e-10, -1e-10
    %v1423 = vsel %vm1421, 1e-10, -1e-10
    %v1424 = vsel %vm1418, %v1422, %v1412
    %v1425 = vsel %vm1419, %v1423, %v1415
    %v1426 = vrcp.pop %v1424
    %v1427 = vrcp.pop %v1425
    %v1428 = vmul.f32 %v1424, %v1426
    %v1429 = vmul.f32 %v1425, %v1427
    %v1430 = vsub.f32 2.0, %v1428
    %v1431 = vsub.f32 2.0, %v1429
    %v1432 = vmul.f32 %v1426, %v1430
    %v1433 = vmul.f32 %v1427, %v1431
    %v1434 = vmul.f32 %v1306, %v1432
    %v1435 = vmul.f32 %v1379, %v1433
    %v1436 = vmul.f32 %v1434, %v1434
    %v1437 = vmul.f32 %v1435, %v1435
    %v1438 = vsel %vm96, %v1436, 0.0
    %1439 = vadd.xlane.f32.xlu0 %v1438
    %v1440 = vpop.xlane.xlu0 %1439
    %v1441 = vsel %vm96, %v1437, 0.0
    %1442 = vadd.xlane.f32.xlu0 %v1441
    %v1443 = vpop.xlane.xlu0 %1442
    %v1444 = vmax.f32 %v1440, 1e-15
    %v1445 = vmax.f32 %v1443, 1e-15
    %v1446 = vrsqrt.pop %v1444
    %v1447 = vmul.f32 %v1444, %v1446
    %vm1448 = vcmp.eq.f32.partialorder %v1444, inf
    %v1449 = vsel %vm1448, %v1444, %v1447
    %vm1450 = vcmp.eq.f32.partialorder %v1444, 0.0
    %v1451 = vand.u32 %v1444, 2147483648
    %v1452 = vsel %vm1450, %v1451, %v1449
    %v1453 = vrsqrt.pop %v1445
    %v1454 = vmul.f32 %v1445, %v1453
    %vm1455 = vcmp.eq.f32.partialorder %v1445, inf
    %v1456 = vsel %vm1455, %v1445, %v1454
    %vm1457 = vcmp.eq.f32.partialorder %v1445, 0.0
    %v1458 = vand.u32 %v1445, 2147483648
    %v1459 = vsel %vm1457, %v1458, %v1456
    %v1460 = vmax.f32 %v1452, -0.99999
    %v1461 = vmax.f32 %v1459, -0.99999
    %v1462 = vmin.f32 %v1460, 0.99999
    %v1463 = vmin.f32 %v1461, 0.99999
    %v1464 = vadd.f32 %v1462, 1.0
    %v1465 = vlog2.pop %v1464
    %v1466 = vmul.f32 %v1465, 0.6931472
    %v1467 = vmul.f32 -0.5, %v1462
    %v1468 = vadd.f32 %v1467, 1.0
    %v1469 = vmul.f32 %v1468, %v1462
    %v1470 = vand.u32 2147483647, %v1462
    %vm1471 = vcmp.lt.f32.partialorder %v1470, 0.0004427343
    %v1472 = vsel %vm1471, %v1469, %v1466
    %v1473 = vadd.f32 %v1463, 1.0
    %v1474 = vlog2.pop %v1473
    %v1475 = vmul.f32 %v1474, 0.6931472
    %v1476 = vmul.f32 -0.5, %v1463
    %v1477 = vadd.f32 %v1476, 1.0
    %v1478 = vmul.f32 %v1477, %v1463
    %v1479 = vand.u32 2147483647, %v1463
    %vm1480 = vcmp.lt.f32.partialorder %v1479, 0.0004427343
    %v1481 = vsel %vm1480, %v1478, %v1475
    %v1482 = vsub.f32 0.0, %v1462
    %v1483 = vsub.f32 0.0, %v1463
    %v1484 = vadd.f32 %v1482, 1.0
    %v1485 = vlog2.pop %v1484
    %v1486 = vmul.f32 %v1485, 0.6931472
    %v1487 = vmul.f32 -0.5, %v1482
    %v1488 = vadd.f32 %v1487, 1.0
    %v1489 = vmul.f32 %v1488, %v1482
    %v1490 = vand.u32 2147483647, %v1482
    %vm1491 = vcmp.lt.f32.partialorder %v1490, 0.0004427343
    %v1492 = vsel %vm1491, %v1489, %v1486
    %v1493 = vadd.f32 %v1483, 1.0
    %v1494 = vlog2.pop %v1493
    %v1495 = vmul.f32 %v1494, 0.6931472
    %v1496 = vmul.f32 -0.5, %v1483
    %v1497 = vadd.f32 %v1496, 1.0
    %v1498 = vmul.f32 %v1497, %v1483
    %v1499 = vand.u32 2147483647, %v1483
    %vm1500 = vcmp.lt.f32.partialorder %v1499, 0.0004427343
    %v1501 = vsel %vm1500, %v1498, %v1495
    %v1502 = vsub.f32 %v1472, %v1492
    %v1503 = vsub.f32 %v1481, %v1501
    %v1504 = vmul.f32 %v1502, 0.5
    %v1505 = vmul.f32 %v1503, 0.5
    %v1506 = vmul.f32 %v1504, 0.5
    %v1507 = vmul.f32 %v1505, 0.5
    %v1508 = vtanh.pop %v1506
    %v1509 = vtanh.pop %v1507
    %v1510 = vmul.f32 %v1508, %v1434
    %v1511 = vmul.f32 %v1509, %v1435
    %v1512 = vrcp.pop %v1452
    %v1513 = vrcp.pop %v1459
    %v1514 = vmul.f32 %v1452, %v1512
    %v1515 = vmul.f32 %v1459, %v1513
    %v1516 = vsub.f32 2.0, %v1514
    %v1517 = vsub.f32 2.0, %v1515
    %v1518 = vmul.f32 %v1512, %v1516
    %v1519 = vmul.f32 %v1513, %v1517
    %v1520 = vmul.f32 %v1510, %v1518
    %v1521 = vmul.f32 %v1511, %v1519
    %v1522 = vand.u32 2147483647, %v1194
    %v1523 = vand.u32 2147483647, %v1195
    %v1524 = vsel %vm1167, %v1522, 0.0
    %1525 = vadd.xlane.f32.xlu0 %v1524
    %v1526 = vpop.xlane.xlu0 %1525
    %v1527 = vsel %vm1167, %v1523, 0.0
    %1528 = vadd.xlane.f32.xlu0 %v1527
    %v1529 = vpop.xlane.xlu0 %1528
    %v1530 = vmul.f32 %v1520, %v1520
    %v1531 = vmul.f32 %v1521, %v1521
    %v1532 = vsel %vm96, %v1530, 0.0
    %1533 = vadd.xlane.f32.xlu0 %v1532
    %v1534 = vpop.xlane.xlu0 %1533
    %v1535 = vsel %vm96, %v1531, 0.0
    %1536 = vadd.xlane.f32.xlu0 %v1535
    %v1537 = vpop.xlane.xlu0 %1536
    %v1538 = vmax.f32 %v1534, 1e-15
    %v1539 = vmax.f32 %v1537, 1e-15
    %v1540 = vrsqrt.pop %v1538
    %v1541 = vmul.f32 %v1538, %v1540
    %vm1542 = vcmp.eq.f32.partialorder %v1538, inf
    %v1543 = vsel %vm1542, %v1538, %v1541
    %vm1544 = vcmp.eq.f32.partialorder %v1538, 0.0
    %v1545 = vand.u32 %v1538, 2147483648
    %v1546 = vsel %vm1544, %v1545, %v1543
    %v1547 = vrsqrt.pop %v1539
    %v1548 = vmul.f32 %v1539, %v1547
    %vm1549 = vcmp.eq.f32.partialorder %v1539, inf
    %v1550 = vsel %vm1549, %v1539, %v1548
    %vm1551 = vcmp.eq.f32.partialorder %v1539, 0.0
    %v1552 = vand.u32 %v1539, 2147483648
    %v1553 = vsel %vm1551, %v1552, %v1550
    %v1554 = vmax.f32 %v1546, -0.99999
    %v1555 = vmax.f32 %v1553, -0.99999
    %v1556 = vmin.f32 %v1554, 0.99999
    %v1557 = vmin.f32 %v1555, 0.99999
    %v1558 = vadd.f32 %v1556, 1.0
    %v1559 = vlog2.pop %v1558
    %v1560 = vmul.f32 %v1559, 0.6931472
    %v1561 = vmul.f32 -0.5, %v1556
    %v1562 = vadd.f32 %v1561, 1.0
    %v1563 = vmul.f32 %v1562, %v1556
    %v1564 = vand.u32 2147483647, %v1556
    %vm1565 = vcmp.lt.f32.partialorder %v1564, 0.0004427343
    %v1566 = vsel %vm1565, %v1563, %v1560
    %v1567 = vadd.f32 %v1557, 1.0
    %v1568 = vlog2.pop %v1567
    %v1569 = vmul.f32 %v1568, 0.6931472
    %v1570 = vmul.f32 -0.5, %v1557
    %v1571 = vadd.f32 %v1570, 1.0
    %v1572 = vmul.f32 %v1571, %v1557
    %v1573 = vand.u32 2147483647, %v1557
    %vm1574 = vcmp.lt.f32.partialorder %v1573, 0.0004427343
    %v1575 = vsel %vm1574, %v1572, %v1569
    %v1576 = vsub.f32 0.0, %v1556
    %v1577 = vsub.f32 0.0, %v1557
    %v1578 = vadd.f32 %v1576, 1.0
    %v1579 = vlog2.pop %v1578
    %v1580 = vmul.f32 %v1579, 0.6931472
    %v1581 = vmul.f32 -0.5, %v1576
    %v1582 = vadd.f32 %v1581, 1.0
    %v1583 = vmul.f32 %v1582, %v1576
    %v1584 = vand.u32 2147483647, %v1576
    %vm1585 = vcmp.lt.f32.partialorder %v1584, 0.0004427343
    %v1586 = vsel %vm1585, %v1583, %v1580
    %v1587 = vadd.f32 %v1577, 1.0
    %v1588 = vlog2.pop %v1587
    %v1589 = vmul.f32 %v1588, 0.6931472
    %v1590 = vmul.f32 -0.5, %v1577
    %v1591 = vadd.f32 %v1590, 1.0
    %v1592 = vmul.f32 %v1591, %v1577
    %v1593 = vand.u32 2147483647, %v1577
    %vm1594 = vcmp.lt.f32.partialorder %v1593, 0.0004427343
    %v1595 = vsel %vm1594, %v1592, %v1589
    %v1596 = vsub.f32 %v1566, %v1586
    %v1597 = vsub.f32 %v1575, %v1595
    %v1598 = vmul.f32 %v1596, 0.5
    %v1599 = vmul.f32 %v1597, 0.5
    %v1600 = vmul.f32 %v1526, %v1598
    %v1601 = vmul.f32 %v1529, %v1599
    %v1602 = vtanh.pop %v1600
    %v1603 = vtanh.pop %v1601
    %v1604 = vmul.f32 %v1602, %v1520
    %v1605 = vmul.f32 %v1603, %v1521
    %v1606 = vrcp.pop %v1546
    %v1607 = vrcp.pop %v1553
    %v1608 = vmul.f32 %v1546, %v1606
    %v1609 = vmul.f32 %v1553, %v1607
    %v1610 = vsub.f32 2.0, %v1608
    %v1611 = vsub.f32 2.0, %v1609
    %v1612 = vmul.f32 %v1606, %v1610
    %v1613 = vmul.f32 %v1607, %v1611
    %v1614 = vmul.f32 %v1604, %v1612
    %v1615 = vmul.f32 %v1605, %v1613
    %v1616 = vmul.f32 %v1614, %v1614
    %v1617 = vmul.f32 %v1615, %v1615
    %v1618 = vsel %vm96, %v1616, 0.0
    %1619 = vadd.xlane.f32.xlu0 %v1618
    %v1620 = vpop.xlane.xlu0 %1619
    %v1621 = vsel %vm96, %v1617, 0.0
    %1622 = vadd.xlane.f32.xlu0 %v1621
    %v1623 = vpop.xlane.xlu0 %1622
    %v1624 = vmax.f32 %v1620, 1e-15
    %v1625 = vmax.f32 %v1623, 1e-15
    %v1626 = vrsqrt.pop %v1624
    %v1627 = vmul.f32 %v1624, %v1626
    %vm1628 = vcmp.eq.f32.partialorder %v1624, inf
    %v1629 = vsel %vm1628, %v1624, %v1627
    %vm1630 = vcmp.eq.f32.partialorder %v1624, 0.0
    %v1631 = vand.u32 %v1624, 2147483648
    %v1632 = vsel %vm1630, %v1631, %v1629
    %v1633 = vrsqrt.pop %v1625
    %v1634 = vmul.f32 %v1625, %v1633
    %vm1635 = vcmp.eq.f32.partialorder %v1625, inf
    %v1636 = vsel %vm1635, %v1625, %v1634
    %vm1637 = vcmp.eq.f32.partialorder %v1625, 0.0
    %v1638 = vand.u32 %v1625, 2147483648
    %v1639 = vsel %vm1637, %v1638, %v1636
    %vm1640 = vcmp.gt.f32.partialorder %v1632, 0.99999
    %vm1641 = vcmp.gt.f32.partialorder %v1639, 0.99999
    %v1642 = vrcp.pop %v1632
    %v1643 = vrcp.pop %v1639
    %v1644 = vmul.f32 %v1632, %v1642
    %v1645 = vmul.f32 %v1639, %v1643
    %v1646 = vsub.f32 2.0, %v1644
    %v1647 = vsub.f32 2.0, %v1645
    %v1648 = vmul.f32 %v1642, %v1646
    %v1649 = vmul.f32 %v1643, %v1647
    %v1650 = vmul.f32 %v1648, 0.99999
    %v1651 = vmul.f32 %v1649, 0.99999
    %v1652 = vsel %vm1640, %v1650, 1.0
    %v1653 = vsel %vm1641, %v1651, 1.0
    %v1654 = vmul.f32 %v1614, %v1652
    %v1655 = vmul.f32 %v1615, %v1653
    %v1656 = vmul.f32 %v1654, %v1654
    %v1657 = vmul.f32 %v1655, %v1655
    %v1658 = vsel %vm96, %v1656, 0.0
    %1659 = vadd.xlane.f32.xlu0 %v1658
    %v1660 = vpop.xlane.xlu0 %1659
    %v1661 = vsel %vm96, %v1657, 0.0
    %1662 = vadd.xlane.f32.xlu0 %v1661
    %v1663 = vpop.xlane.xlu0 %1662
    %v1664 = vadd.f32 %v1660, %v99
    %v1665 = vadd.f32 %v1663, %v102
    %v1666 = vmax.f32 %v1664, 1e-15
    %v1667 = vmax.f32 %v1665, 1e-15
    %v1668 = vrsqrt.pop %v1666
    %v1669 = vmul.f32 %v1666, %v1668
    %vm1670 = vcmp.eq.f32.partialorder %v1666, inf
    %v1671 = vsel %vm1670, %v1666, %v1669
    %vm1672 = vcmp.eq.f32.partialorder %v1666, 0.0
    %v1673 = vand.u32 %v1666, 2147483648
    %v1674 = vsel %vm1672, %v1673, %v1671
    %v1675 = vrsqrt.pop %v1667
    %v1676 = vmul.f32 %v1667, %v1675
    %vm1677 = vcmp.eq.f32.partialorder %v1667, inf
    %v1678 = vsel %vm1677, %v1667, %v1676
    %vm1679 = vcmp.eq.f32.partialorder %v1667, 0.0
    %v1680 = vand.u32 %v1667, 2147483648
    %v1681 = vsel %vm1679, %v1680, %v1678
    %vm1682 = vcmp.gt.f32.partialorder %v1674, 0.99999
    %vm1683 = vcmp.gt.f32.partialorder %v1681, 0.99999
    %v1684 = vrcp.pop %v1674
    %v1685 = vrcp.pop %v1681
    %v1686 = vmul.f32 %v1674, %v1684
    %v1687 = vmul.f32 %v1681, %v1685
    %v1688 = vsub.f32 2.0, %v1686
    %v1689 = vsub.f32 2.0, %v1687
    %v1690 = vmul.f32 %v1684, %v1688
    %v1691 = vmul.f32 %v1685, %v1689
    %v1692 = vmul.f32 %v1690, 0.99999
    %v1693 = vmul.f32 %v1691, 0.99999
    %v1694 = vsel %vm1682, %v1692, 1.0
    %v1695 = vsel %vm1683, %v1693, 1.0
    %v1696 = vmul.f32 %v1654, %v1694
    %v1697 = vmul.f32 %v1655, %v1695
    %v1698 = vmul.f32 %v85, %v1694
    %v1699 = vmul.f32 %v86, %v1695
    %v1700 = vld [vmem:[%s6] sm:$0xff]
    %v1701 = vld [vmem:[%s6 + $0x8] sm:$0xff]
    %v1702 = vld [vmem:[%s6 + $0x10] sm:$0xff]
    %v1703 = vld [vmem:[%s6 + $0x18] sm:$0xff]
    %v1704 = vld [vmem:[#allocation7] sm:$0xff]
    %v1705 = vld [vmem:[#allocation7 + $0x8] sm:$0xff]
    %v1706 = vld [vmem:[#allocation7 + $0x10] sm:$0xff]
    %v1707 = vld [vmem:[#allocation7 + $0x18] sm:$0xff]
    %v1709 = vsel %vm96, %v1698, 0
    %v1712 = vsel %vm96, %v1699, 0
    %1714 = vmatprep.subr.mxu0 0.0
    %1715 = vmatpush1.msra.mxu0 0.0
    %1716 = vmatprep.subr.mxu0 0.0
    %1717 = vmatpush1.msra.mxu0 0.0
    %1718 = vmatprep.subr.mxu0 0.0
    %1719 = vmatpush1.msra.mxu0 0.0
    %1720 = vmatprep.subr.mxu0 0.0
    %1721 = vmatpush1.msra.mxu0 0.0
    %1722 = vmatprep.subr.mxu0 0.0
    %1723 = vmatpush1.msra.mxu0 0.0
    %1724 = vmatprep.subr.mxu0 0.0
    %1725 = vmatpush1.msra.mxu0 0.0
    %1726 = vmatprep.subr.mxu0 0.0
    %1727 = vmatpush1.msra.mxu0 0.0
    %1728 = vmatprep.subr.mxu0 0.0
    %1729 = vmatpush1.msra.mxu0 0.0
    %1730 = vmatprep.subr.mxu0 0.0
    %1731 = vmatpush1.msra.mxu0 0.0
    %1732 = vmatprep.subr.mxu0 0.0
    %1733 = vmatpush1.msra.mxu0 0.0
    %1734 = vmatprep.subr.mxu0 0.0
    %1735 = vmatpush1.msra.mxu0 0.0
    %1736 = vmatprep.subr.mxu0 0.0
    %1737 = vmatpush1.msra.mxu0 0.0
    %1738 = vmatprep.subr.mxu0 0.0
    %1739 = vmatpush1.msra.mxu0 %v1707
    %1740 = vmatprep.subr.mxu0 0.0
    %1741 = vmatpush1.msra.mxu0 %v1706
    %1742 = vmatprep.subr.mxu0 0.0
    %1743 = vmatpush1.msra.mxu0 %v1705
    %1744 = vmatprep.subr.mxu0 0.0
    %1745 = vmatpush1.msra.mxu0 %v1704
    %1746 = vmatprep.subr.mxu0 0.0
    %1747 = vmatpush2.msra.mxu0 0.0
    %1748 = vmatprep.subr.mxu0 0.0
    %1749 = vmatpush2.msra.mxu0 0.0
    %1750 = vmatprep.subr.mxu0 0.0
    %1751 = vmatpush2.msra.mxu0 0.0
    %1752 = vmatprep.subr.mxu0 0.0
    %1753 = vmatpush2.msra.mxu0 0.0
    %1754 = vmatprep.subr.mxu0 0.0
    %1755 = vmatpush2.msra.mxu0 0.0
    %1756 = vmatprep.subr.mxu0 0.0
    %1757 = vmatpush2.msra.mxu0 0.0
    %1758 = vmatprep.subr.mxu0 0.0
    %1759 = vmatpush2.msra.mxu0 0.0
    %1760 = vmatprep.subr.mxu0 0.0
    %1761 = vmatpush2.msra.mxu0 0.0
    %1762 = vmatprep.subr.mxu0 0.0
    %1763 = vmatpush2.msra.mxu0 0.0
    %1764 = vmatprep.subr.mxu0 0.0
    %1765 = vmatpush2.msra.mxu0 0.0
    %1766 = vmatprep.subr.mxu0 0.0
    %1767 = vmatpush2.msra.mxu0 0.0
    %1768 = vmatprep.subr.mxu0 0.0
    %1769 = vmatpush2.msra.mxu0 0.0
    %1770 = vmatprep.subr.mxu0 0.0
    %1771 = vmatpush2.msra.mxu0 0.0
    %1772 = vmatprep.subr.mxu0 0.0
    %1773 = vmatpush2.msra.mxu0 0.0
    %1774 = vmatprep.subr.mxu0 0.0
    %1775 = vmatpush2.msra.mxu0 0.0
    %1776 = vmatprep.subr.mxu0 0.0
    %1777 = vmatpush2.msra.mxu0 0.0
    %1778 = vmatprep.mubr.f32.mxu0 0.0
    %1779 = vmatmul.mubr.f32.gmra.mxu0 %v1709
    %v1780 = vpop.f32.mrf.mxu0
    %v1781 = vadd.f32 0.0, %v1780
    %v1782 = vpop.f32.mrf.mxu0
    %1783 = vmatprep.mubr.f32.mxu0 0.0
    %1784 = vmatmul.mubr.f32.gmra.mxu0 %v1712
    %v1785 = vpop.f32.mrf.mxu0
    %v1786 = vadd.f32 0.0, %v1785
    %v1787 = vpop.f32.mrf.mxu0
    %1788 = vdwg.mxu0
    %v1790 = vsel %vm96, %v1696, 0
    %v1793 = vsel %vm96, %v1697, 0
    %1795 = vmatprep.subr.mxu0 0.0
    %1796 = vmatpush1.msra.mxu0 0.0
    %1797 = vmatprep.subr.mxu0 0.0
    %1798 = vmatpush1.msra.mxu0 0.0
    %1799 = vmatprep.subr.mxu0 0.0
    %1800 = vmatpush1.msra.mxu0 0.0
    %1801 = vmatprep.subr.mxu0 0.0
    %1802 = vmatpush1.msra.mxu0 0.0
    %1803 = vmatprep.subr.mxu0 0.0
    %1804 = vmatpush1.msra.mxu0 0.0
    %1805 = vmatprep.subr.mxu0 0.0
    %1806 = vmatpush1.msra.mxu0 0.0
    %1807 = vmatprep.subr.mxu0 0.0
    %1808 = vmatpush1.msra.mxu0 0.0
    %1809 = vmatprep.subr.mxu0 0.0
    %1810 = vmatpush1.msra.mxu0 0.0
    %1811 = vmatprep.subr.mxu0 0.0
    %1812 = vmatpush1.msra.mxu0 0.0
    %1813 = vmatprep.subr.mxu0 0.0
    %1814 = vmatpush1.msra.mxu0 0.0
    %1815 = vmatprep.subr.mxu0 0.0
    %1816 = vmatpush1.msra.mxu0 0.0
    %1817 = vmatprep.subr.mxu0 0.0
    %1818 = vmatpush1.msra.mxu0 0.0
    %1819 = vmatprep.subr.mxu0 0.0
    %1820 = vmatpush1.msra.mxu0 %v1703
    %1821 = vmatprep.subr.mxu0 0.0
    %1822 = vmatpush1.msra.mxu0 %v1702
    %1823 = vmatprep.subr.mxu0 0.0
    %1824 = vmatpush1.msra.mxu0 %v1701
    %1825 = vmatprep.subr.mxu0 0.0
    %1826 = vmatpush1.msra.mxu0 %v1700
    %1827 = vmatprep.subr.mxu0 0.0
    %1828 = vmatpush2.msra.mxu0 0.0
    %1829 = vmatprep.subr.mxu0 0.0
    %1830 = vmatpush2.msra.mxu0 0.0
    %1831 = vmatprep.subr.mxu0 0.0
    %1832 = vmatpush2.msra.mxu0 0.0
    %1833 = vmatprep.subr.mxu0 0.0
    %1834 = vmatpush2.msra.mxu0 0.0
    %1835 = vmatprep.subr.mxu0 0.0
    %1836 = vmatpush2.msra.mxu0 0.0
    %1837 = vmatprep.subr.mxu0 0.0
    %1838 = vmatpush2.msra.mxu0 0.0
    %1839 = vmatprep.subr.mxu0 0.0
    %1840 = vmatpush2.msra.mxu0 0.0
    %1841 = vmatprep.subr.mxu0 0.0
    %1842 = vmatpush2.msra.mxu0 0.0
    %1843 = vmatprep.subr.mxu0 0.0
    %1844 = vmatpush2.msra.mxu0 0.0
    %1845 = vmatprep.subr.mxu0 0.0
    %1846 = vmatpush2.msra.mxu0 0.0
    %1847 = vmatprep.subr.mxu0 0.0
    %1848 = vmatpush2.msra.mxu0 0.0
    %1849 = vmatprep.subr.mxu0 0.0
    %1850 = vmatpush2.msra.mxu0 0.0
    %1851 = vmatprep.subr.mxu0 0.0
    %1852 = vmatpush2.msra.mxu0 0.0
    %1853 = vmatprep.subr.mxu0 0.0
    %1854 = vmatpush2.msra.mxu0 0.0
    %1855 = vmatprep.subr.mxu0 0.0
    %1856 = vmatpush2.msra.mxu0 0.0
    %1857 = vmatprep.subr.mxu0 0.0
    %1858 = vmatpush2.msra.mxu0 0.0
    %1859 = vmatprep.mubr.f32.mxu0 0.0
    %1860 = vmatmul.mubr.f32.gmra.mxu0 %v1790
    %v1861 = vpop.f32.mrf.mxu0
    %v1862 = vadd.f32 %v1781, %v1861
    %v1863 = vpop.f32.mrf.mxu0
    %1864 = vmatprep.mubr.f32.mxu0 0.0
    %1865 = vmatmul.mubr.f32.gmra.mxu0 %v1793
    %v1866 = vpop.f32.mrf.mxu0
    %v1867 = vadd.f32 %v1786, %v1866
    %v1868 = vpop.f32.mrf.mxu0
    %1869 = vdwg.mxu0
    %v1870 = vmul.f32 %v1696, %v1696
    %v1871 = vmul.f32 %v1697, %v1697
    %v1872 = vsel %vm96, %v1870, 0.0
    %1873 = vadd.xlane.f32.xlu0 %v1872
    %v1874 = vpop.xlane.xlu0 %1873
    %v1875 = vsel %vm96, %v1871, 0.0
    %1876 = vadd.xlane.f32.xlu0 %v1875
    %v1877 = vpop.xlane.xlu0 %1876
    %v1878 = vmul.f32 %v1698, %v1698
    %v1879 = vmul.f32 %v1699, %v1699
    %v1880 = vsel %vm96, %v1878, 0.0
    %1881 = vadd.xlane.f32.xlu0 %v1880
    %v1882 = vpop.xlane.xlu0 %1881
    %v1883 = vsel %vm96, %v1879, 0.0
    %1884 = vadd.xlane.f32.xlu0 %v1883
    %v1885 = vpop.xlane.xlu0 %1884
    %v1886 = vadd.f32 %v1874, %v1882
    %v1887 = vadd.f32 %v1877, %v1885
    %v1888 = vmax.f32 %v1886, 1e-15
    %v1889 = vmax.f32 %v1887, 1e-15
    %v1890 = vrsqrt.pop %v1888
    %v1891 = vmul.f32 %v1888, %v1890
    %vm1892 = vcmp.eq.f32.partialorder %v1888, inf
    %v1893 = vsel %vm1892, %v1888, %v1891
    %vm1894 = vcmp.eq.f32.partialorder %v1888, 0.0
    %v1895 = vand.u32 %v1888, 2147483648
    %v1896 = vsel %vm1894, %v1895, %v1893
    %v1897 = vrsqrt.pop %v1889
    %v1898 = vmul.f32 %v1889, %v1897
    %vm1899 = vcmp.eq.f32.partialorder %v1889, inf
    %v1900 = vsel %vm1899, %v1889, %v1898
    %vm1901 = vcmp.eq.f32.partialorder %v1889, 0.0
    %v1902 = vand.u32 %v1889, 2147483648
    %v1903 = vsel %vm1901, %v1902, %v1900
    %v1904 = vmul.f32 %v1862, %v1862
    %v1905 = vmul.f32 %v1867, %v1867
    %v1906 = vsel %vm96, %v1904, 0.0
    %1907 = vadd.xlane.f32.xlu0 %v1906
    %v1908 = vpop.xlane.xlu0 %1907
    %v1909 = vsel %vm96, %v1905, 0.0
    %1910 = vadd.xlane.f32.xlu0 %v1909
    %v1911 = vpop.xlane.xlu0 %1910
    %v1912 = vmax.f32 %v1908, 1e-15
    %v1913 = vmax.f32 %v1911, 1e-15
    %v1914 = vrsqrt.pop %v1912
    %v1915 = vmul.f32 %v1912, %v1914
    %vm1916 = vcmp.eq.f32.partialorder %v1912, inf
    %v1917 = vsel %vm1916, %v1912, %v1915
    %vm1918 = vcmp.eq.f32.partialorder %v1912, 0.0
    %v1919 = vand.u32 %v1912, 2147483648
    %v1920 = vsel %vm1918, %v1919, %v1917
    %v1921 = vrsqrt.pop %v1913
    %v1922 = vmul.f32 %v1913, %v1921
    %vm1923 = vcmp.eq.f32.partialorder %v1913, inf
    %v1924 = vsel %vm1923, %v1913, %v1922
    %vm1925 = vcmp.eq.f32.partialorder %v1913, 0.0
    %v1926 = vand.u32 %v1913, 2147483648
    %v1927 = vsel %vm1925, %v1926, %v1924
    %v1928 = vrcp.pop %v1896
    %v1929 = vrcp.pop %v1903
    %v1930 = vmul.f32 %v1896, %v1928
    %v1931 = vmul.f32 %v1903, %v1929
    %v1932 = vsub.f32 2.0, %v1930
    %v1933 = vsub.f32 2.0, %v1931
    %v1934 = vmul.f32 %v1928, %v1932
    %v1935 = vmul.f32 %v1929, %v1933
    %v1936 = vmul.f32 %v1920, %v1934
    %v1937 = vmul.f32 %v1927, %v1935
    %v1938 = vmax.f32 %v1896, -0.99999
    %v1939 = vmax.f32 %v1903, -0.99999
    %v1940 = vmin.f32 %v1938, 0.99999
    %v1941 = vmin.f32 %v1939, 0.99999
    %v1942 = vadd.f32 %v1940, 1.0
    %v1943 = vlog2.pop %v1942
    %v1944 = vmul.f32 %v1943, 0.6931472
    %v1945 = vmul.f32 -0.5, %v1940
    %v1946 = vadd.f32 %v1945, 1.0
    %v1947 = vmul.f32 %v1946, %v1940
    %v1948 = vand.u32 2147483647, %v1940
    %vm1949 = vcmp.lt.f32.partialorder %v1948, 0.0004427343
    %v1950 = vsel %vm1949, %v1947, %v1944
    %v1951 = vadd.f32 %v1941, 1.0
    %v1952 = vlog2.pop %v1951
    %v1953 = vmul.f32 %v1952, 0.6931472
    %v1954 = vmul.f32 -0.5, %v1941
    %v1955 = vadd.f32 %v1954, 1.0
    %v1956 = vmul.f32 %v1955, %v1941
    %v1957 = vand.u32 2147483647, %v1941
    %vm1958 = vcmp.lt.f32.partialorder %v1957, 0.0004427343
    %v1959 = vsel %vm1958, %v1956, %v1953
    %v1960 = vsub.f32 0.0, %v1940
    %v1961 = vsub.f32 0.0, %v1941
    %v1962 = vadd.f32 %v1960, 1.0
    %v1963 = vlog2.pop %v1962
    %v1964 = vmul.f32 %v1963, 0.6931472
    %v1965 = vmul.f32 -0.5, %v1960
    %v1966 = vadd.f32 %v1965, 1.0
    %v1967 = vmul.f32 %v1966, %v1960
    %v1968 = vand.u32 2147483647, %v1960
    %vm1969 = vcmp.lt.f32.partialorder %v1968, 0.0004427343
    %v1970 = vsel %vm1969, %v1967, %v1964
    %v1971 = vadd.f32 %v1961, 1.0
    %v1972 = vlog2.pop %v1971
    %v1973 = vmul.f32 %v1972, 0.6931472
    %v1974 = vmul.f32 -0.5, %v1961
    %v1975 = vadd.f32 %v1974, 1.0
    %v1976 = vmul.f32 %v1975, %v1961
    %v1977 = vand.u32 2147483647, %v1961
    %vm1978 = vcmp.lt.f32.partialorder %v1977, 0.0004427343
    %v1979 = vsel %vm1978, %v1976, %v1973
    %v1980 = vsub.f32 %v1950, %v1970
    %v1981 = vsub.f32 %v1959, %v1979
    %v1982 = vmul.f32 %v1980, 0.5
    %v1983 = vmul.f32 %v1981, 0.5
    %v1984 = vmul.f32 %v1936, %v1982
    %v1985 = vmul.f32 %v1937, %v1983
    %v1986 = vtanh.pop %v1984
    %v1987 = vtanh.pop %v1985
    %v1988 = vmul.f32 %v1986, %v1862
    %v1989 = vmul.f32 %v1987, %v1867
    %v1990 = vrcp.pop %v1920
    %v1991 = vrcp.pop %v1927
    %v1992 = vmul.f32 %v1920, %v1990
    %v1993 = vmul.f32 %v1927, %v1991
    %v1994 = vsub.f32 2.0, %v1992
    %v1995 = vsub.f32 2.0, %v1993
    %v1996 = vmul.f32 %v1990, %v1994
    %v1997 = vmul.f32 %v1991, %v1995
    %v1998 = vmul.f32 %v1988, %v1996
    %v1999 = vmul.f32 %v1989, %v1997
    %v2000 = vmul.f32 %v1998, %v1998
    %v2001 = vmul.f32 %v1999, %v1999
    %v2002 = vsel %vm96, %v2000, 0.0
    %2003 = vadd.xlane.f32.xlu0 %v2002
    %v2004 = vpop.xlane.xlu0 %2003
    %v2005 = vsel %vm96, %v2001, 0.0
    %2006 = vadd.xlane.f32.xlu0 %v2005
    %v2007 = vpop.xlane.xlu0 %2006
    %v2008 = vmax.f32 %v2004, 1e-15
    %v2009 = vmax.f32 %v2007, 1e-15
    %v2010 = vrsqrt.pop %v2008
    %v2011 = vmul.f32 %v2008, %v2010
    %vm2012 = vcmp.eq.f32.partialorder %v2008, inf
    %v2013 = vsel %vm2012, %v2008, %v2011
    %vm2014 = vcmp.eq.f32.partialorder %v2008, 0.0
    %v2015 = vand.u32 %v2008, 2147483648
    %v2016 = vsel %vm2014, %v2015, %v2013
    %v2017 = vrsqrt.pop %v2009
    %v2018 = vmul.f32 %v2009, %v2017
    %vm2019 = vcmp.eq.f32.partialorder %v2009, inf
    %v2020 = vsel %vm2019, %v2009, %v2018
    %vm2021 = vcmp.eq.f32.partialorder %v2009, 0.0
    %v2022 = vand.u32 %v2009, 2147483648
    %v2023 = vsel %vm2021, %v2022, %v2020
    %vm2024 = vcmp.gt.f32.partialorder %v2016, 0.99999
    %vm2025 = vcmp.gt.f32.partialorder %v2023, 0.99999
    %v2026 = vrcp.pop %v2016
    %v2027 = vrcp.pop %v2023
    %v2028 = vmul.f32 %v2016, %v2026
    %v2029 = vmul.f32 %v2023, %v2027
    %v2030 = vsub.f32 2.0, %v2028
    %v2031 = vsub.f32 2.0, %v2029
    %v2032 = vmul.f32 %v2026, %v2030
    %v2033 = vmul.f32 %v2027, %v2031
    %v2034 = vmul.f32 %v2032, 0.99999
    %v2035 = vmul.f32 %v2033, 0.99999
    %v2036 = vsel %vm2024, %v2034, 1.0
    %v2037 = vsel %vm2025, %v2035, 1.0
    %v2038 = vmul.f32 %v1998, %v2036
    %v2039 = vmul.f32 %v1999, %v2037
    %v2040 = vld [vmem:[%s8] sm:$0x1]
    %v2041 = vadd.f32 %v2040, 1e-15
    %v2043 = vlaneseq
    %v2044 = vshrl.u32 %v2043, 7
    %v2045 = vsub.s32 0, %v2044
    %v2046 = vrot.slane %v2041, %v2045
    %v2048 = vmul.f32 %v2038, %v2046
    %v2049 = vmul.f32 %v2039, %v2046
    %v2050 = vsel %vm96, %v2048, 0.0
    %2051 = vadd.xlane.f32.xlu0 %v2050
    %v2052 = vpop.xlane.xlu0 %2051
    %v2053 = vsel %vm96, %v2049, 0.0
    %2054 = vadd.xlane.f32.xlu0 %v2053
    %v2055 = vpop.xlane.xlu0 %2054
    %v2056 = vmul.f32 %v2052, 2.0
    %v2057 = vmul.f32 %v2055, 2.0
    %v2058 = vmul.f32 %v2038, %v2038
    %v2059 = vmul.f32 %v2039, %v2039
    %v2060 = vsel %vm96, %v2058, 0.0
    %2061 = vadd.xlane.f32.xlu0 %v2060
    %v2062 = vpop.xlane.xlu0 %2061
    %v2063 = vsel %vm96, %v2059, 0.0
    %2064 = vadd.xlane.f32.xlu0 %v2063
    %v2065 = vpop.xlane.xlu0 %2064
    %v2066 = vmul.f32 %v2041, %v2041
    %v2067 = vsel %vm403, %v2066, 0.0
    %2068 = vadd.xlane.f32.xlu0 %v2067
    %v2069 = vpop.xlane.xlu0 %2068
    %v2070 = vadd.f32 %v2056, 1.0
    %v2071 = vadd.f32 %v2057, 1.0
    %v2072 = vlaneseq
    %v2073 = vshrl.u32 %v2072, 7
    %v2074 = vsub.s32 0, %v2073
    %v2075 = vrot.slane %v2069, %v2074
    %v2076 = vadd.f32 %v2070, %v2075
    %v2077 = vadd.f32 %v2071, %v2075
    %v2078 = vmul.f32 %v2076, %v2038
    %v2079 = vmul.f32 %v2077, %v2039
    %v2080 = vsub.f32 1.0, %v2062
    %v2081 = vsub.f32 1.0, %v2065
    %v2082 = vmul.f32 %v2080, %v2046
    %v2083 = vmul.f32 %v2081, %v2046
    %v2084 = vadd.f32 %v2078, %v2082
    %v2085 = vadd.f32 %v2079, %v2083
    %v2086 = vmul.f32 %v2062, %v2075
    %v2087 = vmul.f32 %v2065, %v2075
    %v2088 = vadd.f32 %v2070, %v2086
    %v2089 = vadd.f32 %v2071, %v2087
    %v2090 = vrcp.pop %v2088
    %v2091 = vrcp.pop %v2089
    %v2092 = vmul.f32 %v2088, %v2090
    %v2093 = vmul.f32 %v2089, %v2091
    %v2094 = vsub.f32 2.0, %v2092
    %v2095 = vsub.f32 2.0, %v2093
    %v2096 = vmul.f32 %v2090, %v2094
    %v2097 = vmul.f32 %v2091, %v2095
    %v2098 = vmul.f32 %v2084, %v2096
    %v2099 = vmul.f32 %v2085, %v2097
    %v2100 = vmul.f32 %v2098, %v2098
    %v2101 = vmul.f32 %v2099, %v2099
    %v2102 = vsel %vm96, %v2100, 0.0
    %2103 = vadd.xlane.f32.xlu0 %v2102
    %v2104 = vpop.xlane.xlu0 %2103
    %v2105 = vsel %vm96, %v2101, 0.0
    %2106 = vadd.xlane.f32.xlu0 %v2105
    %v2107 = vpop.xlane.xlu0 %2106
    %v2108 = vmax.f32 %v2104, 1e-15
    %v2109 = vmax.f32 %v2107, 1e-15
    %v2110 = vrsqrt.pop %v2108
    %v2111 = vmul.f32 %v2108, %v2110
    %vm2112 = vcmp.eq.f32.partialorder %v2108, inf
    %v2113 = vsel %vm2112, %v2108, %v2111
    %vm2114 = vcmp.eq.f32.partialorder %v2108, 0.0
    %v2115 = vand.u32 %v2108, 2147483648
    %v2116 = vsel %vm2114, %v2115, %v2113
    %v2117 = vrsqrt.pop %v2109
    %v2118 = vmul.f32 %v2109, %v2117
    %vm2119 = vcmp.eq.f32.partialorder %v2109, inf
    %v2120 = vsel %vm2119, %v2109, %v2118
    %vm2121 = vcmp.eq.f32.partialorder %v2109, 0.0
    %v2122 = vand.u32 %v2109, 2147483648
    %v2123 = vsel %vm2121, %v2122, %v2120
    %vm2124 = vcmp.gt.f32.partialorder %v2116, 0.99999
    %vm2125 = vcmp.gt.f32.partialorder %v2123, 0.99999
    %v2126 = vrcp.pop %v2116
    %v2127 = vrcp.pop %v2123
    %v2128 = vmul.f32 %v2116, %v2126
    %v2129 = vmul.f32 %v2123, %v2127
    %v2130 = vsub.f32 2.0, %v2128
    %v2131 = vsub.f32 2.0, %v2129
    %v2132 = vmul.f32 %v2126, %v2130
    %v2133 = vmul.f32 %v2127, %v2131
    %v2134 = vmul.f32 %v2132, 0.99999
    %v2135 = vmul.f32 %v2133, 0.99999
    %v2136 = vsel %vm2124, %v2134, 1.0
    %v2137 = vsel %vm2125, %v2135, 1.0
    %v2138 = vmul.f32 %v2098, %v2136
    %v2139 = vmul.f32 %v2099, %v2137
    %v2140 = vmul.f32 %v2138, %v2138
    %v2141 = vmul.f32 %v2139, %v2139
    %v2142 = vsel %vm96, %v2140, 0.0
    %2143 = vadd.xlane.f32.xlu0 %v2142
    %v2144 = vpop.xlane.xlu0 %2143
    %v2145 = vsel %vm96, %v2141, 0.0
    %2146 = vadd.xlane.f32.xlu0 %v2145
    %v2147 = vpop.xlane.xlu0 %2146
    %v2148 = vmax.f32 %v2144, 1e-15
    %v2149 = vmax.f32 %v2147, 1e-15
    %v2150 = vrsqrt.pop %v2148
    %v2151 = vmul.f32 %v2148, %v2150
    %vm2152 = vcmp.eq.f32.partialorder %v2148, inf
    %v2153 = vsel %vm2152, %v2148, %v2151
    %vm2154 = vcmp.eq.f32.partialorder %v2148, 0.0
    %v2155 = vand.u32 %v2148, 2147483648
    %v2156 = vsel %vm2154, %v2155, %v2153
    %v2157 = vrsqrt.pop %v2149
    %v2158 = vmul.f32 %v2149, %v2157
    %vm2159 = vcmp.eq.f32.partialorder %v2149, inf
    %v2160 = vsel %vm2159, %v2149, %v2158
    %vm2161 = vcmp.eq.f32.partialorder %v2149, 0.0
    %v2162 = vand.u32 %v2149, 2147483648
    %v2163 = vsel %vm2161, %v2162, %v2160
    %vm2164 = vcmp.gt.f32.partialorder %v2156, 0.99999
    %vm2165 = vcmp.gt.f32.partialorder %v2163, 0.99999
    %v2166 = vrcp.pop %v2156
    %v2167 = vrcp.pop %v2163
    %v2168 = vmul.f32 %v2156, %v2166
    %v2169 = vmul.f32 %v2163, %v2167
    %v2170 = vsub.f32 2.0, %v2168
    %v2171 = vsub.f32 2.0, %v2169
    %v2172 = vmul.f32 %v2166, %v2170
    %v2173 = vmul.f32 %v2167, %v2171
    %v2174 = vmul.f32 %v2172, 0.99999
    %v2175 = vmul.f32 %v2173, 0.99999
    %v2176 = vsel %vm2164, %v2174, 1.0
    %v2177 = vsel %vm2165, %v2175, 1.0
    %v2178 = vmul.f32 %v2138, %v2176
    %v2179 = vmul.f32 %v2139, %v2177
    %v2180 = vmul.f32 %v2178, %v2178
    %v2181 = vmul.f32 %v2179, %v2179
    %v2182 = vsel %vm96, %v2180, 0.0
    %2183 = vadd.xlane.f32.xlu0 %v2182
    %v2184 = vpop.xlane.xlu0 %2183
    %v2185 = vsel %vm96, %v2181, 0.0
    %2186 = vadd.xlane.f32.xlu0 %v2185
    %v2187 = vpop.xlane.xlu0 %2186
    %v2188 = vmax.f32 %v2184, 1e-15
    %v2189 = vmax.f32 %v2187, 1e-15
    %v2190 = vrsqrt.pop %v2188
    %v2191 = vmul.f32 %v2188, %v2190
    %vm2192 = vcmp.eq.f32.partialorder %v2188, inf
    %v2193 = vsel %vm2192, %v2188, %v2191
    %vm2194 = vcmp.eq.f32.partialorder %v2188, 0.0
    %v2195 = vand.u32 %v2188, 2147483648
    %v2196 = vsel %vm2194, %v2195, %v2193
    %v2197 = vrsqrt.pop %v2189
    %v2198 = vmul.f32 %v2189, %v2197
    %vm2199 = vcmp.eq.f32.partialorder %v2189, inf
    %v2200 = vsel %vm2199, %v2189, %v2198
    %vm2201 = vcmp.eq.f32.partialorder %v2189, 0.0
    %v2202 = vand.u32 %v2189, 2147483648
    %v2203 = vsel %vm2201, %v2202, %v2200
    %v2204 = vmax.f32 %v2196, -0.99999
    %v2205 = vmax.f32 %v2203, -0.99999
    %v2206 = vmin.f32 %v2204, 0.99999
    %v2207 = vmin.f32 %v2205, 0.99999
    %v2208 = vadd.f32 %v2206, 1.0
    %v2209 = vlog2.pop %v2208
    %v2210 = vmul.f32 %v2209, 0.6931472
    %v2211 = vmul.f32 -0.5, %v2206
    %v2212 = vadd.f32 %v2211, 1.0
    %v2213 = vmul.f32 %v2212, %v2206
    %v2214 = vand.u32 2147483647, %v2206
    %vm2215 = vcmp.lt.f32.partialorder %v2214, 0.0004427343
    %v2216 = vsel %vm2215, %v2213, %v2210
    %v2217 = vadd.f32 %v2207, 1.0
    %v2218 = vlog2.pop %v2217
    %v2219 = vmul.f32 %v2218, 0.6931472
    %v2220 = vmul.f32 -0.5, %v2207
    %v2221 = vadd.f32 %v2220, 1.0
    %v2222 = vmul.f32 %v2221, %v2207
    %v2223 = vand.u32 2147483647, %v2207
    %vm2224 = vcmp.lt.f32.partialorder %v2223, 0.0004427343
    %v2225 = vsel %vm2224, %v2222, %v2219
    %v2226 = vsub.f32 0.0, %v2206
    %v2227 = vsub.f32 0.0, %v2207
    %v2228 = vadd.f32 %v2226, 1.0
    %v2229 = vlog2.pop %v2228
    %v2230 = vmul.f32 %v2229, 0.6931472
    %v2231 = vmul.f32 -0.5, %v2226
    %v2232 = vadd.f32 %v2231, 1.0
    %v2233 = vmul.f32 %v2232, %v2226
    %v2234 = vand.u32 2147483647, %v2226
    %vm2235 = vcmp.lt.f32.partialorder %v2234, 0.0004427343
    %v2236 = vsel %vm2235, %v2233, %v2230
    %v2237 = vadd.f32 %v2227, 1.0
    %v2238 = vlog2.pop %v2237
    %v2239 = vmul.f32 %v2238, 0.6931472
    %v2240 = vmul.f32 -0.5, %v2227
    %v2241 = vadd.f32 %v2240, 1.0
    %v2242 = vmul.f32 %v2241, %v2227
    %v2243 = vand.u32 2147483647, %v2227
    %vm2244 = vcmp.lt.f32.partialorder %v2243, 0.0004427343
    %v2245 = vsel %vm2244, %v2242, %v2239
    %v2246 = vsub.f32 %v2216, %v2236
    %v2247 = vsub.f32 %v2225, %v2245
    %v2248 = vmul.f32 %v2246, 0.5
    %v2249 = vmul.f32 %v2247, 0.5
    %v2250 = vrcp.pop %v2196
    %v2251 = vrcp.pop %v2203
    %v2252 = vmul.f32 %v2196, %v2250
    %v2253 = vmul.f32 %v2203, %v2251
    %v2254 = vsub.f32 2.0, %v2252
    %v2255 = vsub.f32 2.0, %v2253
    %v2256 = vmul.f32 %v2250, %v2254
    %v2257 = vmul.f32 %v2251, %v2255
    %v2258 = vmul.f32 %v2248, %v2256
    %v2259 = vmul.f32 %v2249, %v2257
    %v2260 = vmul.f32 %v2258, %v2178
    %v2261 = vmul.f32 %v2259, %v2179
    %v2262 = vsel %vm96, %v2260, 0.0
    %2263 = vadd.xlane.f32.xlu0 %v2262
    %v2264 = vpop.xlane.xlu0 %2263
    %v2265 = vsel %vm96, %v2261, 0.0
    %2266 = vadd.xlane.f32.xlu0 %v2265
    %v2267 = vpop.xlane.xlu0 %2266
    %v2268 = vrcp.pop 32.0
    %v2269 = vmul.f32 %v2264, %v2268
    %v2270 = vmul.f32 %v2267, %v2268
    %v2271 = vsub.f32 %v2260, %v2269
    %v2272 = vsub.f32 %v2261, %v2270
    %v2273 = vmul.f32 %v2271, %v2271
    %v2274 = vmul.f32 %v2272, %v2272
    %v2275 = vsel %vm96, %v2273, 0.0
    %2276 = vadd.xlane.f32.xlu0 %v2275
    %v2277 = vpop.xlane.xlu0 %2276
    %v2278 = vsel %vm96, %v2274, 0.0
    %2279 = vadd.xlane.f32.xlu0 %v2278
    %v2280 = vpop.xlane.xlu0 %2279
    %v2281 = vmul.f32 %v2277, %v2268
    %v2282 = vmul.f32 %v2280, %v2268
    %v2283 = vadd.f32 %v2281, 1e-05
    %v2284 = vadd.f32 %v2282, 1e-05
    %v2285 = vrsqrt.pop %v2283
    %v2286 = vrsqrt.pop %v2284
    %v2287 = vmul.f32 %v2271, %v2285
    %v2288 = vmul.f32 %v2272, %v2286
    %v2289 = vld [vmem:[%s9] sm:$0x1]
    %v2291 = vlaneseq
    %v2292 = vshrl.u32 %v2291, 7
    %v2293 = vsub.s32 0, %v2292
    %v2294 = vrot.slane %v2289, %v2293
    %v2296 = vmul.f32 %v2287, %v2294
    %v2297 = vmul.f32 %v2288, %v2294
    %v2298 = vld [vmem:[%s10] sm:$0x1]
    %v2300 = vlaneseq
    %v2301 = vshrl.u32 %v2300, 7
    %v2302 = vsub.s32 0, %v2301
    %v2303 = vrot.slane %v2298, %v2302
    %v2305 = vadd.f32 %v2296, %v2303
    %v2306 = vadd.f32 %v2297, %v2303
    %v2307 = vtanh.pop %v2305
    %v2308 = vtanh.pop %v2306
    %v2309 = vadd.f32 %v2307, 1e-15
    %v2310 = vadd.f32 %v2308, 1e-15
    %v2311 = vmul.f32 %v2309, %v2309
    %v2312 = vmul.f32 %v2310, %v2310
    %v2313 = vsel %vm96, %v2311, 0.0
    %2314 = vadd.xlane.f32.xlu0 %v2313
    %v2315 = vpop.xlane.xlu0 %2314
    %v2316 = vsel %vm96, %v2312, 0.0
    %2317 = vadd.xlane.f32.xlu0 %v2316
    %v2318 = vpop.xlane.xlu0 %2317
    %v2319 = vmax.f32 %v2315, 1e-15
    %v2320 = vmax.f32 %v2318, 1e-15
    %v2321 = vrsqrt.pop %v2319
    %v2322 = vmul.f32 %v2319, %v2321
    %vm2323 = vcmp.eq.f32.partialorder %v2319, inf
    %v2324 = vsel %vm2323, %v2319, %v2322
    %vm2325 = vcmp.eq.f32.partialorder %v2319, 0.0
    %v2326 = vand.u32 %v2319, 2147483648
    %v2327 = vsel %vm2325, %v2326, %v2324
    %v2328 = vrsqrt.pop %v2320
    %v2329 = vmul.f32 %v2320, %v2328
    %vm2330 = vcmp.eq.f32.partialorder %v2320, inf
    %v2331 = vsel %vm2330, %v2320, %v2329
    %vm2332 = vcmp.eq.f32.partialorder %v2320, 0.0
    %v2333 = vand.u32 %v2320, 2147483648
    %v2334 = vsel %vm2332, %v2333, %v2331
    %v2335 = vtanh.pop %v2327
    %v2336 = vtanh.pop %v2334
    %v2337 = vrcp.pop %v2327
    %v2338 = vrcp.pop %v2334
    %v2339 = vmul.f32 %v2327, %v2337
    %v2340 = vmul.f32 %v2334, %v2338
    %v2341 = vsub.f32 2.0, %v2339
    %v2342 = vsub.f32 2.0, %v2340
    %v2343 = vmul.f32 %v2337, %v2341
    %v2344 = vmul.f32 %v2338, %v2342
    %v2345 = vmul.f32 %v2335, %v2343
    %v2346 = vmul.f32 %v2336, %v2344
    %v2347 = vmul.f32 %v2345, %v2309
    %v2348 = vmul.f32 %v2346, %v2310
    %v2349 = vmul.f32 %v2347, %v2347
    %v2350 = vmul.f32 %v2348, %v2348
    %v2351 = vsel %vm96, %v2349, 0.0
    %2352 = vadd.xlane.f32.xlu0 %v2351
    %v2353 = vpop.xlane.xlu0 %2352
    %v2354 = vsel %vm96, %v2350, 0.0
    %2355 = vadd.xlane.f32.xlu0 %v2354
    %v2356 = vpop.xlane.xlu0 %2355
    %v2357 = vmax.f32 %v2353, 1e-15
    %v2358 = vmax.f32 %v2356, 1e-15
    %v2359 = vrsqrt.pop %v2357
    %v2360 = vmul.f32 %v2357, %v2359
    %vm2361 = vcmp.eq.f32.partialorder %v2357, inf
    %v2362 = vsel %vm2361, %v2357, %v2360
    %vm2363 = vcmp.eq.f32.partialorder %v2357, 0.0
    %v2364 = vand.u32 %v2357, 2147483648
    %v2365 = vsel %vm2363, %v2364, %v2362
    %v2366 = vrsqrt.pop %v2358
    %v2367 = vmul.f32 %v2358, %v2366
    %vm2368 = vcmp.eq.f32.partialorder %v2358, inf
    %v2369 = vsel %vm2368, %v2358, %v2367
    %vm2370 = vcmp.eq.f32.partialorder %v2358, 0.0
    %v2371 = vand.u32 %v2358, 2147483648
    %v2372 = vsel %vm2370, %v2371, %v2369
    %vm2373 = vcmp.gt.f32.partialorder %v2365, 0.99999
    %vm2374 = vcmp.gt.f32.partialorder %v2372, 0.99999
    %v2375 = vrcp.pop %v2365
    %v2376 = vrcp.pop %v2372
    %v2377 = vmul.f32 %v2365, %v2375
    %v2378 = vmul.f32 %v2372, %v2376
    %v2379 = vsub.f32 2.0, %v2377
    %v2380 = vsub.f32 2.0, %v2378
    %v2381 = vmul.f32 %v2375, %v2379
    %v2382 = vmul.f32 %v2376, %v2380
    %v2383 = vmul.f32 %v2381, 0.99999
    %v2384 = vmul.f32 %v2382, 0.99999
    %v2385 = vsel %vm2373, %v2383, 1.0
    %v2386 = vsel %vm2374, %v2384, 1.0
    %v2387 = vmul.f32 %v2347, %v2385
    %v2388 = vmul.f32 %v2348, %v2386
    %2389 = vst.msk [vmem:[%s12] sm:$0xff] %vm96, %v2387
    %2390 = vst.msk [vmem:[%s12 + $0x8] sm:$0xff] %vm96, %v2388
    %2391 = vst.msk [vmem:[%s13] sm:$0xff] %vm1167, %v1194
    %2392 = vst.msk [vmem:[%s13 + $0x8] sm:$0xff] %vm1167, %v1195
    // Predicated region
    $region62: #{global_attention_hype.1} parent=1 // pred_check
      _
    $region63: #{global_attention_hype.1} parent=1 // pred_check_branch
      %2394 = sbr.rel (0) target = $region65
    $region64: #{global_attention_hype.1} parent=1 // pred_region
      _
    $region65: #{global_attention_hype.1} parent=1 // pred_fallthru
      _
    // Predicated region
    $region66: #{global_attention_hype.1} parent=1 // pred_check
      _
    $region67: #{global_attention_hype.1} parent=1 // pred_check_branch
      %2396 = sbr.rel (0) target = $region69
    $region68: #{global_attention_hype.1} parent=1 // pred_region
      _
    $region69: #{global_attention_hype.1} parent=1 // pred_fallthru
      _
    // Predicated region
    $region70: #{global_attention_hype.1} parent=1 // pred_check
      _
    $region71: #{global_attention_hype.1} parent=1 // pred_check_branch
      %2398 = sbr.rel (0) target = $region73
    $region72: #{global_attention_hype.1} parent=1 // pred_region
      _
    $region73: #{global_attention_hype.1} parent=1 // pred_fallthru
      _
    // Predicated region
    $region74: #{global_attention_hype.1} parent=1 // pred_check
      _
    $region75: #{global_attention_hype.1} parent=1 // pred_check_branch
      %2400 = sbr.rel (0) target = $region77
    $region76: #{global_attention_hype.1} parent=1 // pred_region
      _
    $region77: #{global_attention_hype.1} parent=1 // pred_fallthru
      _
    %2401 = vsyncpa [#allocation4], 1
    %2402 = vsyncpa [#allocation6], 1

</llo_original>
